<compile_context>
chip_gen: v5e
topology: v5e:2x2
jax: 0.10.0
libtpu: 0.0.40
codegen_flags: <defaults>
</compile_context>

<pallas_src>
import functools

import jax
import jax.numpy as jnp
from jax.experimental import pallas as pl
from jax.experimental.pallas import tpu as pltpu

IN_DIM = 2304
OUT_DIM = 768


def _linear_kernel(x_ref, w_ref, b_ref, o_ref):
    """Single-block y = x @ W + b. bf16 x bf16 -> f32 accumulation on the MXU."""
    o_ref[...] = (
        jnp.dot(x_ref[...], w_ref[...], preferred_element_type=jnp.float32)
        + b_ref[...]
    ).astype(o_ref.dtype)


def pallas_linear(x_bf16, w, b2):
    """y = x @ w + b via Pallas.

    x_bf16: (M, K) bf16, w: (K, N) bf16, b2: (1, N) f32  ->  y: (M, N) f32.
    grid=(1,): the whole weight is one block (one DMA, zero grid-step overhead).
    """
    M, K = x_bf16.shape
    Kw, N = w.shape
    assert K == Kw and b2.shape == (1, N)
    assert M % 8 == 0

    flops = 2 * M * K * N
    bytes_accessed = (
        M * K * x_bf16.dtype.itemsize
        + K * N * w.dtype.itemsize
        + N * b2.dtype.itemsize
        + M * N * 4
    )

    return pl.pallas_call(
        _linear_kernel,
        out_shape=jax.ShapeDtypeStruct((M, N), jnp.float32),
        grid_spec=pltpu.PrefetchScalarGridSpec(
            num_scalar_prefetch=0,
            grid=(1,),
            in_specs=[
                pl.BlockSpec((M, K), lambda i: (0, 0)),   # x (bf16), whole block
                pl.BlockSpec((K, N), lambda i: (0, 0)),   # weight (bf16), one DMA
                pl.BlockSpec((1, N), lambda i: (0, 0)),   # bias (f32)
            ],
            out_specs=pl.BlockSpec((M, N), lambda i: (0, 0)),
        ),
        compiler_params=pltpu.CompilerParams(
            dimension_semantics=("arbitrary",),
        ),
        cost_estimate=pl.CostEstimate(
            flops=flops, transcendentals=0, bytes_accessed=bytes_accessed
        ),
    )(x_bf16, w, b2)


@jax.jit
def _encode(feats, w, b2):
    """Whole forward fused into one jitted program (pad + concat + matmul + slice)."""
    # Pad each feature's row count up to a multiple of 8 and concatenate along M
    # so the weight is DMA'd from HBM exactly once for all features.
    pads = [(-f.shape[0]) % 8 for f in feats]
    stacked = jnp.concatenate(
        [jnp.pad(f, ((0, p), (0, 0))) if p else f for f, p in zip(feats, pads)],
        axis=0,
    ).astype(jnp.bfloat16)                      # bf16 x for native MXU rate
    y = pallas_linear(stacked, w, b2)
    outs = []
    off = 0
    for f, p in zip(feats, pads):
        m = f.shape[0]
        outs.append(jax.lax.slice_in_dim(y, off, off + m, axis=0))
        off += m + p
    return tuple(outs)


class VideoEncoder:
    """JAX/Pallas equivalent of the PyTorch Video_Encoder module."""

    def __init__(self, key, param_dtype=jnp.bfloat16):
        kw, kb = jax.random.split(key)
        # Deterministic init matching nn.Linear's default U(-1/sqrt(in), 1/sqrt(in)).
        bound = 1.0 / (IN_DIM ** 0.5)
        # PyTorch weight is (out, in); store transposed (in, out) for the kernel,
        # in bf16 (halves the dominant HBM weight read).
        self.w = jax.random.uniform(
            kw, (IN_DIM, OUT_DIM), dtype=jnp.float32, minval=-bound, maxval=bound
        ).astype(param_dtype)
        self.b = jax.random.uniform(
            kb, (OUT_DIM,), dtype=jnp.float32, minval=-bound, maxval=bound
        )
        # Hoisted once (not per call).
        self.b2 = self.b.reshape(1, OUT_DIM)

    def __call__(self, features):
        # forward: x_prompt = [ctx_vid(feat) for feat in features]
        feats = tuple(jnp.asarray(f, jnp.float32) for f in features)
        x_prompt = list(_encode(feats, self.w, self.b2))
        # TODO(synk): .cuda() device transfer in the reference has no Pallas
        # equivalent; JAX device placement handles it implicitly.
        return dict(x_prompt=x_prompt)


if __name__ == "__main__":
    key = jax.random.PRNGKey(0)
    k_model, k_f0, k_f1 = jax.random.split(key, 3)

    encoder = VideoEncoder(k_model)

    # A "list of video features", each (seq_len, 2304) — seq lengths kept small.
    features = [
        jax.random.normal(k_f0, (8, IN_DIM), dtype=jnp.float32),
        jax.random.normal(k_f1, (16, IN_DIM), dtype=jnp.float32),
    ]

    out = encoder(features)
    x_prompt = out["x_prompt"]
    for y in x_prompt:
        jax.block_until_ready(y)

    # Sanity check against plain-JAX reference using the same bf16-quantized
    # operands (weight stored bf16; x cast to bf16 in the wrapper).
    w32 = encoder.w.astype(jnp.float32)
    ok = True
    for feat, y in zip(features, x_prompt):
        feat_q = feat.astype(jnp.bfloat16).astype(jnp.float32)
        ref = feat_q @ w32 + encoder.b
        ok &= bool(jnp.allclose(y, ref, atol=1e-2, rtol=1e-2))
        ok &= (y.shape == (feat.shape[0], OUT_DIM))
    assert ok, "Pallas output mismatch vs reference"

    print("KERNEL_OK")
</pallas_src>

<mosaic_0001>
module attributes {stable_mosaic.version = 11 : i64} {
  func.func @_linear_kernel(%arg0: i32, %arg1: memref<24x2304xbf16, #tpu.memory_space<vmem>>, %arg2: memref<2304x768xbf16, #tpu.memory_space<vmem>>, %arg3: memref<1x768xf32, #tpu.memory_space<vmem>>, %arg4: memref<24x768xf32, #tpu.memory_space<vmem>>) attributes {dimension_semantics = [#tpu.dimension_semantics<arbitrary>], iteration_bounds = array<i64: 1>, scalar_prefetch = 0 : i64, scratch_operands = 0 : i64, tpu.core_type = #tpu.core_type<tc>, window_params = [{pipeline_mode = #tpu.pipeline_mode<synchronous>, transform_indices = @transform_0, window_bounds = array<i64: 24, 2304>}, {pipeline_mode = #tpu.pipeline_mode<synchronous>, transform_indices = @transform_1, window_bounds = array<i64: 2304, 768>}, {pipeline_mode = #tpu.pipeline_mode<synchronous>, transform_indices = @transform_2, window_bounds = array<i64: 1, 768>}, {pipeline_mode = #tpu.pipeline_mode<synchronous>, transform_indices = @transform_3, window_bounds = array<i64: 24, 768>}]} {
    %c0 = arith.constant 0 : index
    %c0_0 = arith.constant 0 : index
    %0 = vector.load %arg1[%c0, %c0_0] : memref<24x2304xbf16, #tpu.memory_space<vmem>>, vector<24x2304xbf16>
    %c0_1 = arith.constant 0 : index
    %c0_2 = arith.constant 0 : index
    %1 = vector.load %arg2[%c0_1, %c0_2] : memref<2304x768xbf16, #tpu.memory_space<vmem>>, vector<2304x768xbf16>
    %cst = arith.constant dense<0.000000e+00> : vector<24x768xf32>
    %2 = tpu.matmul %0, %1, %cst {dimension_numbers = #tpu.dot_dimension_numbers<[1], [0], [0], [1], [0, 0, 1, 1], [], []>} : vector<24x2304xbf16>, vector<2304x768xbf16>, vector<24x768xf32> -> vector<24x768xf32>
    %c0_3 = arith.constant 0 : index
    %c0_4 = arith.constant 0 : index
    %3 = vector.load %arg3[%c0_3, %c0_4] : memref<1x768xf32, #tpu.memory_space<vmem>>, vector<1x768xf32>
    %4 = vector.broadcast %3 : vector<1x768xf32> to vector<24x768xf32>
    %5 = arith.addf %2, %4 : vector<24x768xf32>
    %c0_5 = arith.constant 0 : index
    %c0_6 = arith.constant 0 : index
    %6 = vector.load %arg4[%c0_5, %c0_6] : memref<24x768xf32, #tpu.memory_space<vmem>>, vector<24x768xf32>
    tpu.vector_store %arg4[%c0_5, %c0_6], %5 {strides = array<i32>} : memref<24x768xf32, #tpu.memory_space<vmem>>, vector<24x768xf32>,
    return
  }
  func.func @transform_0(%arg0: i32) -> (i32, i32) {
    %c0_i32 = arith.constant 0 : i32
    %c0_i32_0 = arith.constant 0 : i32
    %c0_i32_1 = arith.constant 0 : i32
    return %c0_i32, %c0_i32_0 : i32, i32
  }
  func.func @transform_1(%arg0: i32) -> (i32, i32) {
    %c0_i32 = arith.constant 0 : i32
    %c0_i32_0 = arith.constant 0 : i32
    %c0_i32_1 = arith.constant 0 : i32
    return %c0_i32, %c0_i32_0 : i32, i32
  }
  func.func @transform_2(%arg0: i32) -> (i32, i32) {
    %c0_i32 = arith.constant 0 : i32
    %c0_i32_0 = arith.constant 0 : i32
    %c0_i32_1 = arith.constant 0 : i32
    return %c0_i32, %c0_i32_0 : i32, i32
  }
  func.func @transform_3(%arg0: i32) -> (i32, i32) {
    %c0_i32 = arith.constant 0 : i32
    %c0_i32_0 = arith.constant 0 : i32
    %c0_i32_1 = arith.constant 0 : i32
    return %c0_i32, %c0_i32_0 : i32, i32
  }
}

</mosaic_0001>

<llo_original>
// kernel: _encode.1
$region0: #{_encode.1}
  #allocation0 [shape = 'u32[]', space=smem, size = 0x4, offset = 0x4, fixed_abs, tag = 'smem constant byte address 0x4 - core index']
  #allocation1 [shape = 'u32[72,128]{1,0:T(1,128)}', space=vmem, size = 0x9000, scoped, tag = 'internal scratch']
  %s0 = inlined_call_operand.vmem [shape: bf16[24,2304], index: 0, kind: input, shape index: {}]
  %s1 = inlined_call_operand.hbm [shape: bf16[2304,768], index: 1, kind: input, shape index: {}]
  %s2 = inlined_call_operand.hbm [shape: f32[1,768], index: 2, kind: input, shape index: {}]
  %s3 = inlined_call_operand.vmem [shape: f32[24,768], index: 3, kind: output, shape index: {}]
  %s4 = sld [smem:[#allocation0]]
  $region30: #{_encode.1} parent=0
    _
  %s6 = ssub.s32 1, %s4
  %s7 = scalar_select 0, %s6, %s4
  $region1: #{_encode.1} parent=0
    #allocation2 [shape = 'u8[3538944]{0}', space=vmem, size = 0x360000, scoped, tag = 'input window, operand 1, single buffered']
    #allocation3 [shape = 's32[1]{0}', space=sflag, size = 0x4, scoped, tag = 'scoped memory for _encode.1']
    #allocation4 [shape = 'u8[3072]{0}', space=vmem, size = 0xc00, scoped, tag = 'input window, operand 2, single buffered']
    #allocation5 [shape = 's32[1]{0}', space=sflag, size = 0x4, scoped, tag = 'scoped memory for _encode.1']
    %8 = vsyncpa [#allocation3], 0
    %9 = vsyncpa [#allocation5], 0
    // Predicated region
    $region2: #{_encode.1} parent=1 // pred_check
      _
    $region3: #{_encode.1} parent=1 // pred_check_branch
      %11 = sbr.rel (0) target = $region5
    $region4: #{_encode.1} parent=1 // pred_region
      _
    $region5: #{_encode.1} parent=1 // pred_fallthru
      _
    // Predicated region
    $region6: #{_encode.1} parent=1 // pred_check
      _
    $region7: #{_encode.1} parent=1 // pred_check_branch
      %13 = sbr.rel (0) target = $region9
    $region8: #{_encode.1} parent=1 // pred_region
      %15 = vsyncadd [#allocation3], 0
      %s16 = sshll.u32 %s1, 4
      %s17 = int_to_ptr.hbm [resolvable:$true] %s16
      %s18 = sshll.u32 [#allocation2], 4
      %s19 = int_to_ptr.vmem [resolvable:$true] %s18
      %24 = dma.hbm_to_vmem [thread:$0]  %s17, 110592, %s19, [#allocation3], 384, 384, 24
    $region9: #{_encode.1} parent=1 // pred_fallthru
      _
    // Predicated region
    $region10: #{_encode.1} parent=1 // pred_check
      _
    $region11: #{_encode.1} parent=1 // pred_check_branch
      %26 = sbr.rel (0) target = $region13
    $region12: #{_encode.1} parent=1 // pred_region
      %28 = vsyncadd [#allocation5], 0
      %s30 = sshll.u32 %s2, 4
      %s31 = int_to_ptr.hbm [resolvable:$true] %s30
      %s32 = sshll.u32 [#allocation4], 4
      %s33 = int_to_ptr.vmem [resolvable:$true] %s32
      %35 = dma.hbm_to_vmem [thread:$0]  %s31, 96, %s33, [#allocation5]
    $region13: #{_encode.1} parent=1 // pred_fallthru
      _
    // Predicated region
    $region14: #{_encode.1} parent=1 // pred_check
      _
    $region15: #{_encode.1} parent=1 // pred_check_branch
      %37 = sbr.rel (0) target = $region17
    $region16: #{_encode.1} parent=1 // pred_region
      %39 = dma.done [#allocation3], 110592
    $region17: #{_encode.1} parent=1 // pred_fallthru
      _
    // Predicated region
    $region18: #{_encode.1} parent=1 // pred_check
      _
    $region19: #{_encode.1} parent=1 // pred_check_branch
      %41 = sbr.rel (0) target = $region21
    $region20: #{_encode.1} parent=1 // pred_region
      %43 = dma.done [#allocation5], 96
    $region21: #{_encode.1} parent=1 // pred_fallthru
      _
    %v44 = vld [vmem:[%s0] sm:$0xff]
    %v45 = vld [vmem:[%s0 + $0x8] sm:$0xff]
    %v46 = vld [vmem:[%s0 + $0x10] sm:$0xff]
    %v47 = vld [vmem:[%s0 + $0x18] sm:$0xff]
    %v48 = vld [vmem:[%s0 + $0x20] sm:$0xff]
    %v49 = vld [vmem:[%s0 + $0x28] sm:$0xff]
    %v50 = vld [vmem:[%s0 + $0x30] sm:$0xff]
    %v51 = vld [vmem:[%s0 + $0x38] sm:$0xff]
    %v52 = vld [vmem:[%s0 + $0x40] sm:$0xff]
    %v53 = vld [vmem:[%s0 + $0x48] sm:$0xff]
    %v54 = vld [vmem:[%s0 + $0x50] sm:$0xff]
    %v55 = vld [vmem:[%s0 + $0x58] sm:$0xff]
    %v56 = vld [vmem:[%s0 + $0x60] sm:$0xff]
    %v57 = vld [vmem:[%s0 + $0x68] sm:$0xff]
    %v58 = vld [vmem:[%s0 + $0x70] sm:$0xff]
    %v59 = vld [vmem:[%s0 + $0x78] sm:$0xff]
    %v60 = vld [vmem:[%s0 + $0x80] sm:$0xff]
    %v61 = vld [vmem:[%s0 + $0x88] sm:$0xff]
    %v62 = vld [vmem:[%s0 + $0x90] sm:$0xff]
    %v63 = vld [vmem:[%s0 + $0x98] sm:$0xff]
    %v64 = vld [vmem:[%s0 + $0xa0] sm:$0xff]
    %v65 = vld [vmem:[%s0 + $0xa8] sm:$0xff]
    %v66 = vld [vmem:[%s0 + $0xb0] sm:$0xff]
    %v67 = vld [vmem:[%s0 + $0xb8] sm:$0xff]
    %v68 = vld [vmem:[%s0 + $0xc0] sm:$0xff]
    %v69 = vld [vmem:[%s0 + $0xc8] sm:$0xff]
    %v70 = vld [vmem:[%s0 + $0xd0] sm:$0xff]
    %v71 = vld [vmem:[#allocation2] sm:$0xff]
    %v72 = vld [vmem:[#allocation2 + $0x8] sm:$0xff]
    %v73 = vld [vmem:[#allocation2 + $0x10] sm:$0xff]
    %v74 = vld [vmem:[#allocation2 + $0x18] sm:$0xff]
    %v75 = vld [vmem:[#allocation2 + $0x20] sm:$0xff]
    %v76 = vld [vmem:[#allocation2 + $0x28] sm:$0xff]
    %v77 = vld [vmem:[#allocation2 + $0x30] sm:$0xff]
    %v78 = vld [vmem:[#allocation2 + $0x38] sm:$0xff]
    %v79 = vld [vmem:[#allocation2 + $0x40] sm:$0xff]
    %v80 = vld [vmem:[#allocation2 + $0x48] sm:$0xff]
    %v81 = vld [vmem:[#allocation2 + $0x50] sm:$0xff]
    %v82 = vld [vmem:[#allocation2 + $0x58] sm:$0xff]
    %v83 = vld [vmem:[#allocation2 + $0x60] sm:$0xff]
    %v84 = vld [vmem:[#allocation2 + $0x68] sm:$0xff]
    %v85 = vld [vmem:[#allocation2 + $0x70] sm:$0xff]
    %v86 = vld [vmem:[#allocation2 + $0x78] sm:$0xff]
    %v87 = vld [vmem:[#allocation2 + $0x80] sm:$0xff]
    %v88 = vld [vmem:[#allocation2 + $0x88] sm:$0xff]
    %v89 = vld [vmem:[#allocation2 + $0x90] sm:$0xff]
    %v90 = vld [vmem:[#allocation2 + $0x98] sm:$0xff]
    %v91 = vld [vmem:[#allocation2 + $0xa0] sm:$0xff]
    %v92 = vld [vmem:[#allocation2 + $0xa8] sm:$0xff]
    %v93 = vld [vmem:[#allocation2 + $0xb0] sm:$0xff]
    %v94 = vld [vmem:[#allocation2 + $0xb8] sm:$0xff]
    %v95 = vld [vmem:[#allocation2 + $0xc0] sm:$0xff]
    %v96 = vld [vmem:[#allocation2 + $0xc8] sm:$0xff]
    %v97 = vld [vmem:[#allocation2 + $0xd0] sm:$0xff]
    %v98 = vld [vmem:[#allocation2 + $0xd8] sm:$0xff]
    %v99 = vld [vmem:[#allocation2 + $0xe0] sm:$0xff]
    %v100 = vld [vmem:[#allocation2 + $0xe8] sm:$0xff]
    %v101 = vld [vmem:[#allocation2 + $0xf0] sm:$0xff]
    %v102 = vld [vmem:[#allocation2 + $0xf8] sm:$0xff]
    %v103 = vld [vmem:[#allocation2 + $0x100] sm:$0xff]
    %v104 = vld [vmem:[#allocation2 + $0x108] sm:$0xff]
    %v105 = vld [vmem:[#allocation2 + $0x110] sm:$0xff]
    %v106 = vld [vmem:[#allocation2 + $0x118] sm:$0xff]
    %v107 = vld [vmem:[#allocation2 + $0x120] sm:$0xff]
    %v108 = vld [vmem:[#allocation2 + $0x128] sm:$0xff]
    %v109 = vld [vmem:[#allocation2 + $0x130] sm:$0xff]
    %v110 = vld [vmem:[#allocation2 + $0x138] sm:$0xff]
    %v111 = vld [vmem:[#allocation2 + $0x140] sm:$0xff]
    %v112 = vld [vmem:[#allocation2 + $0x148] sm:$0xff]
    %v113 = vld [vmem:[#allocation2 + $0x150] sm:$0xff]
    %v114 = vld [vmem:[#allocation2 + $0x158] sm:$0xff]
    %v115 = vld [vmem:[#allocation2 + $0x160] sm:$0xff]
    %v116 = vld [vmem:[#allocation2 + $0x168] sm:$0xff]
    %v117 = vld [vmem:[#allocation2 + $0x170] sm:$0xff]
    %v118 = vld [vmem:[#allocation2 + $0x178] sm:$0xff]
    %v119 = vld [vmem:[#allocation2 + $0x180] sm:$0xff]
    %v120 = vld [vmem:[#allocation2 + $0x188] sm:$0xff]
    %v121 = vld [vmem:[#allocation2 + $0x190] sm:$0xff]
    %v122 = vld [vmem:[#allocation2 + $0x198] sm:$0xff]
    %v123 = vld [vmem:[#allocation2 + $0x1a0] sm:$0xff]
    %v124 = vld [vmem:[#allocation2 + $0x1a8] sm:$0xff]
    %v125 = vld [vmem:[#allocation2 + $0x1b0] sm:$0xff]
    %v126 = vld [vmem:[#allocation2 + $0x1b8] sm:$0xff]
    %v127 = vld [vmem:[#allocation2 + $0x1c0] sm:$0xff]
    %v128 = vld [vmem:[#allocation2 + $0x1c8] sm:$0xff]
    %v129 = vld [vmem:[#allocation2 + $0x1d0] sm:$0xff]
    %v130 = vld [vmem:[#allocation2 + $0x1d8] sm:$0xff]
    %v131 = vld [vmem:[#allocation2 + $0x1e0] sm:$0xff]
    %v132 = vld [vmem:[#allocation2 + $0x1e8] sm:$0xff]
    %v133 = vld [vmem:[#allocation2 + $0x1f0] sm:$0xff]
    %v134 = vld [vmem:[#allocation2 + $0x1f8] sm:$0xff]
    %v135 = vld [vmem:[#allocation2 + $0x200] sm:$0xff]
    %v136 = vld [vmem:[#allocation2 + $0x208] sm:$0xff]
    %v137 = vld [vmem:[#allocation2 + $0x210] sm:$0xff]
    %v138 = vld [vmem:[#allocation2 + $0x218] sm:$0xff]
    %v139 = vld [vmem:[#allocation2 + $0x220] sm:$0xff]
    %v140 = vld [vmem:[#allocation2 + $0x228] sm:$0xff]
    %v141 = vld [vmem:[#allocation2 + $0x230] sm:$0xff]
    %v142 = vld [vmem:[#allocation2 + $0x238] sm:$0xff]
    %v143 = vld [vmem:[#allocation2 + $0x240] sm:$0xff]
    %v144 = vld [vmem:[#allocation2 + $0x248] sm:$0xff]
    %v145 = vld [vmem:[#allocation2 + $0x250] sm:$0xff]
    %v146 = vld [vmem:[#allocation2 + $0x258] sm:$0xff]
    %v147 = vld [vmem:[#allocation2 + $0x260] sm:$0xff]
    %v148 = vld [vmem:[#allocation2 + $0x268] sm:$0xff]
    %v149 = vld [vmem:[#allocation2 + $0x270] sm:$0xff]
    %v150 = vld [vmem:[#allocation2 + $0x278] sm:$0xff]
    %v151 = vld [vmem:[#allocation2 + $0x280] sm:$0xff]
    %v152 = vld [vmem:[#allocation2 + $0x288] sm:$0xff]
    %v153 = vld [vmem:[#allocation2 + $0x290] sm:$0xff]
    %v154 = vld [vmem:[#allocation2 + $0x298] sm:$0xff]
    %v155 = vld [vmem:[#allocation2 + $0x2a0] sm:$0xff]
    %v156 = vld [vmem:[#allocation2 + $0x2a8] sm:$0xff]
    %v157 = vld [vmem:[#allocation2 + $0x2b0] sm:$0xff]
    %v158 = vld [vmem:[#allocation2 + $0x2b8] sm:$0xff]
    %v159 = vld [vmem:[#allocation2 + $0x2c0] sm:$0xff]
    %v160 = vld [vmem:[#allocation2 + $0x2c8] sm:$0xff]
    %v161 = vld [vmem:[#allocation2 + $0x2d0] sm:$0xff]
    %v162 = vld [vmem:[#allocation2 + $0x2d8] sm:$0xff]
    %v163 = vld [vmem:[#allocation2 + $0x2e0] sm:$0xff]
    %v164 = vld [vmem:[#allocation2 + $0x2e8] sm:$0xff]
    %v165 = vld [vmem:[#allocation2 + $0x2f0] sm:$0xff]
    %v166 = vld [vmem:[#allocation2 + $0x2f8] sm:$0xff]
    %v167 = vld [vmem:[#allocation2 + $0x300] sm:$0xff]
    %v168 = vld [vmem:[#allocation2 + $0x308] sm:$0xff]
    %v169 = vld [vmem:[#allocation2 + $0x310] sm:$0xff]
    %v170 = vld [vmem:[#allocation2 + $0x318] sm:$0xff]
    %v171 = vld [vmem:[#allocation2 + $0x320] sm:$0xff]
    %v172 = vld [vmem:[#allocation2 + $0x328] sm:$0xff]
    %v173 = vld [vmem:[#allocation2 + $0x330] sm:$0xff]
    %v174 = vld [vmem:[#allocation2 + $0x338] sm:$0xff]
    %v175 = vld [vmem:[#allocation2 + $0x340] sm:$0xff]
    %v176 = vld [vmem:[#allocation2 + $0x348] sm:$0xff]
    %v177 = vld [vmem:[#allocation2 + $0x350] sm:$0xff]
    %v178 = vld [vmem:[#allocation2 + $0x358] sm:$0xff]
    %v179 = vld [vmem:[#allocation2 + $0x360] sm:$0xff]
    %v180 = vld [vmem:[#allocation2 + $0x368] sm:$0xff]
    %v181 = vld [vmem:[#allocation2 + $0x370] sm:$0xff]
    %v182 = vld [vmem:[#allocation2 + $0x378] sm:$0xff]
    %v183 = vld [vmem:[#allocation2 + $0x380] sm:$0xff]
    %v184 = vld [vmem:[#allocation2 + $0x388] sm:$0xff]
    %v185 = vld [vmem:[#allocation2 + $0x390] sm:$0xff]
    %v186 = vld [vmem:[#allocation2 + $0x398] sm:$0xff]
    %v187 = vld [vmem:[#allocation2 + $0x3a0] sm:$0xff]
    %v188 = vld [vmem:[#allocation2 + $0x3a8] sm:$0xff]
    %v189 = vld [vmem:[#allocation2 + $0x3b0] sm:$0xff]
    %v190 = vld [vmem:[#allocation2 + $0x3b8] sm:$0xff]
    %v191 = vld [vmem:[#allocation2 + $0x3c0] sm:$0xff]
    %v192 = vld [vmem:[#allocation2 + $0x3c8] sm:$0xff]
    %v193 = vld [vmem:[#allocation2 + $0x3d0] sm:$0xff]
    %v194 = vld [vmem:[#allocation2 + $0x3d8] sm:$0xff]
    %v195 = vld [vmem:[#allocation2 + $0x3e0] sm:$0xff]
    %v196 = vld [vmem:[#allocation2 + $0x3e8] sm:$0xff]
    %v197 = vld [vmem:[#allocation2 + $0x3f0] sm:$0xff]
    %v198 = vld [vmem:[#allocation2 + $0x3f8] sm:$0xff]
    %v199 = vld [vmem:[#allocation2 + $0x400] sm:$0xff]
    %v200 = vld [vmem:[#allocation2 + $0x408] sm:$0xff]
    %v201 = vld [vmem:[#allocation2 + $0x410] sm:$0xff]
    %v202 = vld [vmem:[#allocation2 + $0x418] sm:$0xff]
    %v203 = vld [vmem:[#allocation2 + $0x420] sm:$0xff]
    %v204 = vld [vmem:[#allocation2 + $0x428] sm:$0xff]
    %v205 = vld [vmem:[#allocation2 + $0x430] sm:$0xff]
    %v206 = vld [vmem:[#allocation2 + $0x438] sm:$0xff]
    %v207 = vld [vmem:[#allocation2 + $0x440] sm:$0xff]
    %v208 = vld [vmem:[#allocation2 + $0x448] sm:$0xff]
    %v209 = vld [vmem:[#allocation2 + $0x450] sm:$0xff]
    %v210 = vld [vmem:[#allocation2 + $0x458] sm:$0xff]
    %v211 = vld [vmem:[#allocation2 + $0x460] sm:$0xff]
    %v212 = vld [vmem:[#allocation2 + $0x468] sm:$0xff]
    %v213 = vld [vmem:[#allocation2 + $0x470] sm:$0xff]
    %v214 = vld [vmem:[#allocation2 + $0x478] sm:$0xff]
    %v215 = vld [vmem:[#allocation2 + $0x480] sm:$0xff]
    %v216 = vld [vmem:[#allocation2 + $0x488] sm:$0xff]
    %v217 = vld [vmem:[#allocation2 + $0x490] sm:$0xff]
    %v218 = vld [vmem:[#allocation2 + $0x498] sm:$0xff]
    %v219 = vld [vmem:[#allocation2 + $0x4a0] sm:$0xff]
    %v220 = vld [vmem:[#allocation2 + $0x4a8] sm:$0xff]
    %v221 = vld [vmem:[#allocation2 + $0x4b0] sm:$0xff]
    %v222 = vld [vmem:[#allocation2 + $0x4b8] sm:$0xff]
    %v223 = vld [vmem:[#allocation2 + $0x4c0] sm:$0xff]
    %v224 = vld [vmem:[#allocation2 + $0x4c8] sm:$0xff]
    %v225 = vld [vmem:[#allocation2 + $0x4d0] sm:$0xff]
    %v226 = vld [vmem:[#allocation2 + $0x4d8] sm:$0xff]
    %v227 = vld [vmem:[#allocation2 + $0x4e0] sm:$0xff]
    %v228 = vld [vmem:[#allocation2 + $0x4e8] sm:$0xff]
    %v229 = vld [vmem:[#allocation2 + $0x4f0] sm:$0xff]
    %v230 = vld [vmem:[#allocation2 + $0x4f8] sm:$0xff]
    %v231 = vld [vmem:[#allocation2 + $0x500] sm:$0xff]
    %v232 = vld [vmem:[#allocation2 + $0x508] sm:$0xff]
    %v233 = vld [vmem:[#allocation2 + $0x510] sm:$0xff]
    %v234 = vld [vmem:[#allocation2 + $0x518] sm:$0xff]
    %v235 = vld [vmem:[#allocation2 + $0x520] sm:$0xff]
    %v236 = vld [vmem:[#allocation2 + $0x528] sm:$0xff]
    %v237 = vld [vmem:[#allocation2 + $0x530] sm:$0xff]
    %v238 = vld [vmem:[#allocation2 + $0x538] sm:$0xff]
    %v239 = vld [vmem:[#allocation2 + $0x540] sm:$0xff]
    %v240 = vld [vmem:[#allocation2 + $0x548] sm:$0xff]
    %v241 = vld [vmem:[#allocation2 + $0x550] sm:$0xff]
    %v242 = vld [vmem:[#allocation2 + $0x558] sm:$0xff]
    %v243 = vld [vmem:[#allocation2 + $0x560] sm:$0xff]
    %v244 = vld [vmem:[#allocation2 + $0x568] sm:$0xff]
    %v245 = vld [vmem:[#allocation2 + $0x570] sm:$0xff]
    %v246 = vld [vmem:[#allocation2 + $0x578] sm:$0xff]
    %v247 = vld [vmem:[#allocation2 + $0x580] sm:$0xff]
    %v248 = vld [vmem:[#allocation2 + $0x588] sm:$0xff]
    %v249 = vld [vmem:[#allocation2 + $0x590] sm:$0xff]
    %v250 = vld [vmem:[#allocation2 + $0x598] sm:$0xff]
    %v251 = vld [vmem:[#allocation2 + $0x5a0] sm:$0xff]
    %v252 = vld [vmem:[#allocation2 + $0x5a8] sm:$0xff]
    %v253 = vld [vmem:[#allocation2 + $0x5b0] sm:$0xff]
    %v254 = vld [vmem:[#allocation2 + $0x5b8] sm:$0xff]
    %v255 = vld [vmem:[#allocation2 + $0x5c0] sm:$0xff]
    %v256 = vld [vmem:[#allocation2 + $0x5c8] sm:$0xff]
    %v257 = vld [vmem:[#allocation2 + $0x5d0] sm:$0xff]
    %v258 = vld [vmem:[#allocation2 + $0x5d8] sm:$0xff]
    %v259 = vld [vmem:[#allocation2 + $0x5e0] sm:$0xff]
    %v260 = vld [vmem:[#allocation2 + $0x5e8] sm:$0xff]
    %v261 = vld [vmem:[#allocation2 + $0x5f0] sm:$0xff]
    %v262 = vld [vmem:[#allocation2 + $0x5f8] sm:$0xff]
    %v263 = vld [vmem:[#allocation2 + $0x600] sm:$0xff]
    %v264 = vld [vmem:[#allocation2 + $0x608] sm:$0xff]
    %v265 = vld [vmem:[#allocation2 + $0x610] sm:$0xff]
    %v266 = vld [vmem:[#allocation2 + $0x618] sm:$0xff]
    %v267 = vld [vmem:[#allocation2 + $0x620] sm:$0xff]
    %v268 = vld [vmem:[#allocation2 + $0x628] sm:$0xff]
    %v269 = vld [vmem:[#allocation2 + $0x630] sm:$0xff]
    %v270 = vld [vmem:[#allocation2 + $0x638] sm:$0xff]
    %v271 = vld [vmem:[#allocation2 + $0x640] sm:$0xff]
    %v272 = vld [vmem:[#allocation2 + $0x648] sm:$0xff]
    %v273 = vld [vmem:[#allocation2 + $0x650] sm:$0xff]
    %v274 = vld [vmem:[#allocation2 + $0x658] sm:$0xff]
    %v275 = vld [vmem:[#allocation2 + $0x660] sm:$0xff]
    %v276 = vld [vmem:[#allocation2 + $0x668] sm:$0xff]
    %v277 = vld [vmem:[#allocation2 + $0x670] sm:$0xff]
    %v278 = vld [vmem:[#allocation2 + $0x678] sm:$0xff]
    %v279 = vld [vmem:[#allocation2 + $0x680] sm:$0xff]
    %v280 = vld [vmem:[#allocation2 + $0x688] sm:$0xff]
    %v281 = vld [vmem:[#allocation2 + $0x690] sm:$0xff]
    %v282 = vld [vmem:[#allocation2 + $0x698] sm:$0xff]
    %v283 = vld [vmem:[#allocation2 + $0x6a0] sm:$0xff]
    %v284 = vld [vmem:[#allocation2 + $0x6a8] sm:$0xff]
    %v285 = vld [vmem:[#allocation2 + $0x6b0] sm:$0xff]
    %v286 = vld [vmem:[#allocation2 + $0x6b8] sm:$0xff]
    %v287 = vld [vmem:[#allocation2 + $0x6c0] sm:$0xff]
    %v288 = vld [vmem:[#allocation2 + $0x6c8] sm:$0xff]
    %v289 = vld [vmem:[#allocation2 + $0x6d0] sm:$0xff]
    %v290 = vld [vmem:[#allocation2 + $0x6d8] sm:$0xff]
    %v291 = vld [vmem:[#allocation2 + $0x6e0] sm:$0xff]
    %v292 = vld [vmem:[#allocation2 + $0x6e8] sm:$0xff]
    %v293 = vld [vmem:[#allocation2 + $0x6f0] sm:$0xff]
    %v294 = vld [vmem:[#allocation2 + $0x6f8] sm:$0xff]
    %v295 = vld [vmem:[#allocation2 + $0x700] sm:$0xff]
    %v296 = vld [vmem:[#allocation2 + $0x708] sm:$0xff]
    %v297 = vld [vmem:[#allocation2 + $0x710] sm:$0xff]
    %v298 = vld [vmem:[#allocation2 + $0x718] sm:$0xff]
    %v299 = vld [vmem:[#allocation2 + $0x720] sm:$0xff]
    %v300 = vld [vmem:[#allocation2 + $0x728] sm:$0xff]
    %v301 = vld [vmem:[#allocation2 + $0x730] sm:$0xff]
    %v302 = vld [vmem:[#allocation2 + $0x738] sm:$0xff]
    %v303 = vld [vmem:[#allocation2 + $0x740] sm:$0xff]
    %v304 = vld [vmem:[#allocation2 + $0x748] sm:$0xff]
    %v305 = vld [vmem:[#allocation2 + $0x750] sm:$0xff]
    %v306 = vld [vmem:[#allocation2 + $0x758] sm:$0xff]
    %v307 = vld [vmem:[#allocation2 + $0x760] sm:$0xff]
    %v308 = vld [vmem:[#allocation2 + $0x768] sm:$0xff]
    %v309 = vld [vmem:[#allocation2 + $0x770] sm:$0xff]
    %v310 = vld [vmem:[#allocation2 + $0x778] sm:$0xff]
    %v311 = vld [vmem:[#allocation2 + $0x780] sm:$0xff]
    %v312 = vld [vmem:[#allocation2 + $0x788] sm:$0xff]
    %v313 = vld [vmem:[#allocation2 + $0x790] sm:$0xff]
    %v314 = vld [vmem:[#allocation2 + $0x798] sm:$0xff]
    %v315 = vld [vmem:[#allocation2 + $0x7a0] sm:$0xff]
    %v316 = vld [vmem:[#allocation2 + $0x7a8] sm:$0xff]
    %v317 = vld [vmem:[#allocation2 + $0x7b0] sm:$0xff]
    %v318 = vld [vmem:[#allocation2 + $0x7b8] sm:$0xff]
    %v319 = vld [vmem:[#allocation2 + $0x7c0] sm:$0xff]
    %v320 = vld [vmem:[#allocation2 + $0x7c8] sm:$0xff]
    %v321 = vld [vmem:[#allocation2 + $0x7d0] sm:$0xff]
    %v322 = vld [vmem:[#allocation2 + $0x7d8] sm:$0xff]
    %v323 = vld [vmem:[#allocation2 + $0x7e0] sm:$0xff]
    %v324 = vld [vmem:[#allocation2 + $0x7e8] sm:$0xff]
    %v325 = vld [vmem:[#allocation2 + $0x7f0] sm:$0xff]
    %v326 = vld [vmem:[#allocation2 + $0x7f8] sm:$0xff]
    %v327 = vld [vmem:[#allocation2 + $0x800] sm:$0xff]
    %v328 = vld [vmem:[#allocation2 + $0x808] sm:$0xff]
    %v329 = vld [vmem:[#allocation2 + $0x810] sm:$0xff]
    %v330 = vld [vmem:[#allocation2 + $0x818] sm:$0xff]
    %v331 = vld [vmem:[#allocation2 + $0x820] sm:$0xff]
    %v332 = vld [vmem:[#allocation2 + $0x828] sm:$0xff]
    %v333 = vld [vmem:[#allocation2 + $0x830] sm:$0xff]
    %v334 = vld [vmem:[#allocation2 + $0x838] sm:$0xff]
    %v335 = vld [vmem:[#allocation2 + $0x840] sm:$0xff]
    %v336 = vld [vmem:[#allocation2 + $0x848] sm:$0xff]
    %v337 = vld [vmem:[#allocation2 + $0x850] sm:$0xff]
    %v338 = vld [vmem:[#allocation2 + $0x858] sm:$0xff]
    %v339 = vld [vmem:[#allocation2 + $0x860] sm:$0xff]
    %v340 = vld [vmem:[#allocation2 + $0x868] sm:$0xff]
    %v341 = vld [vmem:[#allocation2 + $0x870] sm:$0xff]
    %v342 = vld [vmem:[#allocation2 + $0x878] sm:$0xff]
    %v343 = vld [vmem:[#allocation2 + $0x880] sm:$0xff]
    %v344 = vld [vmem:[#allocation2 + $0x888] sm:$0xff]
    %v345 = vld [vmem:[#allocation2 + $0x890] sm:$0xff]
    %v346 = vld [vmem:[#allocation2 + $0x898] sm:$0xff]
    %v347 = vld [vmem:[#allocation2 + $0x8a0] sm:$0xff]
    %v348 = vld [vmem:[#allocation2 + $0x8a8] sm:$0xff]
    %v349 = vld [vmem:[#allocation2 + $0x8b0] sm:$0xff]
    %v350 = vld [vmem:[#allocation2 + $0x8b8] sm:$0xff]
    %v351 = vld [vmem:[#allocation2 + $0x8c0] sm:$0xff]
    %v352 = vld [vmem:[#allocation2 + $0x8c8] sm:$0xff]
    %v353 = vld [vmem:[#allocation2 + $0x8d0] sm:$0xff]
    %v354 = vld [vmem:[#allocation2 + $0x8d8] sm:$0xff]
    %v355 = vld [vmem:[#allocation2 + $0x8e0] sm:$0xff]
    %v356 = vld [vmem:[#allocation2 + $0x8e8] sm:$0xff]
    %v357 = vld [vmem:[#allocation2 + $0x8f0] sm:$0xff]
    %v358 = vld [vmem:[#allocation2 + $0x8f8] sm:$0xff]
    %v359 = vld [vmem:[#allocation2 + $0x900] sm:$0xff]
    %v360 = vld [vmem:[#allocation2 + $0x908] sm:$0xff]
    %v361 = vld [vmem:[#allocation2 + $0x910] sm:$0xff]
    %v362 = vld [vmem:[#allocation2 + $0x918] sm:$0xff]
    %v363 = vld [vmem:[#allocation2 + $0x920] sm:$0xff]
    %v364 = vld [vmem:[#allocation2 + $0x928] sm:$0xff]
    %v365 = vld [vmem:[#allocation2 + $0x930] sm:$0xff]
    %v366 = vld [vmem:[#allocation2 + $0x938] sm:$0xff]
    %v367 = vld [vmem:[#allocation2 + $0x940] sm:$0xff]
    %v368 = vld [vmem:[#allocation2 + $0x948] sm:$0xff]
    %v369 = vld [vmem:[#allocation2 + $0x950] sm:$0xff]
    %v370 = vld [vmem:[#allocation2 + $0x958] sm:$0xff]
    %v371 = vld [vmem:[#allocation2 + $0x960] sm:$0xff]
    %v372 = vld [vmem:[#allocation2 + $0x968] sm:$0xff]
    %v373 = vld [vmem:[#allocation2 + $0x970] sm:$0xff]
    %v374 = vld [vmem:[#allocation2 + $0x978] sm:$0xff]
    %v375 = vld [vmem:[#allocation2 + $0x980] sm:$0xff]
    %v376 = vld [vmem:[#allocation2 + $0x988] sm:$0xff]
    %v377 = vld [vmem:[#allocation2 + $0x990] sm:$0xff]
    %v378 = vld [vmem:[#allocation2 + $0x998] sm:$0xff]
    %v379 = vld [vmem:[#allocation2 + $0x9a0] sm:$0xff]
    %v380 = vld [vmem:[#allocation2 + $0x9a8] sm:$0xff]
    %v381 = vld [vmem:[#allocation2 + $0x9b0] sm:$0xff]
    %v382 = vld [vmem:[#allocation2 + $0x9b8] sm:$0xff]
    %v383 = vld [vmem:[#allocation2 + $0x9c0] sm:$0xff]
    %v384 = vld [vmem:[#allocation2 + $0x9c8] sm:$0xff]
    %v385 = vld [vmem:[#allocation2 + $0x9d0] sm:$0xff]
    %v386 = vld [vmem:[#allocation2 + $0x9d8] sm:$0xff]
    %v387 = vld [vmem:[#allocation2 + $0x9e0] sm:$0xff]
    %v388 = vld [vmem:[#allocation2 + $0x9e8] sm:$0xff]
    %v389 = vld [vmem:[#allocation2 + $0x9f0] sm:$0xff]
    %v390 = vld [vmem:[#allocation2 + $0x9f8] sm:$0xff]
    %v391 = vld [vmem:[#allocation2 + $0xa00] sm:$0xff]
    %v392 = vld [vmem:[#allocation2 + $0xa08] sm:$0xff]
    %v393 = vld [vmem:[#allocation2 + $0xa10] sm:$0xff]
    %v394 = vld [vmem:[#allocation2 + $0xa18] sm:$0xff]
    %v395 = vld [vmem:[#allocation2 + $0xa20] sm:$0xff]
    %v396 = vld [vmem:[#allocation2 + $0xa28] sm:$0xff]
    %v397 = vld [vmem:[#allocation2 + $0xa30] sm:$0xff]
    %v398 = vld [vmem:[#allocation2 + $0xa38] sm:$0xff]
    %v399 = vld [vmem:[#allocation2 + $0xa40] sm:$0xff]
    %v400 = vld [vmem:[#allocation2 + $0xa48] sm:$0xff]
    %v401 = vld [vmem:[#allocation2 + $0xa50] sm:$0xff]
    %v402 = vld [vmem:[#allocation2 + $0xa58] sm:$0xff]
    %v403 = vld [vmem:[#allocation2 + $0xa60] sm:$0xff]
    %v404 = vld [vmem:[#allocation2 + $0xa68] sm:$0xff]
    %v405 = vld [vmem:[#allocation2 + $0xa70] sm:$0xff]
    %v406 = vld [vmem:[#allocation2 + $0xa78] sm:$0xff]
    %v407 = vld [vmem:[#allocation2 + $0xa80] sm:$0xff]
    %v408 = vld [vmem:[#allocation2 + $0xa88] sm:$0xff]
    %v409 = vld [vmem:[#allocation2 + $0xa90] sm:$0xff]
    %v410 = vld [vmem:[#allocation2 + $0xa98] sm:$0xff]
    %v411 = vld [vmem:[#allocation2 + $0xaa0] sm:$0xff]
    %v412 = vld [vmem:[#allocation2 + $0xaa8] sm:$0xff]
    %v413 = vld [vmem:[#allocation2 + $0xab0] sm:$0xff]
    %v414 = vld [vmem:[#allocation2 + $0xab8] sm:$0xff]
    %v415 = vld [vmem:[#allocation2 + $0xac0] sm:$0xff]
    %v416 = vld [vmem:[#allocation2 + $0xac8] sm:$0xff]
    %v417 = vld [vmem:[#allocation2 + $0xad0] sm:$0xff]
    %v418 = vld [vmem:[#allocation2 + $0xad8] sm:$0xff]
    %v419 = vld [vmem:[#allocation2 + $0xae0] sm:$0xff]
    %v420 = vld [vmem:[#allocation2 + $0xae8] sm:$0xff]
    %v421 = vld [vmem:[#allocation2 + $0xaf0] sm:$0xff]
    %v422 = vld [vmem:[#allocation2 + $0xaf8] sm:$0xff]
    %v423 = vld [vmem:[#allocation2 + $0xb00] sm:$0xff]
    %v424 = vld [vmem:[#allocation2 + $0xb08] sm:$0xff]
    %v425 = vld [vmem:[#allocation2 + $0xb10] sm:$0xff]
    %v426 = vld [vmem:[#allocation2 + $0xb18] sm:$0xff]
    %v427 = vld [vmem:[#allocation2 + $0xb20] sm:$0xff]
    %v428 = vld [vmem:[#allocation2 + $0xb28] sm:$0xff]
    %v429 = vld [vmem:[#allocation2 + $0xb30] sm:$0xff]
    %v430 = vld [vmem:[#allocation2 + $0xb38] sm:$0xff]
    %v431 = vld [vmem:[#allocation2 + $0xb40] sm:$0xff]
    %v432 = vld [vmem:[#allocation2 + $0xb48] sm:$0xff]
    %v433 = vld [vmem:[#allocation2 + $0xb50] sm:$0xff]
    %v434 = vld [vmem:[#allocation2 + $0xb58] sm:$0xff]
    %v435 = vld [vmem:[#allocation2 + $0xb60] sm:$0xff]
    %v436 = vld [vmem:[#allocation2 + $0xb68] sm:$0xff]
    %v437 = vld [vmem:[#allocation2 + $0xb70] sm:$0xff]
    %v438 = vld [vmem:[#allocation2 + $0xb78] sm:$0xff]
    %v439 = vld [vmem:[#allocation2 + $0xb80] sm:$0xff]
    %v440 = vld [vmem:[#allocation2 + $0xb88] sm:$0xff]
    %v441 = vld [vmem:[#allocation2 + $0xb90] sm:$0xff]
    %v442 = vld [vmem:[#allocation2 + $0xb98] sm:$0xff]
    %v443 = vld [vmem:[#allocation2 + $0xba0] sm:$0xff]
    %v444 = vld [vmem:[#allocation2 + $0xba8] sm:$0xff]
    %v445 = vld [vmem:[#allocation2 + $0xbb0] sm:$0xff]
    %v446 = vld [vmem:[#allocation2 + $0xbb8] sm:$0xff]
    %v447 = vld [vmem:[#allocation2 + $0xbc0] sm:$0xff]
    %v448 = vld [vmem:[#allocation2 + $0xbc8] sm:$0xff]
    %v449 = vld [vmem:[#allocation2 + $0xbd0] sm:$0xff]
    %v450 = vld [vmem:[#allocation2 + $0xbd8] sm:$0xff]
    %v451 = vld [vmem:[#allocation2 + $0xbe0] sm:$0xff]
    %v452 = vld [vmem:[#allocation2 + $0xbe8] sm:$0xff]
    %v453 = vld [vmem:[#allocation2 + $0xbf0] sm:$0xff]
    %v454 = vld [vmem:[#allocation2 + $0xbf8] sm:$0xff]
    %v455 = vld [vmem:[#allocation2 + $0xc00] sm:$0xff]
    %v456 = vld [vmem:[#allocation2 + $0xc08] sm:$0xff]
    %v457 = vld [vmem:[#allocation2 + $0xc10] sm:$0xff]
    %v458 = vld [vmem:[#allocation2 + $0xc18] sm:$0xff]
    %v459 = vld [vmem:[#allocation2 + $0xc20] sm:$0xff]
    %v460 = vld [vmem:[#allocation2 + $0xc28] sm:$0xff]
    %v461 = vld [vmem:[#allocation2 + $0xc30] sm:$0xff]
    %v462 = vld [vmem:[#allocation2 + $0xc38] sm:$0xff]
    %v463 = vld [vmem:[#allocation2 + $0xc40] sm:$0xff]
    %v464 = vld [vmem:[#allocation2 + $0xc48] sm:$0xff]
    %v465 = vld [vmem:[#allocation2 + $0xc50] sm:$0xff]
    %v466 = vld [vmem:[#allocation2 + $0xc58] sm:$0xff]
    %v467 = vld [vmem:[#allocation2 + $0xc60] sm:$0xff]
    %v468 = vld [vmem:[#allocation2 + $0xc68] sm:$0xff]
    %v469 = vld [vmem:[#allocation2 + $0xc70] sm:$0xff]
    %v470 = vld [vmem:[#allocation2 + $0xc78] sm:$0xff]
    %v471 = vld [vmem:[#allocation2 + $0xc80] sm:$0xff]
    %v472 = vld [vmem:[#allocation2 + $0xc88] sm:$0xff]
    %v473 = vld [vmem:[#allocation2 + $0xc90] sm:$0xff]
    %v474 = vld [vmem:[#allocation2 + $0xc98] sm:$0xff]
    %v475 = vld [vmem:[#allocation2 + $0xca0] sm:$0xff]
    %v476 = vld [vmem:[#allocation2 + $0xca8] sm:$0xff]
    %v477 = vld [vmem:[#allocation2 + $0xcb0] sm:$0xff]
    %v478 = vld [vmem:[#allocation2 + $0xcb8] sm:$0xff]
    %v479 = vld [vmem:[#allocation2 + $0xcc0] sm:$0xff]
    %v480 = vld [vmem:[#allocation2 + $0xcc8] sm:$0xff]
    %v481 = vld [vmem:[#allocation2 + $0xcd0] sm:$0xff]
    %v482 = vld [vmem:[#allocation2 + $0xcd8] sm:$0xff]
    %v483 = vld [vmem:[#allocation2 + $0xce0] sm:$0xff]
    %v484 = vld [vmem:[#allocation2 + $0xce8] sm:$0xff]
    %v485 = vld [vmem:[#allocation2 + $0xcf0] sm:$0xff]
    %v486 = vld [vmem:[#allocation2 + $0xcf8] sm:$0xff]
    %v487 = vld [vmem:[#allocation2 + $0xd00] sm:$0xff]
    %v488 = vld [vmem:[#allocation2 + $0xd08] sm:$0xff]
    %v489 = vld [vmem:[#allocation2 + $0xd10] sm:$0xff]
    %v490 = vld [vmem:[#allocation2 + $0xd18] sm:$0xff]
    %v491 = vld [vmem:[#allocation2 + $0xd20] sm:$0xff]
    %v492 = vld [vmem:[#allocation2 + $0xd28] sm:$0xff]
    %v493 = vld [vmem:[#allocation2 + $0xd30] sm:$0xff]
    %v494 = vld [vmem:[#allocation2 + $0xd38] sm:$0xff]
    %v495 = vld [vmem:[#allocation2 + $0xd40] sm:$0xff]
    %v496 = vld [vmem:[#allocation2 + $0xd48] sm:$0xff]
    %v497 = vld [vmem:[#allocation2 + $0xd50] sm:$0xff]
    %v498 = vld [vmem:[#allocation2 + $0xd58] sm:$0xff]
    %v499 = vld [vmem:[#allocation2 + $0xd60] sm:$0xff]
    %v500 = vld [vmem:[#allocation2 + $0xd68] sm:$0xff]
    %v501 = vld [vmem:[#allocation2 + $0xd70] sm:$0xff]
    %v502 = vld [vmem:[#allocation2 + $0xd78] sm:$0xff]
    %v503 = vld [vmem:[#allocation2 + $0xd80] sm:$0xff]
    %v504 = vld [vmem:[#allocation2 + $0xd88] sm:$0xff]
    %v505 = vld [vmem:[#allocation2 + $0xd90] sm:$0xff]
    %v506 = vld [vmem:[#allocation2 + $0xd98] sm:$0xff]
    %v507 = vld [vmem:[#allocation2 + $0xda0] sm:$0xff]
    %v508 = vld [vmem:[#allocation2 + $0xda8] sm:$0xff]
    %v509 = vld [vmem:[#allocation2 + $0xdb0] sm:$0xff]
    %v510 = vld [vmem:[#allocation2 + $0xdb8] sm:$0xff]
    %v511 = vld [vmem:[#allocation2 + $0xdc0] sm:$0xff]
    %v512 = vld [vmem:[#allocation2 + $0xdc8] sm:$0xff]
    %v513 = vld [vmem:[#allocation2 + $0xdd0] sm:$0xff]
    %v514 = vld [vmem:[#allocation2 + $0xdd8] sm:$0xff]
    %v515 = vld [vmem:[#allocation2 + $0xde0] sm:$0xff]
    %v516 = vld [vmem:[#allocation2 + $0xde8] sm:$0xff]
    %v517 = vld [vmem:[#allocation2 + $0xdf0] sm:$0xff]
    %v518 = vld [vmem:[#allocation2 + $0xdf8] sm:$0xff]
    %v519 = vld [vmem:[#allocation2 + $0xe00] sm:$0xff]
    %v520 = vld [vmem:[#allocation2 + $0xe08] sm:$0xff]
    %v521 = vld [vmem:[#allocation2 + $0xe10] sm:$0xff]
    %v522 = vld [vmem:[#allocation2 + $0xe18] sm:$0xff]
    %v523 = vld [vmem:[#allocation2 + $0xe20] sm:$0xff]
    %v524 = vld [vmem:[#allocation2 + $0xe28] sm:$0xff]
    %v525 = vld [vmem:[#allocation2 + $0xe30] sm:$0xff]
    %v526 = vld [vmem:[#allocation2 + $0xe38] sm:$0xff]
    %v527 = vld [vmem:[#allocation2 + $0xe40] sm:$0xff]
    %v528 = vld [vmem:[#allocation2 + $0xe48] sm:$0xff]
    %v529 = vld [vmem:[#allocation2 + $0xe50] sm:$0xff]
    %v530 = vld [vmem:[#allocation2 + $0xe58] sm:$0xff]
    %v531 = vld [vmem:[#allocation2 + $0xe60] sm:$0xff]
    %v532 = vld [vmem:[#allocation2 + $0xe68] sm:$0xff]
    %v533 = vld [vmem:[#allocation2 + $0xe70] sm:$0xff]
    %v534 = vld [vmem:[#allocation2 + $0xe78] sm:$0xff]
    %v535 = vld [vmem:[#allocation2 + $0xe80] sm:$0xff]
    %v536 = vld [vmem:[#allocation2 + $0xe88] sm:$0xff]
    %v537 = vld [vmem:[#allocation2 + $0xe90] sm:$0xff]
    %v538 = vld [vmem:[#allocation2 + $0xe98] sm:$0xff]
    %v539 = vld [vmem:[#allocation2 + $0xea0] sm:$0xff]
    %v540 = vld [vmem:[#allocation2 + $0xea8] sm:$0xff]
    %v541 = vld [vmem:[#allocation2 + $0xeb0] sm:$0xff]
    %v542 = vld [vmem:[#allocation2 + $0xeb8] sm:$0xff]
    %v543 = vld [vmem:[#allocation2 + $0xec0] sm:$0xff]
    %v544 = vld [vmem:[#allocation2 + $0xec8] sm:$0xff]
    %v545 = vld [vmem:[#allocation2 + $0xed0] sm:$0xff]
    %v546 = vld [vmem:[#allocation2 + $0xed8] sm:$0xff]
    %v547 = vld [vmem:[#allocation2 + $0xee0] sm:$0xff]
    %v548 = vld [vmem:[#allocation2 + $0xee8] sm:$0xff]
    %v549 = vld [vmem:[#allocation2 + $0xef0] sm:$0xff]
    %v550 = vld [vmem:[#allocation2 + $0xef8] sm:$0xff]
    %v551 = vld [vmem:[#allocation2 + $0xf00] sm:$0xff]
    %v552 = vld [vmem:[#allocation2 + $0xf08] sm:$0xff]
    %v553 = vld [vmem:[#allocation2 + $0xf10] sm:$0xff]
    %v554 = vld [vmem:[#allocation2 + $0xf18] sm:$0xff]
    %v555 = vld [vmem:[#allocation2 + $0xf20] sm:$0xff]
    %v556 = vld [vmem:[#allocation2 + $0xf28] sm:$0xff]
    %v557 = vld [vmem:[#allocation2 + $0xf30] sm:$0xff]
    %v558 = vld [vmem:[#allocation2 + $0xf38] sm:$0xff]
    %v559 = vld [vmem:[#allocation2 + $0xf40] sm:$0xff]
    %v560 = vld [vmem:[#allocation2 + $0xf48] sm:$0xff]
    %v561 = vld [vmem:[#allocation2 + $0xf50] sm:$0xff]
    %v562 = vld [vmem:[#allocation2 + $0xf58] sm:$0xff]
    %v563 = vld [vmem:[#allocation2 + $0xf60] sm:$0xff]
    %v564 = vld [vmem:[#allocation2 + $0xf68] sm:$0xff]
    %v565 = vld [vmem:[#allocation2 + $0xf70] sm:$0xff]
    %v566 = vld [vmem:[#allocation2 + $0xf78] sm:$0xff]
    %v567 = vld [vmem:[#allocation2 + $0xf80] sm:$0xff]
    %v568 = vld [vmem:[#allocation2 + $0xf88] sm:$0xff]
    %v569 = vld [vmem:[#allocation2 + $0xf90] sm:$0xff]
    %v570 = vld [vmem:[#allocation2 + $0xf98] sm:$0xff]
    %v571 = vld [vmem:[#allocation2 + $0xfa0] sm:$0xff]
    %v572 = vld [vmem:[#allocation2 + $0xfa8] sm:$0xff]
    %v573 = vld [vmem:[#allocation2 + $0xfb0] sm:$0xff]
    %v574 = vld [vmem:[#allocation2 + $0xfb8] sm:$0xff]
    %v575 = vld [vmem:[#allocation2 + $0xfc0] sm:$0xff]
    %v576 = vld [vmem:[#allocation2 + $0xfc8] sm:$0xff]
    %v577 = vld [vmem:[#allocation2 + $0xfd0] sm:$0xff]
    %v578 = vld [vmem:[#allocation2 + $0xfd8] sm:$0xff]
    %v579 = vld [vmem:[#allocation2 + $0xfe0] sm:$0xff]
    %v580 = vld [vmem:[#allocation2 + $0xfe8] sm:$0xff]
    %v581 = vld [vmem:[#allocation2 + $0xff0] sm:$0xff]
    %v582 = vld [vmem:[#allocation2 + $0xff8] sm:$0xff]
    %v583 = vld [vmem:[#allocation2 + $0x1000] sm:$0xff]
    %v584 = vld [vmem:[#allocation2 + $0x1008] sm:$0xff]
    %v585 = vld [vmem:[#allocation2 + $0x1010] sm:$0xff]
    %v586 = vld [vmem:[#allocation2 + $0x1018] sm:$0xff]
    %v587 = vld [vmem:[#allocation2 + $0x1020] sm:$0xff]
    %v588 = vld [vmem:[#allocation2 + $0x1028] sm:$0xff]
    %v589 = vld [vmem:[#allocation2 + $0x1030] sm:$0xff]
    %v590 = vld [vmem:[#allocation2 + $0x1038] sm:$0xff]
    %v591 = vld [vmem:[#allocation2 + $0x1040] sm:$0xff]
    %v592 = vld [vmem:[#allocation2 + $0x1048] sm:$0xff]
    %v593 = vld [vmem:[#allocation2 + $0x1050] sm:$0xff]
    %v594 = vld [vmem:[#allocation2 + $0x1058] sm:$0xff]
    %v595 = vld [vmem:[#allocation2 + $0x1060] sm:$0xff]
    %v596 = vld [vmem:[#allocation2 + $0x1068] sm:$0xff]
    %v597 = vld [vmem:[#allocation2 + $0x1070] sm:$0xff]
    %v598 = vld [vmem:[#allocation2 + $0x1078] sm:$0xff]
    %v599 = vld [vmem:[#allocation2 + $0x1080] sm:$0xff]
    %v600 = vld [vmem:[#allocation2 + $0x1088] sm:$0xff]
    %v601 = vld [vmem:[#allocation2 + $0x1090] sm:$0xff]
    %v602 = vld [vmem:[#allocation2 + $0x1098] sm:$0xff]
    %v603 = vld [vmem:[#allocation2 + $0x10a0] sm:$0xff]
    %v604 = vld [vmem:[#allocation2 + $0x10a8] sm:$0xff]
    %v605 = vld [vmem:[#allocation2 + $0x10b0] sm:$0xff]
    %v606 = vld [vmem:[#allocation2 + $0x10b8] sm:$0xff]
    %v607 = vld [vmem:[#allocation2 + $0x10c0] sm:$0xff]
    %v608 = vld [vmem:[#allocation2 + $0x10c8] sm:$0xff]
    %v609 = vld [vmem:[#allocation2 + $0x10d0] sm:$0xff]
    %v610 = vld [vmem:[#allocation2 + $0x10d8] sm:$0xff]
    %v611 = vld [vmem:[#allocation2 + $0x10e0] sm:$0xff]
    %v612 = vld [vmem:[#allocation2 + $0x10e8] sm:$0xff]
    %v613 = vld [vmem:[#allocation2 + $0x10f0] sm:$0xff]
    %v614 = vld [vmem:[#allocation2 + $0x10f8] sm:$0xff]
    %v615 = vld [vmem:[#allocation2 + $0x1100] sm:$0xff]
    %v616 = vld [vmem:[#allocation2 + $0x1108] sm:$0xff]
    %v617 = vld [vmem:[#allocation2 + $0x1110] sm:$0xff]
    %v618 = vld [vmem:[#allocation2 + $0x1118] sm:$0xff]
    %v619 = vld [vmem:[#allocation2 + $0x1120] sm:$0xff]
    %v620 = vld [vmem:[#allocation2 + $0x1128] sm:$0xff]
    %v621 = vld [vmem:[#allocation2 + $0x1130] sm:$0xff]
    %v622 = vld [vmem:[#allocation2 + $0x1138] sm:$0xff]
    %v623 = vld [vmem:[#allocation2 + $0x1140] sm:$0xff]
    %v624 = vld [vmem:[#allocation2 + $0x1148] sm:$0xff]
    %v625 = vld [vmem:[#allocation2 + $0x1150] sm:$0xff]
    %v626 = vld [vmem:[#allocation2 + $0x1158] sm:$0xff]
    %v627 = vld [vmem:[#allocation2 + $0x1160] sm:$0xff]
    %v628 = vld [vmem:[#allocation2 + $0x1168] sm:$0xff]
    %v629 = vld [vmem:[#allocation2 + $0x1170] sm:$0xff]
    %v630 = vld [vmem:[#allocation2 + $0x1178] sm:$0xff]
    %v631 = vld [vmem:[#allocation2 + $0x1180] sm:$0xff]
    %v632 = vld [vmem:[#allocation2 + $0x1188] sm:$0xff]
    %v633 = vld [vmem:[#allocation2 + $0x1190] sm:$0xff]
    %v634 = vld [vmem:[#allocation2 + $0x1198] sm:$0xff]
    %v635 = vld [vmem:[#allocation2 + $0x11a0] sm:$0xff]
    %v636 = vld [vmem:[#allocation2 + $0x11a8] sm:$0xff]
    %v637 = vld [vmem:[#allocation2 + $0x11b0] sm:$0xff]
    %v638 = vld [vmem:[#allocation2 + $0x11b8] sm:$0xff]
    %v639 = vld [vmem:[#allocation2 + $0x11c0] sm:$0xff]
    %v640 = vld [vmem:[#allocation2 + $0x11c8] sm:$0xff]
    %v641 = vld [vmem:[#allocation2 + $0x11d0] sm:$0xff]
    %v642 = vld [vmem:[#allocation2 + $0x11d8] sm:$0xff]
    %v643 = vld [vmem:[#allocation2 + $0x11e0] sm:$0xff]
    %v644 = vld [vmem:[#allocation2 + $0x11e8] sm:$0xff]
    %v645 = vld [vmem:[#allocation2 + $0x11f0] sm:$0xff]
    %v646 = vld [vmem:[#allocation2 + $0x11f8] sm:$0xff]
    %v647 = vld [vmem:[#allocation2 + $0x1200] sm:$0xff]
    %v648 = vld [vmem:[#allocation2 + $0x1208] sm:$0xff]
    %v649 = vld [vmem:[#allocation2 + $0x1210] sm:$0xff]
    %v650 = vld [vmem:[#allocation2 + $0x1218] sm:$0xff]
    %v651 = vld [vmem:[#allocation2 + $0x1220] sm:$0xff]
    %v652 = vld [vmem:[#allocation2 + $0x1228] sm:$0xff]
    %v653 = vld [vmem:[#allocation2 + $0x1230] sm:$0xff]
    %v654 = vld [vmem:[#allocation2 + $0x1238] sm:$0xff]
    %v655 = vld [vmem:[#allocation2 + $0x1240] sm:$0xff]
    %v656 = vld [vmem:[#allocation2 + $0x1248] sm:$0xff]
    %v657 = vld [vmem:[#allocation2 + $0x1250] sm:$0xff]
    %v658 = vld [vmem:[#allocation2 + $0x1258] sm:$0xff]
    %v659 = vld [vmem:[#allocation2 + $0x1260] sm:$0xff]
    %v660 = vld [vmem:[#allocation2 + $0x1268] sm:$0xff]
    %v661 = vld [vmem:[#allocation2 + $0x1270] sm:$0xff]
    %v662 = vld [vmem:[#allocation2 + $0x1278] sm:$0xff]
    %v663 = vld [vmem:[#allocation2 + $0x1280] sm:$0xff]
    %v664 = vld [vmem:[#allocation2 + $0x1288] sm:$0xff]
    %v665 = vld [vmem:[#allocation2 + $0x1290] sm:$0xff]
    %v666 = vld [vmem:[#allocation2 + $0x1298] sm:$0xff]
    %v667 = vld [vmem:[#allocation2 + $0x12a0] sm:$0xff]
    %v668 = vld [vmem:[#allocation2 + $0x12a8] sm:$0xff]
    %v669 = vld [vmem:[#allocation2 + $0x12b0] sm:$0xff]
    %v670 = vld [vmem:[#allocation2 + $0x12b8] sm:$0xff]
    %v671 = vld [vmem:[#allocation2 + $0x12c0] sm:$0xff]
    %v672 = vld [vmem:[#allocation2 + $0x12c8] sm:$0xff]
    %v673 = vld [vmem:[#allocation2 + $0x12d0] sm:$0xff]
    %v674 = vld [vmem:[#allocation2 + $0x12d8] sm:$0xff]
    %v675 = vld [vmem:[#allocation2 + $0x12e0] sm:$0xff]
    %v676 = vld [vmem:[#allocation2 + $0x12e8] sm:$0xff]
    %v677 = vld [vmem:[#allocation2 + $0x12f0] sm:$0xff]
    %v678 = vld [vmem:[#allocation2 + $0x12f8] sm:$0xff]
    %v679 = vld [vmem:[#allocation2 + $0x1300] sm:$0xff]
    %v680 = vld [vmem:[#allocation2 + $0x1308] sm:$0xff]
    %v681 = vld [vmem:[#allocation2 + $0x1310] sm:$0xff]
    %v682 = vld [vmem:[#allocation2 + $0x1318] sm:$0xff]
    %v683 = vld [vmem:[#allocation2 + $0x1320] sm:$0xff]
    %v684 = vld [vmem:[#allocation2 + $0x1328] sm:$0xff]
    %v685 = vld [vmem:[#allocation2 + $0x1330] sm:$0xff]
    %v686 = vld [vmem:[#allocation2 + $0x1338] sm:$0xff]
    %v687 = vld [vmem:[#allocation2 + $0x1340] sm:$0xff]
    %v688 = vld [vmem:[#allocation2 + $0x1348] sm:$0xff]
    %v689 = vld [vmem:[#allocation2 + $0x1350] sm:$0xff]
    %v690 = vld [vmem:[#allocation2 + $0x1358] sm:$0xff]
    %v691 = vld [vmem:[#allocation2 + $0x1360] sm:$0xff]
    %v692 = vld [vmem:[#allocation2 + $0x1368] sm:$0xff]
    %v693 = vld [vmem:[#allocation2 + $0x1370] sm:$0xff]
    %v694 = vld [vmem:[#allocation2 + $0x1378] sm:$0xff]
    %v695 = vld [vmem:[#allocation2 + $0x1380] sm:$0xff]
    %v696 = vld [vmem:[#allocation2 + $0x1388] sm:$0xff]
    %v697 = vld [vmem:[#allocation2 + $0x1390] sm:$0xff]
    %v698 = vld [vmem:[#allocation2 + $0x1398] sm:$0xff]
    %v699 = vld [vmem:[#allocation2 + $0x13a0] sm:$0xff]
    %v700 = vld [vmem:[#allocation2 + $0x13a8] sm:$0xff]
    %v701 = vld [vmem:[#allocation2 + $0x13b0] sm:$0xff]
    %v702 = vld [vmem:[#allocation2 + $0x13b8] sm:$0xff]
    %v703 = vld [vmem:[#allocation2 + $0x13c0] sm:$0xff]
    %v704 = vld [vmem:[#allocation2 + $0x13c8] sm:$0xff]
    %v705 = vld [vmem:[#allocation2 + $0x13d0] sm:$0xff]
    %v706 = vld [vmem:[#allocation2 + $0x13d8] sm:$0xff]
    %v707 = vld [vmem:[#allocation2 + $0x13e0] sm:$0xff]
    %v708 = vld [vmem:[#allocation2 + $0x13e8] sm:$0xff]
    %v709 = vld [vmem:[#allocation2 + $0x13f0] sm:$0xff]
    %v710 = vld [vmem:[#allocation2 + $0x13f8] sm:$0xff]
    %v711 = vld [vmem:[#allocation2 + $0x1400] sm:$0xff]
    %v712 = vld [vmem:[#allocation2 + $0x1408] sm:$0xff]
    %v713 = vld [vmem:[#allocation2 + $0x1410] sm:$0xff]
    %v714 = vld [vmem:[#allocation2 + $0x1418] sm:$0xff]
    %v715 = vld [vmem:[#allocation2 + $0x1420] sm:$0xff]
    %v716 = vld [vmem:[#allocation2 + $0x1428] sm:$0xff]
    %v717 = vld [vmem:[#allocation2 + $0x1430] sm:$0xff]
    %v718 = vld [vmem:[#allocation2 + $0x1438] sm:$0xff]
    %v719 = vld [vmem:[#allocation2 + $0x1440] sm:$0xff]
    %v720 = vld [vmem:[#allocation2 + $0x1448] sm:$0xff]
    %v721 = vld [vmem:[#allocation2 + $0x1450] sm:$0xff]
    %v722 = vld [vmem:[#allocation2 + $0x1458] sm:$0xff]
    %v723 = vld [vmem:[#allocation2 + $0x1460] sm:$0xff]
    %v724 = vld [vmem:[#allocation2 + $0x1468] sm:$0xff]
    %v725 = vld [vmem:[#allocation2 + $0x1470] sm:$0xff]
    %v726 = vld [vmem:[#allocation2 + $0x1478] sm:$0xff]
    %v727 = vld [vmem:[#allocation2 + $0x1480] sm:$0xff]
    %v728 = vld [vmem:[#allocation2 + $0x1488] sm:$0xff]
    %v729 = vld [vmem:[#allocation2 + $0x1490] sm:$0xff]
    %v730 = vld [vmem:[#allocation2 + $0x1498] sm:$0xff]
    %v731 = vld [vmem:[#allocation2 + $0x14a0] sm:$0xff]
    %v732 = vld [vmem:[#allocation2 + $0x14a8] sm:$0xff]
    %v733 = vld [vmem:[#allocation2 + $0x14b0] sm:$0xff]
    %v734 = vld [vmem:[#allocation2 + $0x14b8] sm:$0xff]
    %v735 = vld [vmem:[#allocation2 + $0x14c0] sm:$0xff]
    %v736 = vld [vmem:[#allocation2 + $0x14c8] sm:$0xff]
    %v737 = vld [vmem:[#allocation2 + $0x14d0] sm:$0xff]
    %v738 = vld [vmem:[#allocation2 + $0x14d8] sm:$0xff]
    %v739 = vld [vmem:[#allocation2 + $0x14e0] sm:$0xff]
    %v740 = vld [vmem:[#allocation2 + $0x14e8] sm:$0xff]
    %v741 = vld [vmem:[#allocation2 + $0x14f0] sm:$0xff]
    %v742 = vld [vmem:[#allocation2 + $0x14f8] sm:$0xff]
    %v743 = vld [vmem:[#allocation2 + $0x1500] sm:$0xff]
    %v744 = vld [vmem:[#allocation2 + $0x1508] sm:$0xff]
    %v745 = vld [vmem:[#allocation2 + $0x1510] sm:$0xff]
    %v746 = vld [vmem:[#allocation2 + $0x1518] sm:$0xff]
    %v747 = vld [vmem:[#allocation2 + $0x1520] sm:$0xff]
    %v748 = vld [vmem:[#allocation2 + $0x1528] sm:$0xff]
    %v749 = vld [vmem:[#allocation2 + $0x1530] sm:$0xff]
    %v750 = vld [vmem:[#allocation2 + $0x1538] sm:$0xff]
    %v751 = vld [vmem:[#allocation2 + $0x1540] sm:$0xff]
    %v752 = vld [vmem:[#allocation2 + $0x1548] sm:$0xff]
    %v753 = vld [vmem:[#allocation2 + $0x1550] sm:$0xff]
    %v754 = vld [vmem:[#allocation2 + $0x1558] sm:$0xff]
    %v755 = vld [vmem:[#allocation2 + $0x1560] sm:$0xff]
    %v756 = vld [vmem:[#allocation2 + $0x1568] sm:$0xff]
    %v757 = vld [vmem:[#allocation2 + $0x1570] sm:$0xff]
    %v758 = vld [vmem:[#allocation2 + $0x1578] sm:$0xff]
    %v759 = vld [vmem:[#allocation2 + $0x1580] sm:$0xff]
    %v760 = vld [vmem:[#allocation2 + $0x1588] sm:$0xff]
    %v761 = vld [vmem:[#allocation2 + $0x1590] sm:$0xff]
    %v762 = vld [vmem:[#allocation2 + $0x1598] sm:$0xff]
    %v763 = vld [vmem:[#allocation2 + $0x15a0] sm:$0xff]
    %v764 = vld [vmem:[#allocation2 + $0x15a8] sm:$0xff]
    %v765 = vld [vmem:[#allocation2 + $0x15b0] sm:$0xff]
    %v766 = vld [vmem:[#allocation2 + $0x15b8] sm:$0xff]
    %v767 = vld [vmem:[#allocation2 + $0x15c0] sm:$0xff]
    %v768 = vld [vmem:[#allocation2 + $0x15c8] sm:$0xff]
    %v769 = vld [vmem:[#allocation2 + $0x15d0] sm:$0xff]
    %v770 = vld [vmem:[#allocation2 + $0x15d8] sm:$0xff]
    %v771 = vld [vmem:[#allocation2 + $0x15e0] sm:$0xff]
    %v772 = vld [vmem:[#allocation2 + $0x15e8] sm:$0xff]
    %v773 = vld [vmem:[#allocation2 + $0x15f0] sm:$0xff]
    %v774 = vld [vmem:[#allocation2 + $0x15f8] sm:$0xff]
    %v775 = vld [vmem:[#allocation2 + $0x1600] sm:$0xff]
    %v776 = vld [vmem:[#allocation2 + $0x1608] sm:$0xff]
    %v777 = vld [vmem:[#allocation2 + $0x1610] sm:$0xff]
    %v778 = vld [vmem:[#allocation2 + $0x1618] sm:$0xff]
    %v779 = vld [vmem:[#allocation2 + $0x1620] sm:$0xff]
    %v780 = vld [vmem:[#allocation2 + $0x1628] sm:$0xff]
    %v781 = vld [vmem:[#allocation2 + $0x1630] sm:$0xff]
    %v782 = vld [vmem:[#allocation2 + $0x1638] sm:$0xff]
    %v783 = vld [vmem:[#allocation2 + $0x1640] sm:$0xff]
    %v784 = vld [vmem:[#allocation2 + $0x1648] sm:$0xff]
    %v785 = vld [vmem:[#allocation2 + $0x1650] sm:$0xff]
    %v786 = vld [vmem:[#allocation2 + $0x1658] sm:$0xff]
    %v787 = vld [vmem:[#allocation2 + $0x1660] sm:$0xff]
    %v788 = vld [vmem:[#allocation2 + $0x1668] sm:$0xff]
    %v789 = vld [vmem:[#allocation2 + $0x1670] sm:$0xff]
    %v790 = vld [vmem:[#allocation2 + $0x1678] sm:$0xff]
    %v791 = vld [vmem:[#allocation2 + $0x1680] sm:$0xff]
    %v792 = vld [vmem:[#allocation2 + $0x1688] sm:$0xff]
    %v793 = vld [vmem:[#allocation2 + $0x1690] sm:$0xff]
    %v794 = vld [vmem:[#allocation2 + $0x1698] sm:$0xff]
    %v795 = vld [vmem:[#allocation2 + $0x16a0] sm:$0xff]
    %v796 = vld [vmem:[#allocation2 + $0x16a8] sm:$0xff]
    %v797 = vld [vmem:[#allocation2 + $0x16b0] sm:$0xff]
    %v798 = vld [vmem:[#allocation2 + $0x16b8] sm:$0xff]
    %v799 = vld [vmem:[#allocation2 + $0x16c0] sm:$0xff]
    %v800 = vld [vmem:[#allocation2 + $0x16c8] sm:$0xff]
    %v801 = vld [vmem:[#allocation2 + $0x16d0] sm:$0xff]
    %v802 = vld [vmem:[#allocation2 + $0x16d8] sm:$0xff]
    %v803 = vld [vmem:[#allocation2 + $0x16e0] sm:$0xff]
    %v804 = vld [vmem:[#allocation2 + $0x16e8] sm:$0xff]
    %v805 = vld [vmem:[#allocation2 + $0x16f0] sm:$0xff]
    %v806 = vld [vmem:[#allocation2 + $0x16f8] sm:$0xff]
    %v807 = vld [vmem:[#allocation2 + $0x1700] sm:$0xff]
    %v808 = vld [vmem:[#allocation2 + $0x1708] sm:$0xff]
    %v809 = vld [vmem:[#allocation2 + $0x1710] sm:$0xff]
    %v810 = vld [vmem:[#allocation2 + $0x1718] sm:$0xff]
    %v811 = vld [vmem:[#allocation2 + $0x1720] sm:$0xff]
    %v812 = vld [vmem:[#allocation2 + $0x1728] sm:$0xff]
    %v813 = vld [vmem:[#allocation2 + $0x1730] sm:$0xff]
    %v814 = vld [vmem:[#allocation2 + $0x1738] sm:$0xff]
    %v815 = vld [vmem:[#allocation2 + $0x1740] sm:$0xff]
    %v816 = vld [vmem:[#allocation2 + $0x1748] sm:$0xff]
    %v817 = vld [vmem:[#allocation2 + $0x1750] sm:$0xff]
    %v818 = vld [vmem:[#allocation2 + $0x1758] sm:$0xff]
    %v819 = vld [vmem:[#allocation2 + $0x1760] sm:$0xff]
    %v820 = vld [vmem:[#allocation2 + $0x1768] sm:$0xff]
    %v821 = vld [vmem:[#allocation2 + $0x1770] sm:$0xff]
    %v822 = vld [vmem:[#allocation2 + $0x1778] sm:$0xff]
    %v823 = vld [vmem:[#allocation2 + $0x1780] sm:$0xff]
    %v824 = vld [vmem:[#allocation2 + $0x1788] sm:$0xff]
    %v825 = vld [vmem:[#allocation2 + $0x1790] sm:$0xff]
    %v826 = vld [vmem:[#allocation2 + $0x1798] sm:$0xff]
    %v827 = vld [vmem:[#allocation2 + $0x17a0] sm:$0xff]
    %v828 = vld [vmem:[#allocation2 + $0x17a8] sm:$0xff]
    %v829 = vld [vmem:[#allocation2 + $0x17b0] sm:$0xff]
    %v830 = vld [vmem:[#allocation2 + $0x17b8] sm:$0xff]
    %v831 = vld [vmem:[#allocation2 + $0x17c0] sm:$0xff]
    %v832 = vld [vmem:[#allocation2 + $0x17c8] sm:$0xff]
    %v833 = vld [vmem:[#allocation2 + $0x17d0] sm:$0xff]
    %v834 = vld [vmem:[#allocation2 + $0x17d8] sm:$0xff]
    %v835 = vld [vmem:[#allocation2 + $0x17e0] sm:$0xff]
    %v836 = vld [vmem:[#allocation2 + $0x17e8] sm:$0xff]
    %v837 = vld [vmem:[#allocation2 + $0x17f0] sm:$0xff]
    %v838 = vld [vmem:[#allocation2 + $0x17f8] sm:$0xff]
    %v839 = vld [vmem:[#allocation2 + $0x1800] sm:$0xff]
    %v840 = vld [vmem:[#allocation2 + $0x1808] sm:$0xff]
    %v841 = vld [vmem:[#allocation2 + $0x1810] sm:$0xff]
    %v842 = vld [vmem:[#allocation2 + $0x1818] sm:$0xff]
    %v843 = vld [vmem:[#allocation2 + $0x1820] sm:$0xff]
    %v844 = vld [vmem:[#allocation2 + $0x1828] sm:$0xff]
    %v845 = vld [vmem:[#allocation2 + $0x1830] sm:$0xff]
    %v846 = vld [vmem:[#allocation2 + $0x1838] sm:$0xff]
    %v847 = vld [vmem:[#allocation2 + $0x1840] sm:$0xff]
    %v848 = vld [vmem:[#allocation2 + $0x1848] sm:$0xff]
    %v849 = vld [vmem:[#allocation2 + $0x1850] sm:$0xff]
    %v850 = vld [vmem:[#allocation2 + $0x1858] sm:$0xff]
    %v851 = vld [vmem:[#allocation2 + $0x1860] sm:$0xff]
    %v852 = vld [vmem:[#allocation2 + $0x1868] sm:$0xff]
    %v853 = vld [vmem:[#allocation2 + $0x1870] sm:$0xff]
    %v854 = vld [vmem:[#allocation2 + $0x1878] sm:$0xff]
    %v855 = vld [vmem:[#allocation2 + $0x1880] sm:$0xff]
    %v856 = vld [vmem:[#allocation2 + $0x1888] sm:$0xff]
    %v857 = vld [vmem:[#allocation2 + $0x1890] sm:$0xff]
    %v858 = vld [vmem:[#allocation2 + $0x1898] sm:$0xff]
    %v859 = vld [vmem:[#allocation2 + $0x18a0] sm:$0xff]
    %v860 = vld [vmem:[#allocation2 + $0x18a8] sm:$0xff]
    %v861 = vld [vmem:[#allocation2 + $0x18b0] sm:$0xff]
    %v862 = vld [vmem:[#allocation2 + $0x18b8] sm:$0xff]
    %v863 = vld [vmem:[#allocation2 + $0x18c0] sm:$0xff]
    %v864 = vld [vmem:[#allocation2 + $0x18c8] sm:$0xff]
    %v865 = vld [vmem:[#allocation2 + $0x18d0] sm:$0xff]
    %v866 = vld [vmem:[#allocation2 + $0x18d8] sm:$0xff]
    %v867 = vld [vmem:[#allocation2 + $0x18e0] sm:$0xff]
    %v868 = vld [vmem:[#allocation2 + $0x18e8] sm:$0xff]
    %v869 = vld [vmem:[#allocation2 + $0x18f0] sm:$0xff]
    %v870 = vld [vmem:[#allocation2 + $0x18f8] sm:$0xff]
    %v871 = vld [vmem:[#allocation2 + $0x1900] sm:$0xff]
    %v872 = vld [vmem:[#allocation2 + $0x1908] sm:$0xff]
    %v873 = vld [vmem:[#allocation2 + $0x1910] sm:$0xff]
    %v874 = vld [vmem:[#allocation2 + $0x1918] sm:$0xff]
    %v875 = vld [vmem:[#allocation2 + $0x1920] sm:$0xff]
    %v876 = vld [vmem:[#allocation2 + $0x1928] sm:$0xff]
    %v877 = vld [vmem:[#allocation2 + $0x1930] sm:$0xff]
    %v878 = vld [vmem:[#allocation2 + $0x1938] sm:$0xff]
    %v879 = vld [vmem:[#allocation2 + $0x1940] sm:$0xff]
    %v880 = vld [vmem:[#allocation2 + $0x1948] sm:$0xff]
    %v881 = vld [vmem:[#allocation2 + $0x1950] sm:$0xff]
    %v882 = vld [vmem:[#allocation2 + $0x1958] sm:$0xff]
    %v883 = vld [vmem:[#allocation2 + $0x1960] sm:$0xff]
    %v884 = vld [vmem:[#allocation2 + $0x1968] sm:$0xff]
    %v885 = vld [vmem:[#allocation2 + $0x1970] sm:$0xff]
    %v886 = vld [vmem:[#allocation2 + $0x1978] sm:$0xff]
    %v887 = vld [vmem:[#allocation2 + $0x1980] sm:$0xff]
    %v888 = vld [vmem:[#allocation2 + $0x1988] sm:$0xff]
    %v889 = vld [vmem:[#allocation2 + $0x1990] sm:$0xff]
    %v890 = vld [vmem:[#allocation2 + $0x1998] sm:$0xff]
    %v891 = vld [vmem:[#allocation2 + $0x19a0] sm:$0xff]
    %v892 = vld [vmem:[#allocation2 + $0x19a8] sm:$0xff]
    %v893 = vld [vmem:[#allocation2 + $0x19b0] sm:$0xff]
    %v894 = vld [vmem:[#allocation2 + $0x19b8] sm:$0xff]
    %v895 = vld [vmem:[#allocation2 + $0x19c0] sm:$0xff]
    %v896 = vld [vmem:[#allocation2 + $0x19c8] sm:$0xff]
    %v897 = vld [vmem:[#allocation2 + $0x19d0] sm:$0xff]
    %v898 = vld [vmem:[#allocation2 + $0x19d8] sm:$0xff]
    %v899 = vld [vmem:[#allocation2 + $0x19e0] sm:$0xff]
    %v900 = vld [vmem:[#allocation2 + $0x19e8] sm:$0xff]
    %v901 = vld [vmem:[#allocation2 + $0x19f0] sm:$0xff]
    %v902 = vld [vmem:[#allocation2 + $0x19f8] sm:$0xff]
    %v903 = vld [vmem:[#allocation2 + $0x1a00] sm:$0xff]
    %v904 = vld [vmem:[#allocation2 + $0x1a08] sm:$0xff]
    %v905 = vld [vmem:[#allocation2 + $0x1a10] sm:$0xff]
    %v906 = vld [vmem:[#allocation2 + $0x1a18] sm:$0xff]
    %v907 = vld [vmem:[#allocation2 + $0x1a20] sm:$0xff]
    %v908 = vld [vmem:[#allocation2 + $0x1a28] sm:$0xff]
    %v909 = vld [vmem:[#allocation2 + $0x1a30] sm:$0xff]
    %v910 = vld [vmem:[#allocation2 + $0x1a38] sm:$0xff]
    %v911 = vld [vmem:[#allocation2 + $0x1a40] sm:$0xff]
    %v912 = vld [vmem:[#allocation2 + $0x1a48] sm:$0xff]
    %v913 = vld [vmem:[#allocation2 + $0x1a50] sm:$0xff]
    %v914 = vld [vmem:[#allocation2 + $0x1a58] sm:$0xff]
    %v915 = vld [vmem:[#allocation2 + $0x1a60] sm:$0xff]
    %v916 = vld [vmem:[#allocation2 + $0x1a68] sm:$0xff]
    %v917 = vld [vmem:[#allocation2 + $0x1a70] sm:$0xff]
    %v918 = vld [vmem:[#allocation2 + $0x1a78] sm:$0xff]
    %v919 = vld [vmem:[#allocation2 + $0x1a80] sm:$0xff]
    %v920 = vld [vmem:[#allocation2 + $0x1a88] sm:$0xff]
    %v921 = vld [vmem:[#allocation2 + $0x1a90] sm:$0xff]
    %v922 = vld [vmem:[#allocation2 + $0x1a98] sm:$0xff]
    %v923 = vld [vmem:[#allocation2 + $0x1aa0] sm:$0xff]
    %v924 = vld [vmem:[#allocation2 + $0x1aa8] sm:$0xff]
    %v925 = vld [vmem:[#allocation2 + $0x1ab0] sm:$0xff]
    %v926 = vld [vmem:[#allocation2 + $0x1ab8] sm:$0xff]
    %v927 = vld [vmem:[#allocation2 + $0x1ac0] sm:$0xff]
    %v928 = vld [vmem:[#allocation2 + $0x1ac8] sm:$0xff]
    %v929 = vld [vmem:[#allocation2 + $0x1ad0] sm:$0xff]
    %v930 = vld [vmem:[#allocation2 + $0x1ad8] sm:$0xff]
    %v931 = vld [vmem:[#allocation2 + $0x1ae0] sm:$0xff]
    %v932 = vld [vmem:[#allocation2 + $0x1ae8] sm:$0xff]
    %v933 = vld [vmem:[#allocation2 + $0x1af0] sm:$0xff]
    %v934 = vld [vmem:[#allocation2 + $0x1af8] sm:$0xff]
    %v935 = vld [vmem:[#allocation4] sm:$0x3f]
    %v937 = vperm.slane %v935, 0
    %v938 = vperm.slane %v935, 1
    %v939 = vperm.slane %v935, 2
    %v940 = vperm.slane %v935, 3
    %v941 = vperm.slane %v935, 4
    %v942 = vperm.slane %v935, 5
    %v976 = vunpack.c.l.b16 %v44
    %v977 = vunpack.c.h.b16 %v44
    %v978 = vunpack.c.l.b16 %v45
    %v979 = vunpack.c.h.b16 %v45
    %v980 = vunpack.c.l.b16 %v46
    %v981 = vunpack.c.h.b16 %v46
    %v982 = vunpack.c.l.b16 %v47
    %v983 = vunpack.c.h.b16 %v47
    %v984 = vunpack.c.l.b16 %v48
    %v985 = vunpack.c.h.b16 %v48
    %v986 = vunpack.c.l.b16 %v49
    %v987 = vunpack.c.h.b16 %v49
    %v988 = vunpack.c.l.b16 %v50
    %v989 = vunpack.c.h.b16 %v50
    %v990 = vunpack.c.l.b16 %v51
    %v991 = vunpack.c.h.b16 %v51
    %v992 = vunpack.c.l.b16 %v52
    %v993 = vunpack.c.h.b16 %v52
    %v994 = vunpack.c.l.b16 %v53
    %v995 = vunpack.c.h.b16 %v53
    %v996 = vunpack.c.l.b16 %v54
    %v997 = vunpack.c.h.b16 %v54
    %v998 = vunpack.c.l.b16 %v55
    %v999 = vunpack.c.h.b16 %v55
    %v1000 = vunpack.c.l.b16 %v56
    %v1001 = vunpack.c.h.b16 %v56
    %v1002 = vunpack.c.l.b16 %v57
    %v1003 = vunpack.c.h.b16 %v57
    %v1004 = vunpack.c.l.b16 %v58
    %v1005 = vunpack.c.h.b16 %v58
    %v1006 = vunpack.c.l.b16 %v59
    %v1007 = vunpack.c.h.b16 %v59
    %v1008 = vunpack.c.l.b16 %v60
    %v1009 = vunpack.c.h.b16 %v60
    %v1010 = vunpack.c.l.b16 %v61
    %v1011 = vunpack.c.h.b16 %v61
    %v1012 = vunpack.c.l.b16 %v62
    %v1013 = vunpack.c.h.b16 %v62
    %v1014 = vunpack.c.l.b16 %v63
    %v1015 = vunpack.c.h.b16 %v63
    %v1016 = vunpack.c.l.b16 %v64
    %v1017 = vunpack.c.h.b16 %v64
    %v1018 = vunpack.c.l.b16 %v65
    %v1019 = vunpack.c.h.b16 %v65
    %v1020 = vunpack.c.l.b16 %v66
    %v1021 = vunpack.c.h.b16 %v66
    %v1022 = vunpack.c.l.b16 %v67
    %v1023 = vunpack.c.h.b16 %v67
    %v1024 = vunpack.c.l.b16 %v68
    %v1025 = vunpack.c.h.b16 %v68
    %v1026 = vunpack.c.l.b16 %v69
    %v1027 = vunpack.c.h.b16 %v69
    %v1028 = vunpack.c.l.b16 %v70
    %v1029 = vunpack.c.h.b16 %v70
    %v1030 = vpack.c.b16 %v994, %v976
    %v1031 = vpack.c.b16 %v995, %v977
    %v1032 = vpack.c.b16 %v996, %v978
    %v1033 = vpack.c.b16 %v997, %v979
    %v1034 = vpack.c.b16 %v998, %v980
    %v1035 = vpack.c.b16 %v999, %v981
    %v1036 = vpack.c.b16 %v1000, %v982
    %v1037 = vpack.c.b16 %v1001, %v983
    %v1038 = vpack.c.b16 %v1002, %v984
    %v1039 = vpack.c.b16 %v1003, %v985
    %v1040 = vpack.c.b16 %v1004, %v986
    %v1041 = vpack.c.b16 %v1005, %v987
    %v1042 = vpack.c.b16 %v1006, %v988
    %v1043 = vpack.c.b16 %v1007, %v989
    %v1044 = vpack.c.b16 %v1008, %v990
    %v1045 = vpack.c.b16 %v1009, %v991
    %v1046 = vpack.c.b16 %v1010, %v992
    %v1047 = vpack.c.b16 %v1011, %v993
    %v1048 = vpack.c.b16 %v1012, %v1012
    %v1049 = vpack.c.b16 %v1013, %v1013
    %v1050 = vpack.c.b16 %v1014, %v1014
    %v1051 = vpack.c.b16 %v1015, %v1015
    %v1052 = vpack.c.b16 %v1016, %v1016
    %v1053 = vpack.c.b16 %v1017, %v1017
    %v1054 = vpack.c.b16 %v1018, %v1018
    %v1055 = vpack.c.b16 %v1019, %v1019
    %v1056 = vpack.c.b16 %v1020, %v1020
    %v1057 = vpack.c.b16 %v1021, %v1021
    %v1058 = vpack.c.b16 %v1022, %v1022
    %v1059 = vpack.c.b16 %v1023, %v1023
    %v1060 = vpack.c.b16 %v1024, %v1024
    %v1061 = vpack.c.b16 %v1025, %v1025
    %v1062 = vpack.c.b16 %v1026, %v1026
    %v1063 = vpack.c.b16 %v1027, %v1027
    %v1064 = vpack.c.b16 %v1028, %v1028
    %v1065 = vpack.c.b16 %v1029, %v1029
    %v1966 = vunpack.c.l.b16 %v71
    %v1967 = vunpack.c.h.b16 %v71
    %v1968 = vunpack.c.l.b16 %v72
    %v1969 = vunpack.c.h.b16 %v72
    %v1970 = vunpack.c.l.b16 %v73
    %v1971 = vunpack.c.h.b16 %v73
    %v1972 = vunpack.c.l.b16 %v74
    %v1973 = vunpack.c.h.b16 %v74
    %v1974 = vunpack.c.l.b16 %v75
    %v1975 = vunpack.c.h.b16 %v75
    %v1976 = vunpack.c.l.b16 %v76
    %v1977 = vunpack.c.h.b16 %v76
    %v1978 = vunpack.c.l.b16 %v77
    %v1979 = vunpack.c.h.b16 %v77
    %v1980 = vunpack.c.l.b16 %v78
    %v1981 = vunpack.c.h.b16 %v78
    %v1982 = vunpack.c.l.b16 %v79
    %v1983 = vunpack.c.h.b16 %v79
    %v1984 = vunpack.c.l.b16 %v80
    %v1985 = vunpack.c.h.b16 %v80
    %v1986 = vunpack.c.l.b16 %v81
    %v1987 = vunpack.c.h.b16 %v81
    %v1988 = vunpack.c.l.b16 %v82
    %v1989 = vunpack.c.h.b16 %v82
    %v1990 = vunpack.c.l.b16 %v83
    %v1991 = vunpack.c.h.b16 %v83
    %v1992 = vunpack.c.l.b16 %v84
    %v1993 = vunpack.c.h.b16 %v84
    %v1994 = vunpack.c.l.b16 %v85
    %v1995 = vunpack.c.h.b16 %v85
    %v1996 = vunpack.c.l.b16 %v86
    %v1997 = vunpack.c.h.b16 %v86
    %v1998 = vunpack.c.l.b16 %v87
    %v1999 = vunpack.c.h.b16 %v87
    %v2000 = vunpack.c.l.b16 %v88
    %v2001 = vunpack.c.h.b16 %v88
    %v2002 = vunpack.c.l.b16 %v89
    %v2003 = vunpack.c.h.b16 %v89
    %v2004 = vunpack.c.l.b16 %v90
    %v2005 = vunpack.c.h.b16 %v90
    %v2006 = vunpack.c.l.b16 %v91
    %v2007 = vunpack.c.h.b16 %v91
    %v2008 = vunpack.c.l.b16 %v92
    %v2009 = vunpack.c.h.b16 %v92
    %v2010 = vunpack.c.l.b16 %v93
    %v2011 = vunpack.c.h.b16 %v93
    %v2012 = vunpack.c.l.b16 %v94
    %v2013 = vunpack.c.h.b16 %v94
    %v2014 = vunpack.c.l.b16 %v95
    %v2015 = vunpack.c.h.b16 %v95
    %v2016 = vunpack.c.l.b16 %v96
    %v2017 = vunpack.c.h.b16 %v96
    %v2018 = vunpack.c.l.b16 %v97
    %v2019 = vunpack.c.h.b16 %v97
    %v2020 = vunpack.c.l.b16 %v98
    %v2021 = vunpack.c.h.b16 %v98
    %v2022 = vunpack.c.l.b16 %v99
    %v2023 = vunpack.c.h.b16 %v99
    %v2024 = vunpack.c.l.b16 %v100
    %v2025 = vunpack.c.h.b16 %v100
    %v2026 = vunpack.c.l.b16 %v101
    %v2027 = vunpack.c.h.b16 %v101
    %v2028 = vunpack.c.l.b16 %v102
    %v2029 = vunpack.c.h.b16 %v102
    %v2030 = vunpack.c.l.b16 %v103
    %v2031 = vunpack.c.h.b16 %v103
    %v2032 = vunpack.c.l.b16 %v104
    %v2033 = vunpack.c.h.b16 %v104
    %v2034 = vunpack.c.l.b16 %v105
    %v2035 = vunpack.c.h.b16 %v105
    %v2036 = vunpack.c.l.b16 %v106
    %v2037 = vunpack.c.h.b16 %v106
    %v2038 = vunpack.c.l.b16 %v107
    %v2039 = vunpack.c.h.b16 %v107
    %v2040 = vunpack.c.l.b16 %v108
    %v2041 = vunpack.c.h.b16 %v108
    %v2042 = vunpack.c.l.b16 %v109
    %v2043 = vunpack.c.h.b16 %v109
    %v2044 = vunpack.c.l.b16 %v110
    %v2045 = vunpack.c.h.b16 %v110
    %v2046 = vunpack.c.l.b16 %v111
    %v2047 = vunpack.c.h.b16 %v111
    %v2048 = vunpack.c.l.b16 %v112
    %v2049 = vunpack.c.h.b16 %v112
    %v2050 = vunpack.c.l.b16 %v113
    %v2051 = vunpack.c.h.b16 %v113
    %v2052 = vunpack.c.l.b16 %v114
    %v2053 = vunpack.c.h.b16 %v114
    %v2054 = vunpack.c.l.b16 %v115
    %v2055 = vunpack.c.h.b16 %v115
    %v2056 = vunpack.c.l.b16 %v116
    %v2057 = vunpack.c.h.b16 %v116
    %v2058 = vunpack.c.l.b16 %v117
    %v2059 = vunpack.c.h.b16 %v117
    %v2060 = vunpack.c.l.b16 %v118
    %v2061 = vunpack.c.h.b16 %v118
    %v2062 = vunpack.c.l.b16 %v119
    %v2063 = vunpack.c.h.b16 %v119
    %v2064 = vunpack.c.l.b16 %v120
    %v2065 = vunpack.c.h.b16 %v120
    %v2066 = vunpack.c.l.b16 %v121
    %v2067 = vunpack.c.h.b16 %v121
    %v2068 = vunpack.c.l.b16 %v122
    %v2069 = vunpack.c.h.b16 %v122
    %v2070 = vunpack.c.l.b16 %v123
    %v2071 = vunpack.c.h.b16 %v123
    %v2072 = vunpack.c.l.b16 %v124
    %v2073 = vunpack.c.h.b16 %v124
    %v2074 = vunpack.c.l.b16 %v125
    %v2075 = vunpack.c.h.b16 %v125
    %v2076 = vunpack.c.l.b16 %v126
    %v2077 = vunpack.c.h.b16 %v126
    %v2078 = vunpack.c.l.b16 %v127
    %v2079 = vunpack.c.h.b16 %v127
    %v2080 = vunpack.c.l.b16 %v128
    %v2081 = vunpack.c.h.b16 %v128
    %v2082 = vunpack.c.l.b16 %v129
    %v2083 = vunpack.c.h.b16 %v129
    %v2084 = vunpack.c.l.b16 %v130
    %v2085 = vunpack.c.h.b16 %v130
    %v2086 = vunpack.c.l.b16 %v131
    %v2087 = vunpack.c.h.b16 %v131
    %v2088 = vunpack.c.l.b16 %v132
    %v2089 = vunpack.c.h.b16 %v132
    %v2090 = vunpack.c.l.b16 %v133
    %v2091 = vunpack.c.h.b16 %v133
    %v2092 = vunpack.c.l.b16 %v134
    %v2093 = vunpack.c.h.b16 %v134
    %v2094 = vunpack.c.l.b16 %v135
    %v2095 = vunpack.c.h.b16 %v135
    %v2096 = vunpack.c.l.b16 %v136
    %v2097 = vunpack.c.h.b16 %v136
    %v2098 = vunpack.c.l.b16 %v137
    %v2099 = vunpack.c.h.b16 %v137
    %v2100 = vunpack.c.l.b16 %v138
    %v2101 = vunpack.c.h.b16 %v138
    %v2102 = vunpack.c.l.b16 %v139
    %v2103 = vunpack.c.h.b16 %v139
    %v2104 = vunpack.c.l.b16 %v140
    %v2105 = vunpack.c.h.b16 %v140
    %v2106 = vunpack.c.l.b16 %v141
    %v2107 = vunpack.c.h.b16 %v141
    %v2108 = vunpack.c.l.b16 %v142
    %v2109 = vunpack.c.h.b16 %v142
    %v2110 = vunpack.c.l.b16 %v143
    %v2111 = vunpack.c.h.b16 %v143
    %v2112 = vunpack.c.l.b16 %v144
    %v2113 = vunpack.c.h.b16 %v144
    %v2114 = vunpack.c.l.b16 %v145
    %v2115 = vunpack.c.h.b16 %v145
    %v2116 = vunpack.c.l.b16 %v146
    %v2117 = vunpack.c.h.b16 %v146
    %v2118 = vunpack.c.l.b16 %v147
    %v2119 = vunpack.c.h.b16 %v147
    %v2120 = vunpack.c.l.b16 %v148
    %v2121 = vunpack.c.h.b16 %v148
    %v2122 = vunpack.c.l.b16 %v149
    %v2123 = vunpack.c.h.b16 %v149
    %v2124 = vunpack.c.l.b16 %v150
    %v2125 = vunpack.c.h.b16 %v150
    %v2126 = vunpack.c.l.b16 %v151
    %v2127 = vunpack.c.h.b16 %v151
    %v2128 = vunpack.c.l.b16 %v152
    %v2129 = vunpack.c.h.b16 %v152
    %v2130 = vunpack.c.l.b16 %v153
    %v2131 = vunpack.c.h.b16 %v153
    %v2132 = vunpack.c.l.b16 %v154
    %v2133 = vunpack.c.h.b16 %v154
    %v2134 = vunpack.c.l.b16 %v155
    %v2135 = vunpack.c.h.b16 %v155
    %v2136 = vunpack.c.l.b16 %v156
    %v2137 = vunpack.c.h.b16 %v156
    %v2138 = vunpack.c.l.b16 %v157
    %v2139 = vunpack.c.h.b16 %v157
    %v2140 = vunpack.c.l.b16 %v158
    %v2141 = vunpack.c.h.b16 %v158
    %v2142 = vunpack.c.l.b16 %v159
    %v2143 = vunpack.c.h.b16 %v159
    %v2144 = vunpack.c.l.b16 %v160
    %v2145 = vunpack.c.h.b16 %v160
    %v2146 = vunpack.c.l.b16 %v161
    %v2147 = vunpack.c.h.b16 %v161
    %v2148 = vunpack.c.l.b16 %v162
    %v2149 = vunpack.c.h.b16 %v162
    %v2150 = vunpack.c.l.b16 %v163
    %v2151 = vunpack.c.h.b16 %v163
    %v2152 = vunpack.c.l.b16 %v164
    %v2153 = vunpack.c.h.b16 %v164
    %v2154 = vunpack.c.l.b16 %v165
    %v2155 = vunpack.c.h.b16 %v165
    %v2156 = vunpack.c.l.b16 %v166
    %v2157 = vunpack.c.h.b16 %v166
    %v2158 = vunpack.c.l.b16 %v167
    %v2159 = vunpack.c.h.b16 %v167
    %v2160 = vunpack.c.l.b16 %v168
    %v2161 = vunpack.c.h.b16 %v168
    %v2162 = vunpack.c.l.b16 %v169
    %v2163 = vunpack.c.h.b16 %v169
    %v2164 = vunpack.c.l.b16 %v170
    %v2165 = vunpack.c.h.b16 %v170
    %v2166 = vunpack.c.l.b16 %v171
    %v2167 = vunpack.c.h.b16 %v171
    %v2168 = vunpack.c.l.b16 %v172
    %v2169 = vunpack.c.h.b16 %v172
    %v2170 = vunpack.c.l.b16 %v173
    %v2171 = vunpack.c.h.b16 %v173
    %v2172 = vunpack.c.l.b16 %v174
    %v2173 = vunpack.c.h.b16 %v174
    %v2174 = vunpack.c.l.b16 %v175
    %v2175 = vunpack.c.h.b16 %v175
    %v2176 = vunpack.c.l.b16 %v176
    %v2177 = vunpack.c.h.b16 %v176
    %v2178 = vunpack.c.l.b16 %v177
    %v2179 = vunpack.c.h.b16 %v177
    %v2180 = vunpack.c.l.b16 %v178
    %v2181 = vunpack.c.h.b16 %v178
    %v2182 = vunpack.c.l.b16 %v179
    %v2183 = vunpack.c.h.b16 %v179
    %v2184 = vunpack.c.l.b16 %v180
    %v2185 = vunpack.c.h.b16 %v180
    %v2186 = vunpack.c.l.b16 %v181
    %v2187 = vunpack.c.h.b16 %v181
    %v2188 = vunpack.c.l.b16 %v182
    %v2189 = vunpack.c.h.b16 %v182
    %v2190 = vunpack.c.l.b16 %v183
    %v2191 = vunpack.c.h.b16 %v183
    %v2192 = vunpack.c.l.b16 %v184
    %v2193 = vunpack.c.h.b16 %v184
    %v2194 = vunpack.c.l.b16 %v185
    %v2195 = vunpack.c.h.b16 %v185
    %v2196 = vunpack.c.l.b16 %v186
    %v2197 = vunpack.c.h.b16 %v186
    %v2198 = vunpack.c.l.b16 %v187
    %v2199 = vunpack.c.h.b16 %v187
    %v2200 = vunpack.c.l.b16 %v188
    %v2201 = vunpack.c.h.b16 %v188
    %v2202 = vunpack.c.l.b16 %v189
    %v2203 = vunpack.c.h.b16 %v189
    %v2204 = vunpack.c.l.b16 %v190
    %v2205 = vunpack.c.h.b16 %v190
    %v2206 = vunpack.c.l.b16 %v191
    %v2207 = vunpack.c.h.b16 %v191
    %v2208 = vunpack.c.l.b16 %v192
    %v2209 = vunpack.c.h.b16 %v192
    %v2210 = vunpack.c.l.b16 %v193
    %v2211 = vunpack.c.h.b16 %v193
    %v2212 = vunpack.c.l.b16 %v194
    %v2213 = vunpack.c.h.b16 %v194
    %v2214 = vunpack.c.l.b16 %v195
    %v2215 = vunpack.c.h.b16 %v195
    %v2216 = vunpack.c.l.b16 %v196
    %v2217 = vunpack.c.h.b16 %v196
    %v2218 = vunpack.c.l.b16 %v197
    %v2219 = vunpack.c.h.b16 %v197
    %v2220 = vunpack.c.l.b16 %v198
    %v2221 = vunpack.c.h.b16 %v198
    %v2222 = vunpack.c.l.b16 %v199
    %v2223 = vunpack.c.h.b16 %v199
    %v2224 = vunpack.c.l.b16 %v200
    %v2225 = vunpack.c.h.b16 %v200
    %v2226 = vunpack.c.l.b16 %v201
    %v2227 = vunpack.c.h.b16 %v201
    %v2228 = vunpack.c.l.b16 %v202
    %v2229 = vunpack.c.h.b16 %v202
    %v2230 = vunpack.c.l.b16 %v203
    %v2231 = vunpack.c.h.b16 %v203
    %v2232 = vunpack.c.l.b16 %v204
    %v2233 = vunpack.c.h.b16 %v204
    %v2234 = vunpack.c.l.b16 %v205
    %v2235 = vunpack.c.h.b16 %v205
    %v2236 = vunpack.c.l.b16 %v206
    %v2237 = vunpack.c.h.b16 %v206
    %v2238 = vunpack.c.l.b16 %v207
    %v2239 = vunpack.c.h.b16 %v207
    %v2240 = vunpack.c.l.b16 %v208
    %v2241 = vunpack.c.h.b16 %v208
    %v2242 = vunpack.c.l.b16 %v209
    %v2243 = vunpack.c.h.b16 %v209
    %v2244 = vunpack.c.l.b16 %v210
    %v2245 = vunpack.c.h.b16 %v210
    %v2246 = vunpack.c.l.b16 %v211
    %v2247 = vunpack.c.h.b16 %v211
    %v2248 = vunpack.c.l.b16 %v212
    %v2249 = vunpack.c.h.b16 %v212
    %v2250 = vunpack.c.l.b16 %v213
    %v2251 = vunpack.c.h.b16 %v213
    %v2252 = vunpack.c.l.b16 %v214
    %v2253 = vunpack.c.h.b16 %v214
    %v2254 = vunpack.c.l.b16 %v215
    %v2255 = vunpack.c.h.b16 %v215
    %v2256 = vunpack.c.l.b16 %v216
    %v2257 = vunpack.c.h.b16 %v216
    %v2258 = vunpack.c.l.b16 %v217
    %v2259 = vunpack.c.h.b16 %v217
    %v2260 = vunpack.c.l.b16 %v218
    %v2261 = vunpack.c.h.b16 %v218
    %v2262 = vunpack.c.l.b16 %v219
    %v2263 = vunpack.c.h.b16 %v219
    %v2264 = vunpack.c.l.b16 %v220
    %v2265 = vunpack.c.h.b16 %v220
    %v2266 = vunpack.c.l.b16 %v221
    %v2267 = vunpack.c.h.b16 %v221
    %v2268 = vunpack.c.l.b16 %v222
    %v2269 = vunpack.c.h.b16 %v222
    %v2270 = vunpack.c.l.b16 %v223
    %v2271 = vunpack.c.h.b16 %v223
    %v2272 = vunpack.c.l.b16 %v224
    %v2273 = vunpack.c.h.b16 %v224
    %v2274 = vunpack.c.l.b16 %v225
    %v2275 = vunpack.c.h.b16 %v225
    %v2276 = vunpack.c.l.b16 %v226
    %v2277 = vunpack.c.h.b16 %v226
    %v2278 = vunpack.c.l.b16 %v227
    %v2279 = vunpack.c.h.b16 %v227
    %v2280 = vunpack.c.l.b16 %v228
    %v2281 = vunpack.c.h.b16 %v228
    %v2282 = vunpack.c.l.b16 %v229
    %v2283 = vunpack.c.h.b16 %v229
    %v2284 = vunpack.c.l.b16 %v230
    %v2285 = vunpack.c.h.b16 %v230
    %v2286 = vunpack.c.l.b16 %v231
    %v2287 = vunpack.c.h.b16 %v231
    %v2288 = vunpack.c.l.b16 %v232
    %v2289 = vunpack.c.h.b16 %v232
    %v2290 = vunpack.c.l.b16 %v233
    %v2291 = vunpack.c.h.b16 %v233
    %v2292 = vunpack.c.l.b16 %v234
    %v2293 = vunpack.c.h.b16 %v234
    %v2294 = vunpack.c.l.b16 %v235
    %v2295 = vunpack.c.h.b16 %v235
    %v2296 = vunpack.c.l.b16 %v236
    %v2297 = vunpack.c.h.b16 %v236
    %v2298 = vunpack.c.l.b16 %v237
    %v2299 = vunpack.c.h.b16 %v237
    %v2300 = vunpack.c.l.b16 %v238
    %v2301 = vunpack.c.h.b16 %v238
    %v2302 = vunpack.c.l.b16 %v239
    %v2303 = vunpack.c.h.b16 %v239
    %v2304 = vunpack.c.l.b16 %v240
    %v2305 = vunpack.c.h.b16 %v240
    %v2306 = vunpack.c.l.b16 %v241
    %v2307 = vunpack.c.h.b16 %v241
    %v2308 = vunpack.c.l.b16 %v242
    %v2309 = vunpack.c.h.b16 %v242
    %v2310 = vunpack.c.l.b16 %v243
    %v2311 = vunpack.c.h.b16 %v243
    %v2312 = vunpack.c.l.b16 %v244
    %v2313 = vunpack.c.h.b16 %v244
    %v2314 = vunpack.c.l.b16 %v245
    %v2315 = vunpack.c.h.b16 %v245
    %v2316 = vunpack.c.l.b16 %v246
    %v2317 = vunpack.c.h.b16 %v246
    %v2318 = vunpack.c.l.b16 %v247
    %v2319 = vunpack.c.h.b16 %v247
    %v2320 = vunpack.c.l.b16 %v248
    %v2321 = vunpack.c.h.b16 %v248
    %v2322 = vunpack.c.l.b16 %v249
    %v2323 = vunpack.c.h.b16 %v249
    %v2324 = vunpack.c.l.b16 %v250
    %v2325 = vunpack.c.h.b16 %v250
    %v2326 = vunpack.c.l.b16 %v251
    %v2327 = vunpack.c.h.b16 %v251
    %v2328 = vunpack.c.l.b16 %v252
    %v2329 = vunpack.c.h.b16 %v252
    %v2330 = vunpack.c.l.b16 %v253
    %v2331 = vunpack.c.h.b16 %v253
    %v2332 = vunpack.c.l.b16 %v254
    %v2333 = vunpack.c.h.b16 %v254
    %v2334 = vunpack.c.l.b16 %v255
    %v2335 = vunpack.c.h.b16 %v255
    %v2336 = vunpack.c.l.b16 %v256
    %v2337 = vunpack.c.h.b16 %v256
    %v2338 = vunpack.c.l.b16 %v257
    %v2339 = vunpack.c.h.b16 %v257
    %v2340 = vunpack.c.l.b16 %v258
    %v2341 = vunpack.c.h.b16 %v258
    %v2342 = vunpack.c.l.b16 %v259
    %v2343 = vunpack.c.h.b16 %v259
    %v2344 = vunpack.c.l.b16 %v260
    %v2345 = vunpack.c.h.b16 %v260
    %v2346 = vunpack.c.l.b16 %v261
    %v2347 = vunpack.c.h.b16 %v261
    %v2348 = vunpack.c.l.b16 %v262
    %v2349 = vunpack.c.h.b16 %v262
    %v2350 = vunpack.c.l.b16 %v263
    %v2351 = vunpack.c.h.b16 %v263
    %v2352 = vunpack.c.l.b16 %v264
    %v2353 = vunpack.c.h.b16 %v264
    %v2354 = vunpack.c.l.b16 %v265
    %v2355 = vunpack.c.h.b16 %v265
    %v2356 = vunpack.c.l.b16 %v266
    %v2357 = vunpack.c.h.b16 %v266
    %v2358 = vunpack.c.l.b16 %v267
    %v2359 = vunpack.c.h.b16 %v267
    %v2360 = vunpack.c.l.b16 %v268
    %v2361 = vunpack.c.h.b16 %v268
    %v2362 = vunpack.c.l.b16 %v269
    %v2363 = vunpack.c.h.b16 %v269
    %v2364 = vunpack.c.l.b16 %v270
    %v2365 = vunpack.c.h.b16 %v270
    %v2366 = vunpack.c.l.b16 %v271
    %v2367 = vunpack.c.h.b16 %v271
    %v2368 = vunpack.c.l.b16 %v272
    %v2369 = vunpack.c.h.b16 %v272
    %v2370 = vunpack.c.l.b16 %v273
    %v2371 = vunpack.c.h.b16 %v273
    %v2372 = vunpack.c.l.b16 %v274
    %v2373 = vunpack.c.h.b16 %v274
    %v2374 = vunpack.c.l.b16 %v275
    %v2375 = vunpack.c.h.b16 %v275
    %v2376 = vunpack.c.l.b16 %v276
    %v2377 = vunpack.c.h.b16 %v276
    %v2378 = vunpack.c.l.b16 %v277
    %v2379 = vunpack.c.h.b16 %v277
    %v2380 = vunpack.c.l.b16 %v278
    %v2381 = vunpack.c.h.b16 %v278
    %v2382 = vunpack.c.l.b16 %v279
    %v2383 = vunpack.c.h.b16 %v279
    %v2384 = vunpack.c.l.b16 %v280
    %v2385 = vunpack.c.h.b16 %v280
    %v2386 = vunpack.c.l.b16 %v281
    %v2387 = vunpack.c.h.b16 %v281
    %v2388 = vunpack.c.l.b16 %v282
    %v2389 = vunpack.c.h.b16 %v282
    %v2390 = vunpack.c.l.b16 %v283
    %v2391 = vunpack.c.h.b16 %v283
    %v2392 = vunpack.c.l.b16 %v284
    %v2393 = vunpack.c.h.b16 %v284
    %v2394 = vunpack.c.l.b16 %v285
    %v2395 = vunpack.c.h.b16 %v285
    %v2396 = vunpack.c.l.b16 %v286
    %v2397 = vunpack.c.h.b16 %v286
    %v2398 = vunpack.c.l.b16 %v287
    %v2399 = vunpack.c.h.b16 %v287
    %v2400 = vunpack.c.l.b16 %v288
    %v2401 = vunpack.c.h.b16 %v288
    %v2402 = vunpack.c.l.b16 %v289
    %v2403 = vunpack.c.h.b16 %v289
    %v2404 = vunpack.c.l.b16 %v290
    %v2405 = vunpack.c.h.b16 %v290
    %v2406 = vunpack.c.l.b16 %v291
    %v2407 = vunpack.c.h.b16 %v291
    %v2408 = vunpack.c.l.b16 %v292
    %v2409 = vunpack.c.h.b16 %v292
    %v2410 = vunpack.c.l.b16 %v293
    %v2411 = vunpack.c.h.b16 %v293
    %v2412 = vunpack.c.l.b16 %v294
    %v2413 = vunpack.c.h.b16 %v294
    %v2414 = vunpack.c.l.b16 %v295
    %v2415 = vunpack.c.h.b16 %v295
    %v2416 = vunpack.c.l.b16 %v296
    %v2417 = vunpack.c.h.b16 %v296
    %v2418 = vunpack.c.l.b16 %v297
    %v2419 = vunpack.c.h.b16 %v297
    %v2420 = vunpack.c.l.b16 %v298
    %v2421 = vunpack.c.h.b16 %v298
    %v2422 = vunpack.c.l.b16 %v299
    %v2423 = vunpack.c.h.b16 %v299
    %v2424 = vunpack.c.l.b16 %v300
    %v2425 = vunpack.c.h.b16 %v300
    %v2426 = vunpack.c.l.b16 %v301
    %v2427 = vunpack.c.h.b16 %v301
    %v2428 = vunpack.c.l.b16 %v302
    %v2429 = vunpack.c.h.b16 %v302
    %v2430 = vunpack.c.l.b16 %v303
    %v2431 = vunpack.c.h.b16 %v303
    %v2432 = vunpack.c.l.b16 %v304
    %v2433 = vunpack.c.h.b16 %v304
    %v2434 = vunpack.c.l.b16 %v305
    %v2435 = vunpack.c.h.b16 %v305
    %v2436 = vunpack.c.l.b16 %v306
    %v2437 = vunpack.c.h.b16 %v306
    %v2438 = vunpack.c.l.b16 %v307
    %v2439 = vunpack.c.h.b16 %v307
    %v2440 = vunpack.c.l.b16 %v308
    %v2441 = vunpack.c.h.b16 %v308
    %v2442 = vunpack.c.l.b16 %v309
    %v2443 = vunpack.c.h.b16 %v309
    %v2444 = vunpack.c.l.b16 %v310
    %v2445 = vunpack.c.h.b16 %v310
    %v2446 = vunpack.c.l.b16 %v311
    %v2447 = vunpack.c.h.b16 %v311
    %v2448 = vunpack.c.l.b16 %v312
    %v2449 = vunpack.c.h.b16 %v312
    %v2450 = vunpack.c.l.b16 %v313
    %v2451 = vunpack.c.h.b16 %v313
    %v2452 = vunpack.c.l.b16 %v314
    %v2453 = vunpack.c.h.b16 %v314
    %v2454 = vunpack.c.l.b16 %v315
    %v2455 = vunpack.c.h.b16 %v315
    %v2456 = vunpack.c.l.b16 %v316
    %v2457 = vunpack.c.h.b16 %v316
    %v2458 = vunpack.c.l.b16 %v317
    %v2459 = vunpack.c.h.b16 %v317
    %v2460 = vunpack.c.l.b16 %v318
    %v2461 = vunpack.c.h.b16 %v318
    %v2462 = vunpack.c.l.b16 %v319
    %v2463 = vunpack.c.h.b16 %v319
    %v2464 = vunpack.c.l.b16 %v320
    %v2465 = vunpack.c.h.b16 %v320
    %v2466 = vunpack.c.l.b16 %v321
    %v2467 = vunpack.c.h.b16 %v321
    %v2468 = vunpack.c.l.b16 %v322
    %v2469 = vunpack.c.h.b16 %v322
    %v2470 = vunpack.c.l.b16 %v323
    %v2471 = vunpack.c.h.b16 %v323
    %v2472 = vunpack.c.l.b16 %v324
    %v2473 = vunpack.c.h.b16 %v324
    %v2474 = vunpack.c.l.b16 %v325
    %v2475 = vunpack.c.h.b16 %v325
    %v2476 = vunpack.c.l.b16 %v326
    %v2477 = vunpack.c.h.b16 %v326
    %v2478 = vunpack.c.l.b16 %v327
    %v2479 = vunpack.c.h.b16 %v327
    %v2480 = vunpack.c.l.b16 %v328
    %v2481 = vunpack.c.h.b16 %v328
    %v2482 = vunpack.c.l.b16 %v329
    %v2483 = vunpack.c.h.b16 %v329
    %v2484 = vunpack.c.l.b16 %v330
    %v2485 = vunpack.c.h.b16 %v330
    %v2486 = vunpack.c.l.b16 %v331
    %v2487 = vunpack.c.h.b16 %v331
    %v2488 = vunpack.c.l.b16 %v332
    %v2489 = vunpack.c.h.b16 %v332
    %v2490 = vunpack.c.l.b16 %v333
    %v2491 = vunpack.c.h.b16 %v333
    %v2492 = vunpack.c.l.b16 %v334
    %v2493 = vunpack.c.h.b16 %v334
    %v2494 = vunpack.c.l.b16 %v335
    %v2495 = vunpack.c.h.b16 %v335
    %v2496 = vunpack.c.l.b16 %v336
    %v2497 = vunpack.c.h.b16 %v336
    %v2498 = vunpack.c.l.b16 %v337
    %v2499 = vunpack.c.h.b16 %v337
    %v2500 = vunpack.c.l.b16 %v338
    %v2501 = vunpack.c.h.b16 %v338
    %v2502 = vunpack.c.l.b16 %v339
    %v2503 = vunpack.c.h.b16 %v339
    %v2504 = vunpack.c.l.b16 %v340
    %v2505 = vunpack.c.h.b16 %v340
    %v2506 = vunpack.c.l.b16 %v341
    %v2507 = vunpack.c.h.b16 %v341
    %v2508 = vunpack.c.l.b16 %v342
    %v2509 = vunpack.c.h.b16 %v342
    %v2510 = vunpack.c.l.b16 %v343
    %v2511 = vunpack.c.h.b16 %v343
    %v2512 = vunpack.c.l.b16 %v344
    %v2513 = vunpack.c.h.b16 %v344
    %v2514 = vunpack.c.l.b16 %v345
    %v2515 = vunpack.c.h.b16 %v345
    %v2516 = vunpack.c.l.b16 %v346
    %v2517 = vunpack.c.h.b16 %v346
    %v2518 = vunpack.c.l.b16 %v347
    %v2519 = vunpack.c.h.b16 %v347
    %v2520 = vunpack.c.l.b16 %v348
    %v2521 = vunpack.c.h.b16 %v348
    %v2522 = vunpack.c.l.b16 %v349
    %v2523 = vunpack.c.h.b16 %v349
    %v2524 = vunpack.c.l.b16 %v350
    %v2525 = vunpack.c.h.b16 %v350
    %v2526 = vunpack.c.l.b16 %v351
    %v2527 = vunpack.c.h.b16 %v351
    %v2528 = vunpack.c.l.b16 %v352
    %v2529 = vunpack.c.h.b16 %v352
    %v2530 = vunpack.c.l.b16 %v353
    %v2531 = vunpack.c.h.b16 %v353
    %v2532 = vunpack.c.l.b16 %v354
    %v2533 = vunpack.c.h.b16 %v354
    %v2534 = vunpack.c.l.b16 %v355
    %v2535 = vunpack.c.h.b16 %v355
    %v2536 = vunpack.c.l.b16 %v356
    %v2537 = vunpack.c.h.b16 %v356
    %v2538 = vunpack.c.l.b16 %v357
    %v2539 = vunpack.c.h.b16 %v357
    %v2540 = vunpack.c.l.b16 %v358
    %v2541 = vunpack.c.h.b16 %v358
    %v2542 = vunpack.c.l.b16 %v359
    %v2543 = vunpack.c.h.b16 %v359
    %v2544 = vunpack.c.l.b16 %v360
    %v2545 = vunpack.c.h.b16 %v360
    %v2546 = vunpack.c.l.b16 %v361
    %v2547 = vunpack.c.h.b16 %v361
    %v2548 = vunpack.c.l.b16 %v362
    %v2549 = vunpack.c.h.b16 %v362
    %v2550 = vunpack.c.l.b16 %v363
    %v2551 = vunpack.c.h.b16 %v363
    %v2552 = vunpack.c.l.b16 %v364
    %v2553 = vunpack.c.h.b16 %v364
    %v2554 = vunpack.c.l.b16 %v365
    %v2555 = vunpack.c.h.b16 %v365
    %v2556 = vunpack.c.l.b16 %v366
    %v2557 = vunpack.c.h.b16 %v366
    %v2558 = vunpack.c.l.b16 %v367
    %v2559 = vunpack.c.h.b16 %v367
    %v2560 = vunpack.c.l.b16 %v368
    %v2561 = vunpack.c.h.b16 %v368
    %v2562 = vunpack.c.l.b16 %v369
    %v2563 = vunpack.c.h.b16 %v369
    %v2564 = vunpack.c.l.b16 %v370
    %v2565 = vunpack.c.h.b16 %v370
    %v2566 = vunpack.c.l.b16 %v371
    %v2567 = vunpack.c.h.b16 %v371
    %v2568 = vunpack.c.l.b16 %v372
    %v2569 = vunpack.c.h.b16 %v372
    %v2570 = vunpack.c.l.b16 %v373
    %v2571 = vunpack.c.h.b16 %v373
    %v2572 = vunpack.c.l.b16 %v374
    %v2573 = vunpack.c.h.b16 %v374
    %v2574 = vunpack.c.l.b16 %v375
    %v2575 = vunpack.c.h.b16 %v375
    %v2576 = vunpack.c.l.b16 %v376
    %v2577 = vunpack.c.h.b16 %v376
    %v2578 = vunpack.c.l.b16 %v377
    %v2579 = vunpack.c.h.b16 %v377
    %v2580 = vunpack.c.l.b16 %v378
    %v2581 = vunpack.c.h.b16 %v378
    %v2582 = vunpack.c.l.b16 %v379
    %v2583 = vunpack.c.h.b16 %v379
    %v2584 = vunpack.c.l.b16 %v380
    %v2585 = vunpack.c.h.b16 %v380
    %v2586 = vunpack.c.l.b16 %v381
    %v2587 = vunpack.c.h.b16 %v381
    %v2588 = vunpack.c.l.b16 %v382
    %v2589 = vunpack.c.h.b16 %v382
    %v2590 = vunpack.c.l.b16 %v383
    %v2591 = vunpack.c.h.b16 %v383
    %v2592 = vunpack.c.l.b16 %v384
    %v2593 = vunpack.c.h.b16 %v384
    %v2594 = vunpack.c.l.b16 %v385
    %v2595 = vunpack.c.h.b16 %v385
    %v2596 = vunpack.c.l.b16 %v386
    %v2597 = vunpack.c.h.b16 %v386
    %v2598 = vunpack.c.l.b16 %v387
    %v2599 = vunpack.c.h.b16 %v387
    %v2600 = vunpack.c.l.b16 %v388
    %v2601 = vunpack.c.h.b16 %v388
    %v2602 = vunpack.c.l.b16 %v389
    %v2603 = vunpack.c.h.b16 %v389
    %v2604 = vunpack.c.l.b16 %v390
    %v2605 = vunpack.c.h.b16 %v390
    %v2606 = vunpack.c.l.b16 %v391
    %v2607 = vunpack.c.h.b16 %v391
    %v2608 = vunpack.c.l.b16 %v392
    %v2609 = vunpack.c.h.b16 %v392
    %v2610 = vunpack.c.l.b16 %v393
    %v2611 = vunpack.c.h.b16 %v393
    %v2612 = vunpack.c.l.b16 %v394
    %v2613 = vunpack.c.h.b16 %v394
    %v2614 = vunpack.c.l.b16 %v395
    %v2615 = vunpack.c.h.b16 %v395
    %v2616 = vunpack.c.l.b16 %v396
    %v2617 = vunpack.c.h.b16 %v396
    %v2618 = vunpack.c.l.b16 %v397
    %v2619 = vunpack.c.h.b16 %v397
    %v2620 = vunpack.c.l.b16 %v398
    %v2621 = vunpack.c.h.b16 %v398
    %v2622 = vunpack.c.l.b16 %v399
    %v2623 = vunpack.c.h.b16 %v399
    %v2624 = vunpack.c.l.b16 %v400
    %v2625 = vunpack.c.h.b16 %v400
    %v2626 = vunpack.c.l.b16 %v401
    %v2627 = vunpack.c.h.b16 %v401
    %v2628 = vunpack.c.l.b16 %v402
    %v2629 = vunpack.c.h.b16 %v402
    %v2630 = vunpack.c.l.b16 %v403
    %v2631 = vunpack.c.h.b16 %v403
    %v2632 = vunpack.c.l.b16 %v404
    %v2633 = vunpack.c.h.b16 %v404
    %v2634 = vunpack.c.l.b16 %v405
    %v2635 = vunpack.c.h.b16 %v405
    %v2636 = vunpack.c.l.b16 %v406
    %v2637 = vunpack.c.h.b16 %v406
    %v2638 = vunpack.c.l.b16 %v407
    %v2639 = vunpack.c.h.b16 %v407
    %v2640 = vunpack.c.l.b16 %v408
    %v2641 = vunpack.c.h.b16 %v408
    %v2642 = vunpack.c.l.b16 %v409
    %v2643 = vunpack.c.h.b16 %v409
    %v2644 = vunpack.c.l.b16 %v410
    %v2645 = vunpack.c.h.b16 %v410
    %v2646 = vunpack.c.l.b16 %v411
    %v2647 = vunpack.c.h.b16 %v411
    %v2648 = vunpack.c.l.b16 %v412
    %v2649 = vunpack.c.h.b16 %v412
    %v2650 = vunpack.c.l.b16 %v413
    %v2651 = vunpack.c.h.b16 %v413
    %v2652 = vunpack.c.l.b16 %v414
    %v2653 = vunpack.c.h.b16 %v414
    %v2654 = vunpack.c.l.b16 %v415
    %v2655 = vunpack.c.h.b16 %v415
    %v2656 = vunpack.c.l.b16 %v416
    %v2657 = vunpack.c.h.b16 %v416
    %v2658 = vunpack.c.l.b16 %v417
    %v2659 = vunpack.c.h.b16 %v417
    %v2660 = vunpack.c.l.b16 %v418
    %v2661 = vunpack.c.h.b16 %v418
    %v2662 = vunpack.c.l.b16 %v419
    %v2663 = vunpack.c.h.b16 %v419
    %v2664 = vunpack.c.l.b16 %v420
    %v2665 = vunpack.c.h.b16 %v420
    %v2666 = vunpack.c.l.b16 %v421
    %v2667 = vunpack.c.h.b16 %v421
    %v2668 = vunpack.c.l.b16 %v422
    %v2669 = vunpack.c.h.b16 %v422
    %v2670 = vunpack.c.l.b16 %v423
    %v2671 = vunpack.c.h.b16 %v423
    %v2672 = vunpack.c.l.b16 %v424
    %v2673 = vunpack.c.h.b16 %v424
    %v2674 = vunpack.c.l.b16 %v425
    %v2675 = vunpack.c.h.b16 %v425
    %v2676 = vunpack.c.l.b16 %v426
    %v2677 = vunpack.c.h.b16 %v426
    %v2678 = vunpack.c.l.b16 %v427
    %v2679 = vunpack.c.h.b16 %v427
    %v2680 = vunpack.c.l.b16 %v428
    %v2681 = vunpack.c.h.b16 %v428
    %v2682 = vunpack.c.l.b16 %v429
    %v2683 = vunpack.c.h.b16 %v429
    %v2684 = vunpack.c.l.b16 %v430
    %v2685 = vunpack.c.h.b16 %v430
    %v2686 = vunpack.c.l.b16 %v431
    %v2687 = vunpack.c.h.b16 %v431
    %v2688 = vunpack.c.l.b16 %v432
    %v2689 = vunpack.c.h.b16 %v432
    %v2690 = vunpack.c.l.b16 %v433
    %v2691 = vunpack.c.h.b16 %v433
    %v2692 = vunpack.c.l.b16 %v434
    %v2693 = vunpack.c.h.b16 %v434
    %v2694 = vunpack.c.l.b16 %v435
    %v2695 = vunpack.c.h.b16 %v435
    %v2696 = vunpack.c.l.b16 %v436
    %v2697 = vunpack.c.h.b16 %v436
    %v2698 = vunpack.c.l.b16 %v437
    %v2699 = vunpack.c.h.b16 %v437
    %v2700 = vunpack.c.l.b16 %v438
    %v2701 = vunpack.c.h.b16 %v438
    %v2702 = vunpack.c.l.b16 %v439
    %v2703 = vunpack.c.h.b16 %v439
    %v2704 = vunpack.c.l.b16 %v440
    %v2705 = vunpack.c.h.b16 %v440
    %v2706 = vunpack.c.l.b16 %v441
    %v2707 = vunpack.c.h.b16 %v441
    %v2708 = vunpack.c.l.b16 %v442
    %v2709 = vunpack.c.h.b16 %v442
    %v2710 = vunpack.c.l.b16 %v443
    %v2711 = vunpack.c.h.b16 %v443
    %v2712 = vunpack.c.l.b16 %v444
    %v2713 = vunpack.c.h.b16 %v444
    %v2714 = vunpack.c.l.b16 %v445
    %v2715 = vunpack.c.h.b16 %v445
    %v2716 = vunpack.c.l.b16 %v446
    %v2717 = vunpack.c.h.b16 %v446
    %v2718 = vunpack.c.l.b16 %v447
    %v2719 = vunpack.c.h.b16 %v447
    %v2720 = vunpack.c.l.b16 %v448
    %v2721 = vunpack.c.h.b16 %v448
    %v2722 = vunpack.c.l.b16 %v449
    %v2723 = vunpack.c.h.b16 %v449
    %v2724 = vunpack.c.l.b16 %v450
    %v2725 = vunpack.c.h.b16 %v450
    %v2726 = vunpack.c.l.b16 %v451
    %v2727 = vunpack.c.h.b16 %v451
    %v2728 = vunpack.c.l.b16 %v452
    %v2729 = vunpack.c.h.b16 %v452
    %v2730 = vunpack.c.l.b16 %v453
    %v2731 = vunpack.c.h.b16 %v453
    %v2732 = vunpack.c.l.b16 %v454
    %v2733 = vunpack.c.h.b16 %v454
    %v2734 = vunpack.c.l.b16 %v455
    %v2735 = vunpack.c.h.b16 %v455
    %v2736 = vunpack.c.l.b16 %v456
    %v2737 = vunpack.c.h.b16 %v456
    %v2738 = vunpack.c.l.b16 %v457
    %v2739 = vunpack.c.h.b16 %v457
    %v2740 = vunpack.c.l.b16 %v458
    %v2741 = vunpack.c.h.b16 %v458
    %v2742 = vunpack.c.l.b16 %v459
    %v2743 = vunpack.c.h.b16 %v459
    %v2744 = vunpack.c.l.b16 %v460
    %v2745 = vunpack.c.h.b16 %v460
    %v2746 = vunpack.c.l.b16 %v461
    %v2747 = vunpack.c.h.b16 %v461
    %v2748 = vunpack.c.l.b16 %v462
    %v2749 = vunpack.c.h.b16 %v462
    %v2750 = vunpack.c.l.b16 %v463
    %v2751 = vunpack.c.h.b16 %v463
    %v2752 = vunpack.c.l.b16 %v464
    %v2753 = vunpack.c.h.b16 %v464
    %v2754 = vunpack.c.l.b16 %v465
    %v2755 = vunpack.c.h.b16 %v465
    %v2756 = vunpack.c.l.b16 %v466
    %v2757 = vunpack.c.h.b16 %v466
    %v2758 = vunpack.c.l.b16 %v467
    %v2759 = vunpack.c.h.b16 %v467
    %v2760 = vunpack.c.l.b16 %v468
    %v2761 = vunpack.c.h.b16 %v468
    %v2762 = vunpack.c.l.b16 %v469
    %v2763 = vunpack.c.h.b16 %v469
    %v2764 = vunpack.c.l.b16 %v470
    %v2765 = vunpack.c.h.b16 %v470
    %v2766 = vunpack.c.l.b16 %v471
    %v2767 = vunpack.c.h.b16 %v471
    %v2768 = vunpack.c.l.b16 %v472
    %v2769 = vunpack.c.h.b16 %v472
    %v2770 = vunpack.c.l.b16 %v473
    %v2771 = vunpack.c.h.b16 %v473
    %v2772 = vunpack.c.l.b16 %v474
    %v2773 = vunpack.c.h.b16 %v474
    %v2774 = vunpack.c.l.b16 %v475
    %v2775 = vunpack.c.h.b16 %v475
    %v2776 = vunpack.c.l.b16 %v476
    %v2777 = vunpack.c.h.b16 %v476
    %v2778 = vunpack.c.l.b16 %v477
    %v2779 = vunpack.c.h.b16 %v477
    %v2780 = vunpack.c.l.b16 %v478
    %v2781 = vunpack.c.h.b16 %v478
    %v2782 = vunpack.c.l.b16 %v479
    %v2783 = vunpack.c.h.b16 %v479
    %v2784 = vunpack.c.l.b16 %v480
    %v2785 = vunpack.c.h.b16 %v480
    %v2786 = vunpack.c.l.b16 %v481
    %v2787 = vunpack.c.h.b16 %v481
    %v2788 = vunpack.c.l.b16 %v482
    %v2789 = vunpack.c.h.b16 %v482
    %v2790 = vunpack.c.l.b16 %v483
    %v2791 = vunpack.c.h.b16 %v483
    %v2792 = vunpack.c.l.b16 %v484
    %v2793 = vunpack.c.h.b16 %v484
    %v2794 = vunpack.c.l.b16 %v485
    %v2795 = vunpack.c.h.b16 %v485
    %v2796 = vunpack.c.l.b16 %v486
    %v2797 = vunpack.c.h.b16 %v486
    %v2798 = vunpack.c.l.b16 %v487
    %v2799 = vunpack.c.h.b16 %v487
    %v2800 = vunpack.c.l.b16 %v488
    %v2801 = vunpack.c.h.b16 %v488
    %v2802 = vunpack.c.l.b16 %v489
    %v2803 = vunpack.c.h.b16 %v489
    %v2804 = vunpack.c.l.b16 %v490
    %v2805 = vunpack.c.h.b16 %v490
    %v2806 = vunpack.c.l.b16 %v491
    %v2807 = vunpack.c.h.b16 %v491
    %v2808 = vunpack.c.l.b16 %v492
    %v2809 = vunpack.c.h.b16 %v492
    %v2810 = vunpack.c.l.b16 %v493
    %v2811 = vunpack.c.h.b16 %v493
    %v2812 = vunpack.c.l.b16 %v494
    %v2813 = vunpack.c.h.b16 %v494
    %v2814 = vunpack.c.l.b16 %v495
    %v2815 = vunpack.c.h.b16 %v495
    %v2816 = vunpack.c.l.b16 %v496
    %v2817 = vunpack.c.h.b16 %v496
    %v2818 = vunpack.c.l.b16 %v497
    %v2819 = vunpack.c.h.b16 %v497
    %v2820 = vunpack.c.l.b16 %v498
    %v2821 = vunpack.c.h.b16 %v498
    %v2822 = vunpack.c.l.b16 %v499
    %v2823 = vunpack.c.h.b16 %v499
    %v2824 = vunpack.c.l.b16 %v500
    %v2825 = vunpack.c.h.b16 %v500
    %v2826 = vunpack.c.l.b16 %v501
    %v2827 = vunpack.c.h.b16 %v501
    %v2828 = vunpack.c.l.b16 %v502
    %v2829 = vunpack.c.h.b16 %v502
    %v2830 = vunpack.c.l.b16 %v503
    %v2831 = vunpack.c.h.b16 %v503
    %v2832 = vunpack.c.l.b16 %v504
    %v2833 = vunpack.c.h.b16 %v504
    %v2834 = vunpack.c.l.b16 %v505
    %v2835 = vunpack.c.h.b16 %v505
    %v2836 = vunpack.c.l.b16 %v506
    %v2837 = vunpack.c.h.b16 %v506
    %v2838 = vunpack.c.l.b16 %v507
    %v2839 = vunpack.c.h.b16 %v507
    %v2840 = vunpack.c.l.b16 %v508
    %v2841 = vunpack.c.h.b16 %v508
    %v2842 = vunpack.c.l.b16 %v509
    %v2843 = vunpack.c.h.b16 %v509
    %v2844 = vunpack.c.l.b16 %v510
    %v2845 = vunpack.c.h.b16 %v510
    %v2846 = vunpack.c.l.b16 %v511
    %v2847 = vunpack.c.h.b16 %v511
    %v2848 = vunpack.c.l.b16 %v512
    %v2849 = vunpack.c.h.b16 %v512
    %v2850 = vunpack.c.l.b16 %v513
    %v2851 = vunpack.c.h.b16 %v513
    %v2852 = vunpack.c.l.b16 %v514
    %v2853 = vunpack.c.h.b16 %v514
    %v2854 = vunpack.c.l.b16 %v515
    %v2855 = vunpack.c.h.b16 %v515
    %v2856 = vunpack.c.l.b16 %v516
    %v2857 = vunpack.c.h.b16 %v516
    %v2858 = vunpack.c.l.b16 %v517
    %v2859 = vunpack.c.h.b16 %v517
    %v2860 = vunpack.c.l.b16 %v518
    %v2861 = vunpack.c.h.b16 %v518
    %v2862 = vunpack.c.l.b16 %v519
    %v2863 = vunpack.c.h.b16 %v519
    %v2864 = vunpack.c.l.b16 %v520
    %v2865 = vunpack.c.h.b16 %v520
    %v2866 = vunpack.c.l.b16 %v521
    %v2867 = vunpack.c.h.b16 %v521
    %v2868 = vunpack.c.l.b16 %v522
    %v2869 = vunpack.c.h.b16 %v522
    %v2870 = vunpack.c.l.b16 %v523
    %v2871 = vunpack.c.h.b16 %v523
    %v2872 = vunpack.c.l.b16 %v524
    %v2873 = vunpack.c.h.b16 %v524
    %v2874 = vunpack.c.l.b16 %v525
    %v2875 = vunpack.c.h.b16 %v525
    %v2876 = vunpack.c.l.b16 %v526
    %v2877 = vunpack.c.h.b16 %v526
    %v2878 = vunpack.c.l.b16 %v527
    %v2879 = vunpack.c.h.b16 %v527
    %v2880 = vunpack.c.l.b16 %v528
    %v2881 = vunpack.c.h.b16 %v528
    %v2882 = vunpack.c.l.b16 %v529
    %v2883 = vunpack.c.h.b16 %v529
    %v2884 = vunpack.c.l.b16 %v530
    %v2885 = vunpack.c.h.b16 %v530
    %v2886 = vunpack.c.l.b16 %v531
    %v2887 = vunpack.c.h.b16 %v531
    %v2888 = vunpack.c.l.b16 %v532
    %v2889 = vunpack.c.h.b16 %v532
    %v2890 = vunpack.c.l.b16 %v533
    %v2891 = vunpack.c.h.b16 %v533
    %v2892 = vunpack.c.l.b16 %v534
    %v2893 = vunpack.c.h.b16 %v534
    %v2894 = vunpack.c.l.b16 %v535
    %v2895 = vunpack.c.h.b16 %v535
    %v2896 = vunpack.c.l.b16 %v536
    %v2897 = vunpack.c.h.b16 %v536
    %v2898 = vunpack.c.l.b16 %v537
    %v2899 = vunpack.c.h.b16 %v537
    %v2900 = vunpack.c.l.b16 %v538
    %v2901 = vunpack.c.h.b16 %v538
    %v2902 = vunpack.c.l.b16 %v539
    %v2903 = vunpack.c.h.b16 %v539
    %v2904 = vunpack.c.l.b16 %v540
    %v2905 = vunpack.c.h.b16 %v540
    %v2906 = vunpack.c.l.b16 %v541
    %v2907 = vunpack.c.h.b16 %v541
    %v2908 = vunpack.c.l.b16 %v542
    %v2909 = vunpack.c.h.b16 %v542
    %v2910 = vunpack.c.l.b16 %v543
    %v2911 = vunpack.c.h.b16 %v543
    %v2912 = vunpack.c.l.b16 %v544
    %v2913 = vunpack.c.h.b16 %v544
    %v2914 = vunpack.c.l.b16 %v545
    %v2915 = vunpack.c.h.b16 %v545
    %v2916 = vunpack.c.l.b16 %v546
    %v2917 = vunpack.c.h.b16 %v546
    %v2918 = vunpack.c.l.b16 %v547
    %v2919 = vunpack.c.h.b16 %v547
    %v2920 = vunpack.c.l.b16 %v548
    %v2921 = vunpack.c.h.b16 %v548
    %v2922 = vunpack.c.l.b16 %v549
    %v2923 = vunpack.c.h.b16 %v549
    %v2924 = vunpack.c.l.b16 %v550
    %v2925 = vunpack.c.h.b16 %v550
    %v2926 = vunpack.c.l.b16 %v551
    %v2927 = vunpack.c.h.b16 %v551
    %v2928 = vunpack.c.l.b16 %v552
    %v2929 = vunpack.c.h.b16 %v552
    %v2930 = vunpack.c.l.b16 %v553
    %v2931 = vunpack.c.h.b16 %v553
    %v2932 = vunpack.c.l.b16 %v554
    %v2933 = vunpack.c.h.b16 %v554
    %v2934 = vunpack.c.l.b16 %v555
    %v2935 = vunpack.c.h.b16 %v555
    %v2936 = vunpack.c.l.b16 %v556
    %v2937 = vunpack.c.h.b16 %v556
    %v2938 = vunpack.c.l.b16 %v557
    %v2939 = vunpack.c.h.b16 %v557
    %v2940 = vunpack.c.l.b16 %v558
    %v2941 = vunpack.c.h.b16 %v558
    %v2942 = vunpack.c.l.b16 %v559
    %v2943 = vunpack.c.h.b16 %v559
    %v2944 = vunpack.c.l.b16 %v560
    %v2945 = vunpack.c.h.b16 %v560
    %v2946 = vunpack.c.l.b16 %v561
    %v2947 = vunpack.c.h.b16 %v561
    %v2948 = vunpack.c.l.b16 %v562
    %v2949 = vunpack.c.h.b16 %v562
    %v2950 = vunpack.c.l.b16 %v563
    %v2951 = vunpack.c.h.b16 %v563
    %v2952 = vunpack.c.l.b16 %v564
    %v2953 = vunpack.c.h.b16 %v564
    %v2954 = vunpack.c.l.b16 %v565
    %v2955 = vunpack.c.h.b16 %v565
    %v2956 = vunpack.c.l.b16 %v566
    %v2957 = vunpack.c.h.b16 %v566
    %v2958 = vunpack.c.l.b16 %v567
    %v2959 = vunpack.c.h.b16 %v567
    %v2960 = vunpack.c.l.b16 %v568
    %v2961 = vunpack.c.h.b16 %v568
    %v2962 = vunpack.c.l.b16 %v569
    %v2963 = vunpack.c.h.b16 %v569
    %v2964 = vunpack.c.l.b16 %v570
    %v2965 = vunpack.c.h.b16 %v570
    %v2966 = vunpack.c.l.b16 %v571
    %v2967 = vunpack.c.h.b16 %v571
    %v2968 = vunpack.c.l.b16 %v572
    %v2969 = vunpack.c.h.b16 %v572
    %v2970 = vunpack.c.l.b16 %v573
    %v2971 = vunpack.c.h.b16 %v573
    %v2972 = vunpack.c.l.b16 %v574
    %v2973 = vunpack.c.h.b16 %v574
    %v2974 = vunpack.c.l.b16 %v575
    %v2975 = vunpack.c.h.b16 %v575
    %v2976 = vunpack.c.l.b16 %v576
    %v2977 = vunpack.c.h.b16 %v576
    %v2978 = vunpack.c.l.b16 %v577
    %v2979 = vunpack.c.h.b16 %v577
    %v2980 = vunpack.c.l.b16 %v578
    %v2981 = vunpack.c.h.b16 %v578
    %v2982 = vunpack.c.l.b16 %v579
    %v2983 = vunpack.c.h.b16 %v579
    %v2984 = vunpack.c.l.b16 %v580
    %v2985 = vunpack.c.h.b16 %v580
    %v2986 = vunpack.c.l.b16 %v581
    %v2987 = vunpack.c.h.b16 %v581
    %v2988 = vunpack.c.l.b16 %v582
    %v2989 = vunpack.c.h.b16 %v582
    %v2990 = vunpack.c.l.b16 %v583
    %v2991 = vunpack.c.h.b16 %v583
    %v2992 = vunpack.c.l.b16 %v584
    %v2993 = vunpack.c.h.b16 %v584
    %v2994 = vunpack.c.l.b16 %v585
    %v2995 = vunpack.c.h.b16 %v585
    %v2996 = vunpack.c.l.b16 %v586
    %v2997 = vunpack.c.h.b16 %v586
    %v2998 = vunpack.c.l.b16 %v587
    %v2999 = vunpack.c.h.b16 %v587
    %v3000 = vunpack.c.l.b16 %v588
    %v3001 = vunpack.c.h.b16 %v588
    %v3002 = vunpack.c.l.b16 %v589
    %v3003 = vunpack.c.h.b16 %v589
    %v3004 = vunpack.c.l.b16 %v590
    %v3005 = vunpack.c.h.b16 %v590
    %v3006 = vunpack.c.l.b16 %v591
    %v3007 = vunpack.c.h.b16 %v591
    %v3008 = vunpack.c.l.b16 %v592
    %v3009 = vunpack.c.h.b16 %v592
    %v3010 = vunpack.c.l.b16 %v593
    %v3011 = vunpack.c.h.b16 %v593
    %v3012 = vunpack.c.l.b16 %v594
    %v3013 = vunpack.c.h.b16 %v594
    %v3014 = vunpack.c.l.b16 %v595
    %v3015 = vunpack.c.h.b16 %v595
    %v3016 = vunpack.c.l.b16 %v596
    %v3017 = vunpack.c.h.b16 %v596
    %v3018 = vunpack.c.l.b16 %v597
    %v3019 = vunpack.c.h.b16 %v597
    %v3020 = vunpack.c.l.b16 %v598
    %v3021 = vunpack.c.h.b16 %v598
    %v3022 = vunpack.c.l.b16 %v599
    %v3023 = vunpack.c.h.b16 %v599
    %v3024 = vunpack.c.l.b16 %v600
    %v3025 = vunpack.c.h.b16 %v600
    %v3026 = vunpack.c.l.b16 %v601
    %v3027 = vunpack.c.h.b16 %v601
    %v3028 = vunpack.c.l.b16 %v602
    %v3029 = vunpack.c.h.b16 %v602
    %v3030 = vunpack.c.l.b16 %v603
    %v3031 = vunpack.c.h.b16 %v603
    %v3032 = vunpack.c.l.b16 %v604
    %v3033 = vunpack.c.h.b16 %v604
    %v3034 = vunpack.c.l.b16 %v605
    %v3035 = vunpack.c.h.b16 %v605
    %v3036 = vunpack.c.l.b16 %v606
    %v3037 = vunpack.c.h.b16 %v606
    %v3038 = vunpack.c.l.b16 %v607
    %v3039 = vunpack.c.h.b16 %v607
    %v3040 = vunpack.c.l.b16 %v608
    %v3041 = vunpack.c.h.b16 %v608
    %v3042 = vunpack.c.l.b16 %v609
    %v3043 = vunpack.c.h.b16 %v609
    %v3044 = vunpack.c.l.b16 %v610
    %v3045 = vunpack.c.h.b16 %v610
    %v3046 = vunpack.c.l.b16 %v611
    %v3047 = vunpack.c.h.b16 %v611
    %v3048 = vunpack.c.l.b16 %v612
    %v3049 = vunpack.c.h.b16 %v612
    %v3050 = vunpack.c.l.b16 %v613
    %v3051 = vunpack.c.h.b16 %v613
    %v3052 = vunpack.c.l.b16 %v614
    %v3053 = vunpack.c.h.b16 %v614
    %v3054 = vunpack.c.l.b16 %v615
    %v3055 = vunpack.c.h.b16 %v615
    %v3056 = vunpack.c.l.b16 %v616
    %v3057 = vunpack.c.h.b16 %v616
    %v3058 = vunpack.c.l.b16 %v617
    %v3059 = vunpack.c.h.b16 %v617
    %v3060 = vunpack.c.l.b16 %v618
    %v3061 = vunpack.c.h.b16 %v618
    %v3062 = vunpack.c.l.b16 %v619
    %v3063 = vunpack.c.h.b16 %v619
    %v3064 = vunpack.c.l.b16 %v620
    %v3065 = vunpack.c.h.b16 %v620
    %v3066 = vunpack.c.l.b16 %v621
    %v3067 = vunpack.c.h.b16 %v621
    %v3068 = vunpack.c.l.b16 %v622
    %v3069 = vunpack.c.h.b16 %v622
    %v3070 = vunpack.c.l.b16 %v623
    %v3071 = vunpack.c.h.b16 %v623
    %v3072 = vunpack.c.l.b16 %v624
    %v3073 = vunpack.c.h.b16 %v624
    %v3074 = vunpack.c.l.b16 %v625
    %v3075 = vunpack.c.h.b16 %v625
    %v3076 = vunpack.c.l.b16 %v626
    %v3077 = vunpack.c.h.b16 %v626
    %v3078 = vunpack.c.l.b16 %v627
    %v3079 = vunpack.c.h.b16 %v627
    %v3080 = vunpack.c.l.b16 %v628
    %v3081 = vunpack.c.h.b16 %v628
    %v3082 = vunpack.c.l.b16 %v629
    %v3083 = vunpack.c.h.b16 %v629
    %v3084 = vunpack.c.l.b16 %v630
    %v3085 = vunpack.c.h.b16 %v630
    %v3086 = vunpack.c.l.b16 %v631
    %v3087 = vunpack.c.h.b16 %v631
    %v3088 = vunpack.c.l.b16 %v632
    %v3089 = vunpack.c.h.b16 %v632
    %v3090 = vunpack.c.l.b16 %v633
    %v3091 = vunpack.c.h.b16 %v633
    %v3092 = vunpack.c.l.b16 %v634
    %v3093 = vunpack.c.h.b16 %v634
    %v3094 = vunpack.c.l.b16 %v635
    %v3095 = vunpack.c.h.b16 %v635
    %v3096 = vunpack.c.l.b16 %v636
    %v3097 = vunpack.c.h.b16 %v636
    %v3098 = vunpack.c.l.b16 %v637
    %v3099 = vunpack.c.h.b16 %v637
    %v3100 = vunpack.c.l.b16 %v638
    %v3101 = vunpack.c.h.b16 %v638
    %v3102 = vunpack.c.l.b16 %v639
    %v3103 = vunpack.c.h.b16 %v639
    %v3104 = vunpack.c.l.b16 %v640
    %v3105 = vunpack.c.h.b16 %v640
    %v3106 = vunpack.c.l.b16 %v641
    %v3107 = vunpack.c.h.b16 %v641
    %v3108 = vunpack.c.l.b16 %v642
    %v3109 = vunpack.c.h.b16 %v642
    %v3110 = vunpack.c.l.b16 %v643
    %v3111 = vunpack.c.h.b16 %v643
    %v3112 = vunpack.c.l.b16 %v644
    %v3113 = vunpack.c.h.b16 %v644
    %v3114 = vunpack.c.l.b16 %v645
    %v3115 = vunpack.c.h.b16 %v645
    %v3116 = vunpack.c.l.b16 %v646
    %v3117 = vunpack.c.h.b16 %v646
    %v3118 = vunpack.c.l.b16 %v647
    %v3119 = vunpack.c.h.b16 %v647
    %v3120 = vunpack.c.l.b16 %v648
    %v3121 = vunpack.c.h.b16 %v648
    %v3122 = vunpack.c.l.b16 %v649
    %v3123 = vunpack.c.h.b16 %v649
    %v3124 = vunpack.c.l.b16 %v650
    %v3125 = vunpack.c.h.b16 %v650
    %v3126 = vunpack.c.l.b16 %v651
    %v3127 = vunpack.c.h.b16 %v651
    %v3128 = vunpack.c.l.b16 %v652
    %v3129 = vunpack.c.h.b16 %v652
    %v3130 = vunpack.c.l.b16 %v653
    %v3131 = vunpack.c.h.b16 %v653
    %v3132 = vunpack.c.l.b16 %v654
    %v3133 = vunpack.c.h.b16 %v654
    %v3134 = vunpack.c.l.b16 %v655
    %v3135 = vunpack.c.h.b16 %v655
    %v3136 = vunpack.c.l.b16 %v656
    %v3137 = vunpack.c.h.b16 %v656
    %v3138 = vunpack.c.l.b16 %v657
    %v3139 = vunpack.c.h.b16 %v657
    %v3140 = vunpack.c.l.b16 %v658
    %v3141 = vunpack.c.h.b16 %v658
    %v3142 = vunpack.c.l.b16 %v659
    %v3143 = vunpack.c.h.b16 %v659
    %v3144 = vunpack.c.l.b16 %v660
    %v3145 = vunpack.c.h.b16 %v660
    %v3146 = vunpack.c.l.b16 %v661
    %v3147 = vunpack.c.h.b16 %v661
    %v3148 = vunpack.c.l.b16 %v662
    %v3149 = vunpack.c.h.b16 %v662
    %v3150 = vunpack.c.l.b16 %v663
    %v3151 = vunpack.c.h.b16 %v663
    %v3152 = vunpack.c.l.b16 %v664
    %v3153 = vunpack.c.h.b16 %v664
    %v3154 = vunpack.c.l.b16 %v665
    %v3155 = vunpack.c.h.b16 %v665
    %v3156 = vunpack.c.l.b16 %v666
    %v3157 = vunpack.c.h.b16 %v666
    %v3158 = vunpack.c.l.b16 %v667
    %v3159 = vunpack.c.h.b16 %v667
    %v3160 = vunpack.c.l.b16 %v668
    %v3161 = vunpack.c.h.b16 %v668
    %v3162 = vunpack.c.l.b16 %v669
    %v3163 = vunpack.c.h.b16 %v669
    %v3164 = vunpack.c.l.b16 %v670
    %v3165 = vunpack.c.h.b16 %v670
    %v3166 = vunpack.c.l.b16 %v671
    %v3167 = vunpack.c.h.b16 %v671
    %v3168 = vunpack.c.l.b16 %v672
    %v3169 = vunpack.c.h.b16 %v672
    %v3170 = vunpack.c.l.b16 %v673
    %v3171 = vunpack.c.h.b16 %v673
    %v3172 = vunpack.c.l.b16 %v674
    %v3173 = vunpack.c.h.b16 %v674
    %v3174 = vunpack.c.l.b16 %v675
    %v3175 = vunpack.c.h.b16 %v675
    %v3176 = vunpack.c.l.b16 %v676
    %v3177 = vunpack.c.h.b16 %v676
    %v3178 = vunpack.c.l.b16 %v677
    %v3179 = vunpack.c.h.b16 %v677
    %v3180 = vunpack.c.l.b16 %v678
    %v3181 = vunpack.c.h.b16 %v678
    %v3182 = vunpack.c.l.b16 %v679
    %v3183 = vunpack.c.h.b16 %v679
    %v3184 = vunpack.c.l.b16 %v680
    %v3185 = vunpack.c.h.b16 %v680
    %v3186 = vunpack.c.l.b16 %v681
    %v3187 = vunpack.c.h.b16 %v681
    %v3188 = vunpack.c.l.b16 %v682
    %v3189 = vunpack.c.h.b16 %v682
    %v3190 = vunpack.c.l.b16 %v683
    %v3191 = vunpack.c.h.b16 %v683
    %v3192 = vunpack.c.l.b16 %v684
    %v3193 = vunpack.c.h.b16 %v684
    %v3194 = vunpack.c.l.b16 %v685
    %v3195 = vunpack.c.h.b16 %v685
    %v3196 = vunpack.c.l.b16 %v686
    %v3197 = vunpack.c.h.b16 %v686
    %v3198 = vunpack.c.l.b16 %v687
    %v3199 = vunpack.c.h.b16 %v687
    %v3200 = vunpack.c.l.b16 %v688
    %v3201 = vunpack.c.h.b16 %v688
    %v3202 = vunpack.c.l.b16 %v689
    %v3203 = vunpack.c.h.b16 %v689
    %v3204 = vunpack.c.l.b16 %v690
    %v3205 = vunpack.c.h.b16 %v690
    %v3206 = vunpack.c.l.b16 %v691
    %v3207 = vunpack.c.h.b16 %v691
    %v3208 = vunpack.c.l.b16 %v692
    %v3209 = vunpack.c.h.b16 %v692
    %v3210 = vunpack.c.l.b16 %v693
    %v3211 = vunpack.c.h.b16 %v693
    %v3212 = vunpack.c.l.b16 %v694
    %v3213 = vunpack.c.h.b16 %v694
    %v3214 = vunpack.c.l.b16 %v695
    %v3215 = vunpack.c.h.b16 %v695
    %v3216 = vunpack.c.l.b16 %v696
    %v3217 = vunpack.c.h.b16 %v696
    %v3218 = vunpack.c.l.b16 %v697
    %v3219 = vunpack.c.h.b16 %v697
    %v3220 = vunpack.c.l.b16 %v698
    %v3221 = vunpack.c.h.b16 %v698
    %v3222 = vunpack.c.l.b16 %v699
    %v3223 = vunpack.c.h.b16 %v699
    %v3224 = vunpack.c.l.b16 %v700
    %v3225 = vunpack.c.h.b16 %v700
    %v3226 = vunpack.c.l.b16 %v701
    %v3227 = vunpack.c.h.b16 %v701
    %v3228 = vunpack.c.l.b16 %v702
    %v3229 = vunpack.c.h.b16 %v702
    %v3230 = vunpack.c.l.b16 %v703
    %v3231 = vunpack.c.h.b16 %v703
    %v3232 = vunpack.c.l.b16 %v704
    %v3233 = vunpack.c.h.b16 %v704
    %v3234 = vunpack.c.l.b16 %v705
    %v3235 = vunpack.c.h.b16 %v705
    %v3236 = vunpack.c.l.b16 %v706
    %v3237 = vunpack.c.h.b16 %v706
    %v3238 = vunpack.c.l.b16 %v707
    %v3239 = vunpack.c.h.b16 %v707
    %v3240 = vunpack.c.l.b16 %v708
    %v3241 = vunpack.c.h.b16 %v708
    %v3242 = vunpack.c.l.b16 %v709
    %v3243 = vunpack.c.h.b16 %v709
    %v3244 = vunpack.c.l.b16 %v710
    %v3245 = vunpack.c.h.b16 %v710
    %v3246 = vunpack.c.l.b16 %v711
    %v3247 = vunpack.c.h.b16 %v711
    %v3248 = vunpack.c.l.b16 %v712
    %v3249 = vunpack.c.h.b16 %v712
    %v3250 = vunpack.c.l.b16 %v713
    %v3251 = vunpack.c.h.b16 %v713
    %v3252 = vunpack.c.l.b16 %v714
    %v3253 = vunpack.c.h.b16 %v714
    %v3254 = vunpack.c.l.b16 %v715
    %v3255 = vunpack.c.h.b16 %v715
    %v3256 = vunpack.c.l.b16 %v716
    %v3257 = vunpack.c.h.b16 %v716
    %v3258 = vunpack.c.l.b16 %v717
    %v3259 = vunpack.c.h.b16 %v717
    %v3260 = vunpack.c.l.b16 %v718
    %v3261 = vunpack.c.h.b16 %v718
    %v3262 = vunpack.c.l.b16 %v719
    %v3263 = vunpack.c.h.b16 %v719
    %v3264 = vunpack.c.l.b16 %v720
    %v3265 = vunpack.c.h.b16 %v720
    %v3266 = vunpack.c.l.b16 %v721
    %v3267 = vunpack.c.h.b16 %v721
    %v3268 = vunpack.c.l.b16 %v722
    %v3269 = vunpack.c.h.b16 %v722
    %v3270 = vunpack.c.l.b16 %v723
    %v3271 = vunpack.c.h.b16 %v723
    %v3272 = vunpack.c.l.b16 %v724
    %v3273 = vunpack.c.h.b16 %v724
    %v3274 = vunpack.c.l.b16 %v725
    %v3275 = vunpack.c.h.b16 %v725
    %v3276 = vunpack.c.l.b16 %v726
    %v3277 = vunpack.c.h.b16 %v726
    %v3278 = vunpack.c.l.b16 %v727
    %v3279 = vunpack.c.h.b16 %v727
    %v3280 = vunpack.c.l.b16 %v728
    %v3281 = vunpack.c.h.b16 %v728
    %v3282 = vunpack.c.l.b16 %v729
    %v3283 = vunpack.c.h.b16 %v729
    %v3284 = vunpack.c.l.b16 %v730
    %v3285 = vunpack.c.h.b16 %v730
    %v3286 = vunpack.c.l.b16 %v731
    %v3287 = vunpack.c.h.b16 %v731
    %v3288 = vunpack.c.l.b16 %v732
    %v3289 = vunpack.c.h.b16 %v732
    %v3290 = vunpack.c.l.b16 %v733
    %v3291 = vunpack.c.h.b16 %v733
    %v3292 = vunpack.c.l.b16 %v734
    %v3293 = vunpack.c.h.b16 %v734
    %v3294 = vunpack.c.l.b16 %v735
    %v3295 = vunpack.c.h.b16 %v735
    %v3296 = vunpack.c.l.b16 %v736
    %v3297 = vunpack.c.h.b16 %v736
    %v3298 = vunpack.c.l.b16 %v737
    %v3299 = vunpack.c.h.b16 %v737
    %v3300 = vunpack.c.l.b16 %v738
    %v3301 = vunpack.c.h.b16 %v738
    %v3302 = vunpack.c.l.b16 %v739
    %v3303 = vunpack.c.h.b16 %v739
    %v3304 = vunpack.c.l.b16 %v740
    %v3305 = vunpack.c.h.b16 %v740
    %v3306 = vunpack.c.l.b16 %v741
    %v3307 = vunpack.c.h.b16 %v741
    %v3308 = vunpack.c.l.b16 %v742
    %v3309 = vunpack.c.h.b16 %v742
    %v3310 = vunpack.c.l.b16 %v743
    %v3311 = vunpack.c.h.b16 %v743
    %v3312 = vunpack.c.l.b16 %v744
    %v3313 = vunpack.c.h.b16 %v744
    %v3314 = vunpack.c.l.b16 %v745
    %v3315 = vunpack.c.h.b16 %v745
    %v3316 = vunpack.c.l.b16 %v746
    %v3317 = vunpack.c.h.b16 %v746
    %v3318 = vunpack.c.l.b16 %v747
    %v3319 = vunpack.c.h.b16 %v747
    %v3320 = vunpack.c.l.b16 %v748
    %v3321 = vunpack.c.h.b16 %v748
    %v3322 = vunpack.c.l.b16 %v749
    %v3323 = vunpack.c.h.b16 %v749
    %v3324 = vunpack.c.l.b16 %v750
    %v3325 = vunpack.c.h.b16 %v750
    %v3326 = vunpack.c.l.b16 %v751
    %v3327 = vunpack.c.h.b16 %v751
    %v3328 = vunpack.c.l.b16 %v752
    %v3329 = vunpack.c.h.b16 %v752
    %v3330 = vunpack.c.l.b16 %v753
    %v3331 = vunpack.c.h.b16 %v753
    %v3332 = vunpack.c.l.b16 %v754
    %v3333 = vunpack.c.h.b16 %v754
    %v3334 = vunpack.c.l.b16 %v755
    %v3335 = vunpack.c.h.b16 %v755
    %v3336 = vunpack.c.l.b16 %v756
    %v3337 = vunpack.c.h.b16 %v756
    %v3338 = vunpack.c.l.b16 %v757
    %v3339 = vunpack.c.h.b16 %v757
    %v3340 = vunpack.c.l.b16 %v758
    %v3341 = vunpack.c.h.b16 %v758
    %v3342 = vunpack.c.l.b16 %v759
    %v3343 = vunpack.c.h.b16 %v759
    %v3344 = vunpack.c.l.b16 %v760
    %v3345 = vunpack.c.h.b16 %v760
    %v3346 = vunpack.c.l.b16 %v761
    %v3347 = vunpack.c.h.b16 %v761
    %v3348 = vunpack.c.l.b16 %v762
    %v3349 = vunpack.c.h.b16 %v762
    %v3350 = vunpack.c.l.b16 %v763
    %v3351 = vunpack.c.h.b16 %v763
    %v3352 = vunpack.c.l.b16 %v764
    %v3353 = vunpack.c.h.b16 %v764
    %v3354 = vunpack.c.l.b16 %v765
    %v3355 = vunpack.c.h.b16 %v765
    %v3356 = vunpack.c.l.b16 %v766
    %v3357 = vunpack.c.h.b16 %v766
    %v3358 = vunpack.c.l.b16 %v767
    %v3359 = vunpack.c.h.b16 %v767
    %v3360 = vunpack.c.l.b16 %v768
    %v3361 = vunpack.c.h.b16 %v768
    %v3362 = vunpack.c.l.b16 %v769
    %v3363 = vunpack.c.h.b16 %v769
    %v3364 = vunpack.c.l.b16 %v770
    %v3365 = vunpack.c.h.b16 %v770
    %v3366 = vunpack.c.l.b16 %v771
    %v3367 = vunpack.c.h.b16 %v771
    %v3368 = vunpack.c.l.b16 %v772
    %v3369 = vunpack.c.h.b16 %v772
    %v3370 = vunpack.c.l.b16 %v773
    %v3371 = vunpack.c.h.b16 %v773
    %v3372 = vunpack.c.l.b16 %v774
    %v3373 = vunpack.c.h.b16 %v774
    %v3374 = vunpack.c.l.b16 %v775
    %v3375 = vunpack.c.h.b16 %v775
    %v3376 = vunpack.c.l.b16 %v776
    %v3377 = vunpack.c.h.b16 %v776
    %v3378 = vunpack.c.l.b16 %v777
    %v3379 = vunpack.c.h.b16 %v777
    %v3380 = vunpack.c.l.b16 %v778
    %v3381 = vunpack.c.h.b16 %v778
    %v3382 = vunpack.c.l.b16 %v779
    %v3383 = vunpack.c.h.b16 %v779
    %v3384 = vunpack.c.l.b16 %v780
    %v3385 = vunpack.c.h.b16 %v780
    %v3386 = vunpack.c.l.b16 %v781
    %v3387 = vunpack.c.h.b16 %v781
    %v3388 = vunpack.c.l.b16 %v782
    %v3389 = vunpack.c.h.b16 %v782
    %v3390 = vunpack.c.l.b16 %v783
    %v3391 = vunpack.c.h.b16 %v783
    %v3392 = vunpack.c.l.b16 %v784
    %v3393 = vunpack.c.h.b16 %v784
    %v3394 = vunpack.c.l.b16 %v785
    %v3395 = vunpack.c.h.b16 %v785
    %v3396 = vunpack.c.l.b16 %v786
    %v3397 = vunpack.c.h.b16 %v786
    %v3398 = vunpack.c.l.b16 %v787
    %v3399 = vunpack.c.h.b16 %v787
    %v3400 = vunpack.c.l.b16 %v788
    %v3401 = vunpack.c.h.b16 %v788
    %v3402 = vunpack.c.l.b16 %v789
    %v3403 = vunpack.c.h.b16 %v789
    %v3404 = vunpack.c.l.b16 %v790
    %v3405 = vunpack.c.h.b16 %v790
    %v3406 = vunpack.c.l.b16 %v791
    %v3407 = vunpack.c.h.b16 %v791
    %v3408 = vunpack.c.l.b16 %v792
    %v3409 = vunpack.c.h.b16 %v792
    %v3410 = vunpack.c.l.b16 %v793
    %v3411 = vunpack.c.h.b16 %v793
    %v3412 = vunpack.c.l.b16 %v794
    %v3413 = vunpack.c.h.b16 %v794
    %v3414 = vunpack.c.l.b16 %v795
    %v3415 = vunpack.c.h.b16 %v795
    %v3416 = vunpack.c.l.b16 %v796
    %v3417 = vunpack.c.h.b16 %v796
    %v3418 = vunpack.c.l.b16 %v797
    %v3419 = vunpack.c.h.b16 %v797
    %v3420 = vunpack.c.l.b16 %v798
    %v3421 = vunpack.c.h.b16 %v798
    %v3422 = vunpack.c.l.b16 %v799
    %v3423 = vunpack.c.h.b16 %v799
    %v3424 = vunpack.c.l.b16 %v800
    %v3425 = vunpack.c.h.b16 %v800
    %v3426 = vunpack.c.l.b16 %v801
    %v3427 = vunpack.c.h.b16 %v801
    %v3428 = vunpack.c.l.b16 %v802
    %v3429 = vunpack.c.h.b16 %v802
    %v3430 = vunpack.c.l.b16 %v803
    %v3431 = vunpack.c.h.b16 %v803
    %v3432 = vunpack.c.l.b16 %v804
    %v3433 = vunpack.c.h.b16 %v804
    %v3434 = vunpack.c.l.b16 %v805
    %v3435 = vunpack.c.h.b16 %v805
    %v3436 = vunpack.c.l.b16 %v806
    %v3437 = vunpack.c.h.b16 %v806
    %v3438 = vunpack.c.l.b16 %v807
    %v3439 = vunpack.c.h.b16 %v807
    %v3440 = vunpack.c.l.b16 %v808
    %v3441 = vunpack.c.h.b16 %v808
    %v3442 = vunpack.c.l.b16 %v809
    %v3443 = vunpack.c.h.b16 %v809
    %v3444 = vunpack.c.l.b16 %v810
    %v3445 = vunpack.c.h.b16 %v810
    %v3446 = vunpack.c.l.b16 %v811
    %v3447 = vunpack.c.h.b16 %v811
    %v3448 = vunpack.c.l.b16 %v812
    %v3449 = vunpack.c.h.b16 %v812
    %v3450 = vunpack.c.l.b16 %v813
    %v3451 = vunpack.c.h.b16 %v813
    %v3452 = vunpack.c.l.b16 %v814
    %v3453 = vunpack.c.h.b16 %v814
    %v3454 = vunpack.c.l.b16 %v815
    %v3455 = vunpack.c.h.b16 %v815
    %v3456 = vunpack.c.l.b16 %v816
    %v3457 = vunpack.c.h.b16 %v816
    %v3458 = vunpack.c.l.b16 %v817
    %v3459 = vunpack.c.h.b16 %v817
    %v3460 = vunpack.c.l.b16 %v818
    %v3461 = vunpack.c.h.b16 %v818
    %v3462 = vunpack.c.l.b16 %v819
    %v3463 = vunpack.c.h.b16 %v819
    %v3464 = vunpack.c.l.b16 %v820
    %v3465 = vunpack.c.h.b16 %v820
    %v3466 = vunpack.c.l.b16 %v821
    %v3467 = vunpack.c.h.b16 %v821
    %v3468 = vunpack.c.l.b16 %v822
    %v3469 = vunpack.c.h.b16 %v822
    %v3470 = vunpack.c.l.b16 %v823
    %v3471 = vunpack.c.h.b16 %v823
    %v3472 = vunpack.c.l.b16 %v824
    %v3473 = vunpack.c.h.b16 %v824
    %v3474 = vunpack.c.l.b16 %v825
    %v3475 = vunpack.c.h.b16 %v825
    %v3476 = vunpack.c.l.b16 %v826
    %v3477 = vunpack.c.h.b16 %v826
    %v3478 = vunpack.c.l.b16 %v827
    %v3479 = vunpack.c.h.b16 %v827
    %v3480 = vunpack.c.l.b16 %v828
    %v3481 = vunpack.c.h.b16 %v828
    %v3482 = vunpack.c.l.b16 %v829
    %v3483 = vunpack.c.h.b16 %v829
    %v3484 = vunpack.c.l.b16 %v830
    %v3485 = vunpack.c.h.b16 %v830
    %v3486 = vunpack.c.l.b16 %v831
    %v3487 = vunpack.c.h.b16 %v831
    %v3488 = vunpack.c.l.b16 %v832
    %v3489 = vunpack.c.h.b16 %v832
    %v3490 = vunpack.c.l.b16 %v833
    %v3491 = vunpack.c.h.b16 %v833
    %v3492 = vunpack.c.l.b16 %v834
    %v3493 = vunpack.c.h.b16 %v834
    %v3494 = vunpack.c.l.b16 %v835
    %v3495 = vunpack.c.h.b16 %v835
    %v3496 = vunpack.c.l.b16 %v836
    %v3497 = vunpack.c.h.b16 %v836
    %v3498 = vunpack.c.l.b16 %v837
    %v3499 = vunpack.c.h.b16 %v837
    %v3500 = vunpack.c.l.b16 %v838
    %v3501 = vunpack.c.h.b16 %v838
    %v3502 = vunpack.c.l.b16 %v839
    %v3503 = vunpack.c.h.b16 %v839
    %v3504 = vunpack.c.l.b16 %v840
    %v3505 = vunpack.c.h.b16 %v840
    %v3506 = vunpack.c.l.b16 %v841
    %v3507 = vunpack.c.h.b16 %v841
    %v3508 = vunpack.c.l.b16 %v842
    %v3509 = vunpack.c.h.b16 %v842
    %v3510 = vunpack.c.l.b16 %v843
    %v3511 = vunpack.c.h.b16 %v843
    %v3512 = vunpack.c.l.b16 %v844
    %v3513 = vunpack.c.h.b16 %v844
    %v3514 = vunpack.c.l.b16 %v845
    %v3515 = vunpack.c.h.b16 %v845
    %v3516 = vunpack.c.l.b16 %v846
    %v3517 = vunpack.c.h.b16 %v846
    %v3518 = vunpack.c.l.b16 %v847
    %v3519 = vunpack.c.h.b16 %v847
    %v3520 = vunpack.c.l.b16 %v848
    %v3521 = vunpack.c.h.b16 %v848
    %v3522 = vunpack.c.l.b16 %v849
    %v3523 = vunpack.c.h.b16 %v849
    %v3524 = vunpack.c.l.b16 %v850
    %v3525 = vunpack.c.h.b16 %v850
    %v3526 = vunpack.c.l.b16 %v851
    %v3527 = vunpack.c.h.b16 %v851
    %v3528 = vunpack.c.l.b16 %v852
    %v3529 = vunpack.c.h.b16 %v852
    %v3530 = vunpack.c.l.b16 %v853
    %v3531 = vunpack.c.h.b16 %v853
    %v3532 = vunpack.c.l.b16 %v854
    %v3533 = vunpack.c.h.b16 %v854
    %v3534 = vunpack.c.l.b16 %v855
    %v3535 = vunpack.c.h.b16 %v855
    %v3536 = vunpack.c.l.b16 %v856
    %v3537 = vunpack.c.h.b16 %v856
    %v3538 = vunpack.c.l.b16 %v857
    %v3539 = vunpack.c.h.b16 %v857
    %v3540 = vunpack.c.l.b16 %v858
    %v3541 = vunpack.c.h.b16 %v858
    %v3542 = vunpack.c.l.b16 %v859
    %v3543 = vunpack.c.h.b16 %v859
    %v3544 = vunpack.c.l.b16 %v860
    %v3545 = vunpack.c.h.b16 %v860
    %v3546 = vunpack.c.l.b16 %v861
    %v3547 = vunpack.c.h.b16 %v861
    %v3548 = vunpack.c.l.b16 %v862
    %v3549 = vunpack.c.h.b16 %v862
    %v3550 = vunpack.c.l.b16 %v863
    %v3551 = vunpack.c.h.b16 %v863
    %v3552 = vunpack.c.l.b16 %v864
    %v3553 = vunpack.c.h.b16 %v864
    %v3554 = vunpack.c.l.b16 %v865
    %v3555 = vunpack.c.h.b16 %v865
    %v3556 = vunpack.c.l.b16 %v866
    %v3557 = vunpack.c.h.b16 %v866
    %v3558 = vunpack.c.l.b16 %v867
    %v3559 = vunpack.c.h.b16 %v867
    %v3560 = vunpack.c.l.b16 %v868
    %v3561 = vunpack.c.h.b16 %v868
    %v3562 = vunpack.c.l.b16 %v869
    %v3563 = vunpack.c.h.b16 %v869
    %v3564 = vunpack.c.l.b16 %v870
    %v3565 = vunpack.c.h.b16 %v870
    %v3566 = vunpack.c.l.b16 %v871
    %v3567 = vunpack.c.h.b16 %v871
    %v3568 = vunpack.c.l.b16 %v872
    %v3569 = vunpack.c.h.b16 %v872
    %v3570 = vunpack.c.l.b16 %v873
    %v3571 = vunpack.c.h.b16 %v873
    %v3572 = vunpack.c.l.b16 %v874
    %v3573 = vunpack.c.h.b16 %v874
    %v3574 = vunpack.c.l.b16 %v875
    %v3575 = vunpack.c.h.b16 %v875
    %v3576 = vunpack.c.l.b16 %v876
    %v3577 = vunpack.c.h.b16 %v876
    %v3578 = vunpack.c.l.b16 %v877
    %v3579 = vunpack.c.h.b16 %v877
    %v3580 = vunpack.c.l.b16 %v878
    %v3581 = vunpack.c.h.b16 %v878
    %v3582 = vunpack.c.l.b16 %v879
    %v3583 = vunpack.c.h.b16 %v879
    %v3584 = vunpack.c.l.b16 %v880
    %v3585 = vunpack.c.h.b16 %v880
    %v3586 = vunpack.c.l.b16 %v881
    %v3587 = vunpack.c.h.b16 %v881
    %v3588 = vunpack.c.l.b16 %v882
    %v3589 = vunpack.c.h.b16 %v882
    %v3590 = vunpack.c.l.b16 %v883
    %v3591 = vunpack.c.h.b16 %v883
    %v3592 = vunpack.c.l.b16 %v884
    %v3593 = vunpack.c.h.b16 %v884
    %v3594 = vunpack.c.l.b16 %v885
    %v3595 = vunpack.c.h.b16 %v885
    %v3596 = vunpack.c.l.b16 %v886
    %v3597 = vunpack.c.h.b16 %v886
    %v3598 = vunpack.c.l.b16 %v887
    %v3599 = vunpack.c.h.b16 %v887
    %v3600 = vunpack.c.l.b16 %v888
    %v3601 = vunpack.c.h.b16 %v888
    %v3602 = vunpack.c.l.b16 %v889
    %v3603 = vunpack.c.h.b16 %v889
    %v3604 = vunpack.c.l.b16 %v890
    %v3605 = vunpack.c.h.b16 %v890
    %v3606 = vunpack.c.l.b16 %v891
    %v3607 = vunpack.c.h.b16 %v891
    %v3608 = vunpack.c.l.b16 %v892
    %v3609 = vunpack.c.h.b16 %v892
    %v3610 = vunpack.c.l.b16 %v893
    %v3611 = vunpack.c.h.b16 %v893
    %v3612 = vunpack.c.l.b16 %v894
    %v3613 = vunpack.c.h.b16 %v894
    %v3614 = vunpack.c.l.b16 %v895
    %v3615 = vunpack.c.h.b16 %v895
    %v3616 = vunpack.c.l.b16 %v896
    %v3617 = vunpack.c.h.b16 %v896
    %v3618 = vunpack.c.l.b16 %v897
    %v3619 = vunpack.c.h.b16 %v897
    %v3620 = vunpack.c.l.b16 %v898
    %v3621 = vunpack.c.h.b16 %v898
    %v3622 = vunpack.c.l.b16 %v899
    %v3623 = vunpack.c.h.b16 %v899
    %v3624 = vunpack.c.l.b16 %v900
    %v3625 = vunpack.c.h.b16 %v900
    %v3626 = vunpack.c.l.b16 %v901
    %v3627 = vunpack.c.h.b16 %v901
    %v3628 = vunpack.c.l.b16 %v902
    %v3629 = vunpack.c.h.b16 %v902
    %v3630 = vunpack.c.l.b16 %v903
    %v3631 = vunpack.c.h.b16 %v903
    %v3632 = vunpack.c.l.b16 %v904
    %v3633 = vunpack.c.h.b16 %v904
    %v3634 = vunpack.c.l.b16 %v905
    %v3635 = vunpack.c.h.b16 %v905
    %v3636 = vunpack.c.l.b16 %v906
    %v3637 = vunpack.c.h.b16 %v906
    %v3638 = vunpack.c.l.b16 %v907
    %v3639 = vunpack.c.h.b16 %v907
    %v3640 = vunpack.c.l.b16 %v908
    %v3641 = vunpack.c.h.b16 %v908
    %v3642 = vunpack.c.l.b16 %v909
    %v3643 = vunpack.c.h.b16 %v909
    %v3644 = vunpack.c.l.b16 %v910
    %v3645 = vunpack.c.h.b16 %v910
    %v3646 = vunpack.c.l.b16 %v911
    %v3647 = vunpack.c.h.b16 %v911
    %v3648 = vunpack.c.l.b16 %v912
    %v3649 = vunpack.c.h.b16 %v912
    %v3650 = vunpack.c.l.b16 %v913
    %v3651 = vunpack.c.h.b16 %v913
    %v3652 = vunpack.c.l.b16 %v914
    %v3653 = vunpack.c.h.b16 %v914
    %v3654 = vunpack.c.l.b16 %v915
    %v3655 = vunpack.c.h.b16 %v915
    %v3656 = vunpack.c.l.b16 %v916
    %v3657 = vunpack.c.h.b16 %v916
    %v3658 = vunpack.c.l.b16 %v917
    %v3659 = vunpack.c.h.b16 %v917
    %v3660 = vunpack.c.l.b16 %v918
    %v3661 = vunpack.c.h.b16 %v918
    %v3662 = vunpack.c.l.b16 %v919
    %v3663 = vunpack.c.h.b16 %v919
    %v3664 = vunpack.c.l.b16 %v920
    %v3665 = vunpack.c.h.b16 %v920
    %v3666 = vunpack.c.l.b16 %v921
    %v3667 = vunpack.c.h.b16 %v921
    %v3668 = vunpack.c.l.b16 %v922
    %v3669 = vunpack.c.h.b16 %v922
    %v3670 = vunpack.c.l.b16 %v923
    %v3671 = vunpack.c.h.b16 %v923
    %v3672 = vunpack.c.l.b16 %v924
    %v3673 = vunpack.c.h.b16 %v924
    %v3674 = vunpack.c.l.b16 %v925
    %v3675 = vunpack.c.h.b16 %v925
    %v3676 = vunpack.c.l.b16 %v926
    %v3677 = vunpack.c.h.b16 %v926
    %v3678 = vunpack.c.l.b16 %v927
    %v3679 = vunpack.c.h.b16 %v927
    %v3680 = vunpack.c.l.b16 %v928
    %v3681 = vunpack.c.h.b16 %v928
    %v3682 = vunpack.c.l.b16 %v929
    %v3683 = vunpack.c.h.b16 %v929
    %v3684 = vunpack.c.l.b16 %v930
    %v3685 = vunpack.c.h.b16 %v930
    %v3686 = vunpack.c.l.b16 %v931
    %v3687 = vunpack.c.h.b16 %v931
    %v3688 = vunpack.c.l.b16 %v932
    %v3689 = vunpack.c.h.b16 %v932
    %v3690 = vunpack.c.l.b16 %v933
    %v3691 = vunpack.c.h.b16 %v933
    %v3692 = vunpack.c.l.b16 %v934
    %v3693 = vunpack.c.h.b16 %v934
    %v3694 = vpack.c.b16 %v1972, %v1966
    %v3695 = vpack.c.b16 %v1973, %v1967
    %v3696 = vpack.c.b16 %v1974, %v1968
    %v3697 = vpack.c.b16 %v1975, %v1969
    %v3698 = vpack.c.b16 %v1976, %v1970
    %v3699 = vpack.c.b16 %v1977, %v1971
    %v3700 = vpack.c.b16 %v1984, %v1978
    %v3701 = vpack.c.b16 %v1985, %v1979
    %v3702 = vpack.c.b16 %v1986, %v1980
    %v3703 = vpack.c.b16 %v1987, %v1981
    %v3704 = vpack.c.b16 %v1988, %v1982
    %v3705 = vpack.c.b16 %v1989, %v1983
    %v3706 = vpack.c.b16 %v1996, %v1990
    %v3707 = vpack.c.b16 %v1997, %v1991
    %v3708 = vpack.c.b16 %v1998, %v1992
    %v3709 = vpack.c.b16 %v1999, %v1993
    %v3710 = vpack.c.b16 %v2000, %v1994
    %v3711 = vpack.c.b16 %v2001, %v1995
    %v3712 = vpack.c.b16 %v2008, %v2002
    %v3713 = vpack.c.b16 %v2009, %v2003
    %v3714 = vpack.c.b16 %v2010, %v2004
    %v3715 = vpack.c.b16 %v2011, %v2005
    %v3716 = vpack.c.b16 %v2012, %v2006
    %v3717 = vpack.c.b16 %v2013, %v2007
    %v3718 = vpack.c.b16 %v2020, %v2014
    %v3719 = vpack.c.b16 %v2021, %v2015
    %v3720 = vpack.c.b16 %v2022, %v2016
    %v3721 = vpack.c.b16 %v2023, %v2017
    %v3722 = vpack.c.b16 %v2024, %v2018
    %v3723 = vpack.c.b16 %v2025, %v2019
    %v3724 = vpack.c.b16 %v2032, %v2026
    %v3725 = vpack.c.b16 %v2033, %v2027
    %v3726 = vpack.c.b16 %v2034, %v2028
    %v3727 = vpack.c.b16 %v2035, %v2029
    %v3728 = vpack.c.b16 %v2036, %v2030
    %v3729 = vpack.c.b16 %v2037, %v2031
    %v3730 = vpack.c.b16 %v2044, %v2038
    %v3731 = vpack.c.b16 %v2045, %v2039
    %v3732 = vpack.c.b16 %v2046, %v2040
    %v3733 = vpack.c.b16 %v2047, %v2041
    %v3734 = vpack.c.b16 %v2048, %v2042
    %v3735 = vpack.c.b16 %v2049, %v2043
    %v3736 = vpack.c.b16 %v2056, %v2050
    %v3737 = vpack.c.b16 %v2057, %v2051
    %v3738 = vpack.c.b16 %v2058, %v2052
    %v3739 = vpack.c.b16 %v2059, %v2053
    %v3740 = vpack.c.b16 %v2060, %v2054
    %v3741 = vpack.c.b16 %v2061, %v2055
    %v3742 = vpack.c.b16 %v2068, %v2062
    %v3743 = vpack.c.b16 %v2069, %v2063
    %v3744 = vpack.c.b16 %v2070, %v2064
    %v3745 = vpack.c.b16 %v2071, %v2065
    %v3746 = vpack.c.b16 %v2072, %v2066
    %v3747 = vpack.c.b16 %v2073, %v2067
    %v3748 = vpack.c.b16 %v2080, %v2074
    %v3749 = vpack.c.b16 %v2081, %v2075
    %v3750 = vpack.c.b16 %v2082, %v2076
    %v3751 = vpack.c.b16 %v2083, %v2077
    %v3752 = vpack.c.b16 %v2084, %v2078
    %v3753 = vpack.c.b16 %v2085, %v2079
    %v3754 = vpack.c.b16 %v2092, %v2086
    %v3755 = vpack.c.b16 %v2093, %v2087
    %v3756 = vpack.c.b16 %v2094, %v2088
    %v3757 = vpack.c.b16 %v2095, %v2089
    %v3758 = vpack.c.b16 %v2096, %v2090
    %v3759 = vpack.c.b16 %v2097, %v2091
    %v3760 = vpack.c.b16 %v2104, %v2098
    %v3761 = vpack.c.b16 %v2105, %v2099
    %v3762 = vpack.c.b16 %v2106, %v2100
    %v3763 = vpack.c.b16 %v2107, %v2101
    %v3764 = vpack.c.b16 %v2108, %v2102
    %v3765 = vpack.c.b16 %v2109, %v2103
    %v3766 = vpack.c.b16 %v2116, %v2110
    %v3767 = vpack.c.b16 %v2117, %v2111
    %v3768 = vpack.c.b16 %v2118, %v2112
    %v3769 = vpack.c.b16 %v2119, %v2113
    %v3770 = vpack.c.b16 %v2120, %v2114
    %v3771 = vpack.c.b16 %v2121, %v2115
    %v3772 = vpack.c.b16 %v2128, %v2122
    %v3773 = vpack.c.b16 %v2129, %v2123
    %v3774 = vpack.c.b16 %v2130, %v2124
    %v3775 = vpack.c.b16 %v2131, %v2125
    %v3776 = vpack.c.b16 %v2132, %v2126
    %v3777 = vpack.c.b16 %v2133, %v2127
    %v3778 = vpack.c.b16 %v2140, %v2134
    %v3779 = vpack.c.b16 %v2141, %v2135
    %v3780 = vpack.c.b16 %v2142, %v2136
    %v3781 = vpack.c.b16 %v2143, %v2137
    %v3782 = vpack.c.b16 %v2144, %v2138
    %v3783 = vpack.c.b16 %v2145, %v2139
    %v3784 = vpack.c.b16 %v2152, %v2146
    %v3785 = vpack.c.b16 %v2153, %v2147
    %v3786 = vpack.c.b16 %v2154, %v2148
    %v3787 = vpack.c.b16 %v2155, %v2149
    %v3788 = vpack.c.b16 %v2156, %v2150
    %v3789 = vpack.c.b16 %v2157, %v2151
    %v3790 = vpack.c.b16 %v2164, %v2158
    %v3791 = vpack.c.b16 %v2165, %v2159
    %v3792 = vpack.c.b16 %v2166, %v2160
    %v3793 = vpack.c.b16 %v2167, %v2161
    %v3794 = vpack.c.b16 %v2168, %v2162
    %v3795 = vpack.c.b16 %v2169, %v2163
    %v3796 = vpack.c.b16 %v2176, %v2170
    %v3797 = vpack.c.b16 %v2177, %v2171
    %v3798 = vpack.c.b16 %v2178, %v2172
    %v3799 = vpack.c.b16 %v2179, %v2173
    %v3800 = vpack.c.b16 %v2180, %v2174
    %v3801 = vpack.c.b16 %v2181, %v2175
    %v3802 = vpack.c.b16 %v2188, %v2182
    %v3803 = vpack.c.b16 %v2189, %v2183
    %v3804 = vpack.c.b16 %v2190, %v2184
    %v3805 = vpack.c.b16 %v2191, %v2185
    %v3806 = vpack.c.b16 %v2192, %v2186
    %v3807 = vpack.c.b16 %v2193, %v2187
    %v3808 = vpack.c.b16 %v2200, %v2194
    %v3809 = vpack.c.b16 %v2201, %v2195
    %v3810 = vpack.c.b16 %v2202, %v2196
    %v3811 = vpack.c.b16 %v2203, %v2197
    %v3812 = vpack.c.b16 %v2204, %v2198
    %v3813 = vpack.c.b16 %v2205, %v2199
    %v3814 = vpack.c.b16 %v2212, %v2206
    %v3815 = vpack.c.b16 %v2213, %v2207
    %v3816 = vpack.c.b16 %v2214, %v2208
    %v3817 = vpack.c.b16 %v2215, %v2209
    %v3818 = vpack.c.b16 %v2216, %v2210
    %v3819 = vpack.c.b16 %v2217, %v2211
    %v3820 = vpack.c.b16 %v2224, %v2218
    %v3821 = vpack.c.b16 %v2225, %v2219
    %v3822 = vpack.c.b16 %v2226, %v2220
    %v3823 = vpack.c.b16 %v2227, %v2221
    %v3824 = vpack.c.b16 %v2228, %v2222
    %v3825 = vpack.c.b16 %v2229, %v2223
    %v3826 = vpack.c.b16 %v2236, %v2230
    %v3827 = vpack.c.b16 %v2237, %v2231
    %v3828 = vpack.c.b16 %v2238, %v2232
    %v3829 = vpack.c.b16 %v2239, %v2233
    %v3830 = vpack.c.b16 %v2240, %v2234
    %v3831 = vpack.c.b16 %v2241, %v2235
    %v3832 = vpack.c.b16 %v2248, %v2242
    %v3833 = vpack.c.b16 %v2249, %v2243
    %v3834 = vpack.c.b16 %v2250, %v2244
    %v3835 = vpack.c.b16 %v2251, %v2245
    %v3836 = vpack.c.b16 %v2252, %v2246
    %v3837 = vpack.c.b16 %v2253, %v2247
    %v3838 = vpack.c.b16 %v2260, %v2254
    %v3839 = vpack.c.b16 %v2261, %v2255
    %v3840 = vpack.c.b16 %v2262, %v2256
    %v3841 = vpack.c.b16 %v2263, %v2257
    %v3842 = vpack.c.b16 %v2264, %v2258
    %v3843 = vpack.c.b16 %v2265, %v2259
    %v3844 = vpack.c.b16 %v2272, %v2266
    %v3845 = vpack.c.b16 %v2273, %v2267
    %v3846 = vpack.c.b16 %v2274, %v2268
    %v3847 = vpack.c.b16 %v2275, %v2269
    %v3848 = vpack.c.b16 %v2276, %v2270
    %v3849 = vpack.c.b16 %v2277, %v2271
    %v3850 = vpack.c.b16 %v2284, %v2278
    %v3851 = vpack.c.b16 %v2285, %v2279
    %v3852 = vpack.c.b16 %v2286, %v2280
    %v3853 = vpack.c.b16 %v2287, %v2281
    %v3854 = vpack.c.b16 %v2288, %v2282
    %v3855 = vpack.c.b16 %v2289, %v2283
    %v3856 = vpack.c.b16 %v2296, %v2290
    %v3857 = vpack.c.b16 %v2297, %v2291
    %v3858 = vpack.c.b16 %v2298, %v2292
    %v3859 = vpack.c.b16 %v2299, %v2293
    %v3860 = vpack.c.b16 %v2300, %v2294
    %v3861 = vpack.c.b16 %v2301, %v2295
    %v3862 = vpack.c.b16 %v2308, %v2302
    %v3863 = vpack.c.b16 %v2309, %v2303
    %v3864 = vpack.c.b16 %v2310, %v2304
    %v3865 = vpack.c.b16 %v2311, %v2305
    %v3866 = vpack.c.b16 %v2312, %v2306
    %v3867 = vpack.c.b16 %v2313, %v2307
    %v3868 = vpack.c.b16 %v2320, %v2314
    %v3869 = vpack.c.b16 %v2321, %v2315
    %v3870 = vpack.c.b16 %v2322, %v2316
    %v3871 = vpack.c.b16 %v2323, %v2317
    %v3872 = vpack.c.b16 %v2324, %v2318
    %v3873 = vpack.c.b16 %v2325, %v2319
    %v3874 = vpack.c.b16 %v2332, %v2326
    %v3875 = vpack.c.b16 %v2333, %v2327
    %v3876 = vpack.c.b16 %v2334, %v2328
    %v3877 = vpack.c.b16 %v2335, %v2329
    %v3878 = vpack.c.b16 %v2336, %v2330
    %v3879 = vpack.c.b16 %v2337, %v2331
    %v3880 = vpack.c.b16 %v2344, %v2338
    %v3881 = vpack.c.b16 %v2345, %v2339
    %v3882 = vpack.c.b16 %v2346, %v2340
    %v3883 = vpack.c.b16 %v2347, %v2341
    %v3884 = vpack.c.b16 %v2348, %v2342
    %v3885 = vpack.c.b16 %v2349, %v2343
    %v3886 = vpack.c.b16 %v2356, %v2350
    %v3887 = vpack.c.b16 %v2357, %v2351
    %v3888 = vpack.c.b16 %v2358, %v2352
    %v3889 = vpack.c.b16 %v2359, %v2353
    %v3890 = vpack.c.b16 %v2360, %v2354
    %v3891 = vpack.c.b16 %v2361, %v2355
    %v3892 = vpack.c.b16 %v2368, %v2362
    %v3893 = vpack.c.b16 %v2369, %v2363
    %v3894 = vpack.c.b16 %v2370, %v2364
    %v3895 = vpack.c.b16 %v2371, %v2365
    %v3896 = vpack.c.b16 %v2372, %v2366
    %v3897 = vpack.c.b16 %v2373, %v2367
    %v3898 = vpack.c.b16 %v2380, %v2374
    %v3899 = vpack.c.b16 %v2381, %v2375
    %v3900 = vpack.c.b16 %v2382, %v2376
    %v3901 = vpack.c.b16 %v2383, %v2377
    %v3902 = vpack.c.b16 %v2384, %v2378
    %v3903 = vpack.c.b16 %v2385, %v2379
    %v3904 = vpack.c.b16 %v2392, %v2386
    %v3905 = vpack.c.b16 %v2393, %v2387
    %v3906 = vpack.c.b16 %v2394, %v2388
    %v3907 = vpack.c.b16 %v2395, %v2389
    %v3908 = vpack.c.b16 %v2396, %v2390
    %v3909 = vpack.c.b16 %v2397, %v2391
    %v3910 = vpack.c.b16 %v2404, %v2398
    %v3911 = vpack.c.b16 %v2405, %v2399
    %v3912 = vpack.c.b16 %v2406, %v2400
    %v3913 = vpack.c.b16 %v2407, %v2401
    %v3914 = vpack.c.b16 %v2408, %v2402
    %v3915 = vpack.c.b16 %v2409, %v2403
    %v3916 = vpack.c.b16 %v2416, %v2410
    %v3917 = vpack.c.b16 %v2417, %v2411
    %v3918 = vpack.c.b16 %v2418, %v2412
    %v3919 = vpack.c.b16 %v2419, %v2413
    %v3920 = vpack.c.b16 %v2420, %v2414
    %v3921 = vpack.c.b16 %v2421, %v2415
    %v3922 = vpack.c.b16 %v2428, %v2422
    %v3923 = vpack.c.b16 %v2429, %v2423
    %v3924 = vpack.c.b16 %v2430, %v2424
    %v3925 = vpack.c.b16 %v2431, %v2425
    %v3926 = vpack.c.b16 %v2432, %v2426
    %v3927 = vpack.c.b16 %v2433, %v2427
    %v3928 = vpack.c.b16 %v2440, %v2434
    %v3929 = vpack.c.b16 %v2441, %v2435
    %v3930 = vpack.c.b16 %v2442, %v2436
    %v3931 = vpack.c.b16 %v2443, %v2437
    %v3932 = vpack.c.b16 %v2444, %v2438
    %v3933 = vpack.c.b16 %v2445, %v2439
    %v3934 = vpack.c.b16 %v2452, %v2446
    %v3935 = vpack.c.b16 %v2453, %v2447
    %v3936 = vpack.c.b16 %v2454, %v2448
    %v3937 = vpack.c.b16 %v2455, %v2449
    %v3938 = vpack.c.b16 %v2456, %v2450
    %v3939 = vpack.c.b16 %v2457, %v2451
    %v3940 = vpack.c.b16 %v2464, %v2458
    %v3941 = vpack.c.b16 %v2465, %v2459
    %v3942 = vpack.c.b16 %v2466, %v2460
    %v3943 = vpack.c.b16 %v2467, %v2461
    %v3944 = vpack.c.b16 %v2468, %v2462
    %v3945 = vpack.c.b16 %v2469, %v2463
    %v3946 = vpack.c.b16 %v2476, %v2470
    %v3947 = vpack.c.b16 %v2477, %v2471
    %v3948 = vpack.c.b16 %v2478, %v2472
    %v3949 = vpack.c.b16 %v2479, %v2473
    %v3950 = vpack.c.b16 %v2480, %v2474
    %v3951 = vpack.c.b16 %v2481, %v2475
    %v3952 = vpack.c.b16 %v2488, %v2482
    %v3953 = vpack.c.b16 %v2489, %v2483
    %v3954 = vpack.c.b16 %v2490, %v2484
    %v3955 = vpack.c.b16 %v2491, %v2485
    %v3956 = vpack.c.b16 %v2492, %v2486
    %v3957 = vpack.c.b16 %v2493, %v2487
    %v3958 = vpack.c.b16 %v2500, %v2494
    %v3959 = vpack.c.b16 %v2501, %v2495
    %v3960 = vpack.c.b16 %v2502, %v2496
    %v3961 = vpack.c.b16 %v2503, %v2497
    %v3962 = vpack.c.b16 %v2504, %v2498
    %v3963 = vpack.c.b16 %v2505, %v2499
    %v3964 = vpack.c.b16 %v2512, %v2506
    %v3965 = vpack.c.b16 %v2513, %v2507
    %v3966 = vpack.c.b16 %v2514, %v2508
    %v3967 = vpack.c.b16 %v2515, %v2509
    %v3968 = vpack.c.b16 %v2516, %v2510
    %v3969 = vpack.c.b16 %v2517, %v2511
    %v3970 = vpack.c.b16 %v2524, %v2518
    %v3971 = vpack.c.b16 %v2525, %v2519
    %v3972 = vpack.c.b16 %v2526, %v2520
    %v3973 = vpack.c.b16 %v2527, %v2521
    %v3974 = vpack.c.b16 %v2528, %v2522
    %v3975 = vpack.c.b16 %v2529, %v2523
    %v3976 = vpack.c.b16 %v2536, %v2530
    %v3977 = vpack.c.b16 %v2537, %v2531
    %v3978 = vpack.c.b16 %v2538, %v2532
    %v3979 = vpack.c.b16 %v2539, %v2533
    %v3980 = vpack.c.b16 %v2540, %v2534
    %v3981 = vpack.c.b16 %v2541, %v2535
    %v3982 = vpack.c.b16 %v2548, %v2542
    %v3983 = vpack.c.b16 %v2549, %v2543
    %v3984 = vpack.c.b16 %v2550, %v2544
    %v3985 = vpack.c.b16 %v2551, %v2545
    %v3986 = vpack.c.b16 %v2552, %v2546
    %v3987 = vpack.c.b16 %v2553, %v2547
    %v3988 = vpack.c.b16 %v2560, %v2554
    %v3989 = vpack.c.b16 %v2561, %v2555
    %v3990 = vpack.c.b16 %v2562, %v2556
    %v3991 = vpack.c.b16 %v2563, %v2557
    %v3992 = vpack.c.b16 %v2564, %v2558
    %v3993 = vpack.c.b16 %v2565, %v2559
    %v3994 = vpack.c.b16 %v2572, %v2566
    %v3995 = vpack.c.b16 %v2573, %v2567
    %v3996 = vpack.c.b16 %v2574, %v2568
    %v3997 = vpack.c.b16 %v2575, %v2569
    %v3998 = vpack.c.b16 %v2576, %v2570
    %v3999 = vpack.c.b16 %v2577, %v2571
    %v4000 = vpack.c.b16 %v2584, %v2578
    %v4001 = vpack.c.b16 %v2585, %v2579
    %v4002 = vpack.c.b16 %v2586, %v2580
    %v4003 = vpack.c.b16 %v2587, %v2581
    %v4004 = vpack.c.b16 %v2588, %v2582
    %v4005 = vpack.c.b16 %v2589, %v2583
    %v4006 = vpack.c.b16 %v2596, %v2590
    %v4007 = vpack.c.b16 %v2597, %v2591
    %v4008 = vpack.c.b16 %v2598, %v2592
    %v4009 = vpack.c.b16 %v2599, %v2593
    %v4010 = vpack.c.b16 %v2600, %v2594
    %v4011 = vpack.c.b16 %v2601, %v2595
    %v4012 = vpack.c.b16 %v2608, %v2602
    %v4013 = vpack.c.b16 %v2609, %v2603
    %v4014 = vpack.c.b16 %v2610, %v2604
    %v4015 = vpack.c.b16 %v2611, %v2605
    %v4016 = vpack.c.b16 %v2612, %v2606
    %v4017 = vpack.c.b16 %v2613, %v2607
    %v4018 = vpack.c.b16 %v2620, %v2614
    %v4019 = vpack.c.b16 %v2621, %v2615
    %v4020 = vpack.c.b16 %v2622, %v2616
    %v4021 = vpack.c.b16 %v2623, %v2617
    %v4022 = vpack.c.b16 %v2624, %v2618
    %v4023 = vpack.c.b16 %v2625, %v2619
    %v4024 = vpack.c.b16 %v2632, %v2626
    %v4025 = vpack.c.b16 %v2633, %v2627
    %v4026 = vpack.c.b16 %v2634, %v2628
    %v4027 = vpack.c.b16 %v2635, %v2629
    %v4028 = vpack.c.b16 %v2636, %v2630
    %v4029 = vpack.c.b16 %v2637, %v2631
    %v4030 = vpack.c.b16 %v2644, %v2638
    %v4031 = vpack.c.b16 %v2645, %v2639
    %v4032 = vpack.c.b16 %v2646, %v2640
    %v4033 = vpack.c.b16 %v2647, %v2641
    %v4034 = vpack.c.b16 %v2648, %v2642
    %v4035 = vpack.c.b16 %v2649, %v2643
    %v4036 = vpack.c.b16 %v2656, %v2650
    %v4037 = vpack.c.b16 %v2657, %v2651
    %v4038 = vpack.c.b16 %v2658, %v2652
    %v4039 = vpack.c.b16 %v2659, %v2653
    %v4040 = vpack.c.b16 %v2660, %v2654
    %v4041 = vpack.c.b16 %v2661, %v2655
    %v4042 = vpack.c.b16 %v2668, %v2662
    %v4043 = vpack.c.b16 %v2669, %v2663
    %v4044 = vpack.c.b16 %v2670, %v2664
    %v4045 = vpack.c.b16 %v2671, %v2665
    %v4046 = vpack.c.b16 %v2672, %v2666
    %v4047 = vpack.c.b16 %v2673, %v2667
    %v4048 = vpack.c.b16 %v2680, %v2674
    %v4049 = vpack.c.b16 %v2681, %v2675
    %v4050 = vpack.c.b16 %v2682, %v2676
    %v4051 = vpack.c.b16 %v2683, %v2677
    %v4052 = vpack.c.b16 %v2684, %v2678
    %v4053 = vpack.c.b16 %v2685, %v2679
    %v4054 = vpack.c.b16 %v2692, %v2686
    %v4055 = vpack.c.b16 %v2693, %v2687
    %v4056 = vpack.c.b16 %v2694, %v2688
    %v4057 = vpack.c.b16 %v2695, %v2689
    %v4058 = vpack.c.b16 %v2696, %v2690
    %v4059 = vpack.c.b16 %v2697, %v2691
    %v4060 = vpack.c.b16 %v2704, %v2698
    %v4061 = vpack.c.b16 %v2705, %v2699
    %v4062 = vpack.c.b16 %v2706, %v2700
    %v4063 = vpack.c.b16 %v2707, %v2701
    %v4064 = vpack.c.b16 %v2708, %v2702
    %v4065 = vpack.c.b16 %v2709, %v2703
    %v4066 = vpack.c.b16 %v2716, %v2710
    %v4067 = vpack.c.b16 %v2717, %v2711
    %v4068 = vpack.c.b16 %v2718, %v2712
    %v4069 = vpack.c.b16 %v2719, %v2713
    %v4070 = vpack.c.b16 %v2720, %v2714
    %v4071 = vpack.c.b16 %v2721, %v2715
    %v4072 = vpack.c.b16 %v2728, %v2722
    %v4073 = vpack.c.b16 %v2729, %v2723
    %v4074 = vpack.c.b16 %v2730, %v2724
    %v4075 = vpack.c.b16 %v2731, %v2725
    %v4076 = vpack.c.b16 %v2732, %v2726
    %v4077 = vpack.c.b16 %v2733, %v2727
    %v4078 = vpack.c.b16 %v2740, %v2734
    %v4079 = vpack.c.b16 %v2741, %v2735
    %v4080 = vpack.c.b16 %v2742, %v2736
    %v4081 = vpack.c.b16 %v2743, %v2737
    %v4082 = vpack.c.b16 %v2744, %v2738
    %v4083 = vpack.c.b16 %v2745, %v2739
    %v4084 = vpack.c.b16 %v2752, %v2746
    %v4085 = vpack.c.b16 %v2753, %v2747
    %v4086 = vpack.c.b16 %v2754, %v2748
    %v4087 = vpack.c.b16 %v2755, %v2749
    %v4088 = vpack.c.b16 %v2756, %v2750
    %v4089 = vpack.c.b16 %v2757, %v2751
    %v4090 = vpack.c.b16 %v2764, %v2758
    %v4091 = vpack.c.b16 %v2765, %v2759
    %v4092 = vpack.c.b16 %v2766, %v2760
    %v4093 = vpack.c.b16 %v2767, %v2761
    %v4094 = vpack.c.b16 %v2768, %v2762
    %v4095 = vpack.c.b16 %v2769, %v2763
    %v4096 = vpack.c.b16 %v2776, %v2770
    %v4097 = vpack.c.b16 %v2777, %v2771
    %v4098 = vpack.c.b16 %v2778, %v2772
    %v4099 = vpack.c.b16 %v2779, %v2773
    %v4100 = vpack.c.b16 %v2780, %v2774
    %v4101 = vpack.c.b16 %v2781, %v2775
    %v4102 = vpack.c.b16 %v2788, %v2782
    %v4103 = vpack.c.b16 %v2789, %v2783
    %v4104 = vpack.c.b16 %v2790, %v2784
    %v4105 = vpack.c.b16 %v2791, %v2785
    %v4106 = vpack.c.b16 %v2792, %v2786
    %v4107 = vpack.c.b16 %v2793, %v2787
    %v4108 = vpack.c.b16 %v2800, %v2794
    %v4109 = vpack.c.b16 %v2801, %v2795
    %v4110 = vpack.c.b16 %v2802, %v2796
    %v4111 = vpack.c.b16 %v2803, %v2797
    %v4112 = vpack.c.b16 %v2804, %v2798
    %v4113 = vpack.c.b16 %v2805, %v2799
    %v4114 = vpack.c.b16 %v2812, %v2806
    %v4115 = vpack.c.b16 %v2813, %v2807
    %v4116 = vpack.c.b16 %v2814, %v2808
    %v4117 = vpack.c.b16 %v2815, %v2809
    %v4118 = vpack.c.b16 %v2816, %v2810
    %v4119 = vpack.c.b16 %v2817, %v2811
    %v4120 = vpack.c.b16 %v2824, %v2818
    %v4121 = vpack.c.b16 %v2825, %v2819
    %v4122 = vpack.c.b16 %v2826, %v2820
    %v4123 = vpack.c.b16 %v2827, %v2821
    %v4124 = vpack.c.b16 %v2828, %v2822
    %v4125 = vpack.c.b16 %v2829, %v2823
    %v4126 = vpack.c.b16 %v2836, %v2830
    %v4127 = vpack.c.b16 %v2837, %v2831
    %v4128 = vpack.c.b16 %v2838, %v2832
    %v4129 = vpack.c.b16 %v2839, %v2833
    %v4130 = vpack.c.b16 %v2840, %v2834
    %v4131 = vpack.c.b16 %v2841, %v2835
    %v4132 = vpack.c.b16 %v2848, %v2842
    %v4133 = vpack.c.b16 %v2849, %v2843
    %v4134 = vpack.c.b16 %v2850, %v2844
    %v4135 = vpack.c.b16 %v2851, %v2845
    %v4136 = vpack.c.b16 %v2852, %v2846
    %v4137 = vpack.c.b16 %v2853, %v2847
    %v4138 = vpack.c.b16 %v2860, %v2854
    %v4139 = vpack.c.b16 %v2861, %v2855
    %v4140 = vpack.c.b16 %v2862, %v2856
    %v4141 = vpack.c.b16 %v2863, %v2857
    %v4142 = vpack.c.b16 %v2864, %v2858
    %v4143 = vpack.c.b16 %v2865, %v2859
    %v4144 = vpack.c.b16 %v2872, %v2866
    %v4145 = vpack.c.b16 %v2873, %v2867
    %v4146 = vpack.c.b16 %v2874, %v2868
    %v4147 = vpack.c.b16 %v2875, %v2869
    %v4148 = vpack.c.b16 %v2876, %v2870
    %v4149 = vpack.c.b16 %v2877, %v2871
    %v4150 = vpack.c.b16 %v2884, %v2878
    %v4151 = vpack.c.b16 %v2885, %v2879
    %v4152 = vpack.c.b16 %v2886, %v2880
    %v4153 = vpack.c.b16 %v2887, %v2881
    %v4154 = vpack.c.b16 %v2888, %v2882
    %v4155 = vpack.c.b16 %v2889, %v2883
    %v4156 = vpack.c.b16 %v2896, %v2890
    %v4157 = vpack.c.b16 %v2897, %v2891
    %v4158 = vpack.c.b16 %v2898, %v2892
    %v4159 = vpack.c.b16 %v2899, %v2893
    %v4160 = vpack.c.b16 %v2900, %v2894
    %v4161 = vpack.c.b16 %v2901, %v2895
    %v4162 = vpack.c.b16 %v2908, %v2902
    %v4163 = vpack.c.b16 %v2909, %v2903
    %v4164 = vpack.c.b16 %v2910, %v2904
    %v4165 = vpack.c.b16 %v2911, %v2905
    %v4166 = vpack.c.b16 %v2912, %v2906
    %v4167 = vpack.c.b16 %v2913, %v2907
    %v4168 = vpack.c.b16 %v2920, %v2914
    %v4169 = vpack.c.b16 %v2921, %v2915
    %v4170 = vpack.c.b16 %v2922, %v2916
    %v4171 = vpack.c.b16 %v2923, %v2917
    %v4172 = vpack.c.b16 %v2924, %v2918
    %v4173 = vpack.c.b16 %v2925, %v2919
    %v4174 = vpack.c.b16 %v2932, %v2926
    %v4175 = vpack.c.b16 %v2933, %v2927
    %v4176 = vpack.c.b16 %v2934, %v2928
    %v4177 = vpack.c.b16 %v2935, %v2929
    %v4178 = vpack.c.b16 %v2936, %v2930
    %v4179 = vpack.c.b16 %v2937, %v2931
    %v4180 = vpack.c.b16 %v2944, %v2938
    %v4181 = vpack.c.b16 %v2945, %v2939
    %v4182 = vpack.c.b16 %v2946, %v2940
    %v4183 = vpack.c.b16 %v2947, %v2941
    %v4184 = vpack.c.b16 %v2948, %v2942
    %v4185 = vpack.c.b16 %v2949, %v2943
    %v4186 = vpack.c.b16 %v2956, %v2950
    %v4187 = vpack.c.b16 %v2957, %v2951
    %v4188 = vpack.c.b16 %v2958, %v2952
    %v4189 = vpack.c.b16 %v2959, %v2953
    %v4190 = vpack.c.b16 %v2960, %v2954
    %v4191 = vpack.c.b16 %v2961, %v2955
    %v4192 = vpack.c.b16 %v2968, %v2962
    %v4193 = vpack.c.b16 %v2969, %v2963
    %v4194 = vpack.c.b16 %v2970, %v2964
    %v4195 = vpack.c.b16 %v2971, %v2965
    %v4196 = vpack.c.b16 %v2972, %v2966
    %v4197 = vpack.c.b16 %v2973, %v2967
    %v4198 = vpack.c.b16 %v2980, %v2974
    %v4199 = vpack.c.b16 %v2981, %v2975
    %v4200 = vpack.c.b16 %v2982, %v2976
    %v4201 = vpack.c.b16 %v2983, %v2977
    %v4202 = vpack.c.b16 %v2984, %v2978
    %v4203 = vpack.c.b16 %v2985, %v2979
    %v4204 = vpack.c.b16 %v2992, %v2986
    %v4205 = vpack.c.b16 %v2993, %v2987
    %v4206 = vpack.c.b16 %v2994, %v2988
    %v4207 = vpack.c.b16 %v2995, %v2989
    %v4208 = vpack.c.b16 %v2996, %v2990
    %v4209 = vpack.c.b16 %v2997, %v2991
    %v4210 = vpack.c.b16 %v3004, %v2998
    %v4211 = vpack.c.b16 %v3005, %v2999
    %v4212 = vpack.c.b16 %v3006, %v3000
    %v4213 = vpack.c.b16 %v3007, %v3001
    %v4214 = vpack.c.b16 %v3008, %v3002
    %v4215 = vpack.c.b16 %v3009, %v3003
    %v4216 = vpack.c.b16 %v3016, %v3010
    %v4217 = vpack.c.b16 %v3017, %v3011
    %v4218 = vpack.c.b16 %v3018, %v3012
    %v4219 = vpack.c.b16 %v3019, %v3013
    %v4220 = vpack.c.b16 %v3020, %v3014
    %v4221 = vpack.c.b16 %v3021, %v3015
    %v4222 = vpack.c.b16 %v3028, %v3022
    %v4223 = vpack.c.b16 %v3029, %v3023
    %v4224 = vpack.c.b16 %v3030, %v3024
    %v4225 = vpack.c.b16 %v3031, %v3025
    %v4226 = vpack.c.b16 %v3032, %v3026
    %v4227 = vpack.c.b16 %v3033, %v3027
    %v4228 = vpack.c.b16 %v3040, %v3034
    %v4229 = vpack.c.b16 %v3041, %v3035
    %v4230 = vpack.c.b16 %v3042, %v3036
    %v4231 = vpack.c.b16 %v3043, %v3037
    %v4232 = vpack.c.b16 %v3044, %v3038
    %v4233 = vpack.c.b16 %v3045, %v3039
    %v4234 = vpack.c.b16 %v3052, %v3046
    %v4235 = vpack.c.b16 %v3053, %v3047
    %v4236 = vpack.c.b16 %v3054, %v3048
    %v4237 = vpack.c.b16 %v3055, %v3049
    %v4238 = vpack.c.b16 %v3056, %v3050
    %v4239 = vpack.c.b16 %v3057, %v3051
    %v4240 = vpack.c.b16 %v3064, %v3058
    %v4241 = vpack.c.b16 %v3065, %v3059
    %v4242 = vpack.c.b16 %v3066, %v3060
    %v4243 = vpack.c.b16 %v3067, %v3061
    %v4244 = vpack.c.b16 %v3068, %v3062
    %v4245 = vpack.c.b16 %v3069, %v3063
    %v4246 = vpack.c.b16 %v3076, %v3070
    %v4247 = vpack.c.b16 %v3077, %v3071
    %v4248 = vpack.c.b16 %v3078, %v3072
    %v4249 = vpack.c.b16 %v3079, %v3073
    %v4250 = vpack.c.b16 %v3080, %v3074
    %v4251 = vpack.c.b16 %v3081, %v3075
    %v4252 = vpack.c.b16 %v3088, %v3082
    %v4253 = vpack.c.b16 %v3089, %v3083
    %v4254 = vpack.c.b16 %v3090, %v3084
    %v4255 = vpack.c.b16 %v3091, %v3085
    %v4256 = vpack.c.b16 %v3092, %v3086
    %v4257 = vpack.c.b16 %v3093, %v3087
    %v4258 = vpack.c.b16 %v3100, %v3094
    %v4259 = vpack.c.b16 %v3101, %v3095
    %v4260 = vpack.c.b16 %v3102, %v3096
    %v4261 = vpack.c.b16 %v3103, %v3097
    %v4262 = vpack.c.b16 %v3104, %v3098
    %v4263 = vpack.c.b16 %v3105, %v3099
    %v4264 = vpack.c.b16 %v3112, %v3106
    %v4265 = vpack.c.b16 %v3113, %v3107
    %v4266 = vpack.c.b16 %v3114, %v3108
    %v4267 = vpack.c.b16 %v3115, %v3109
    %v4268 = vpack.c.b16 %v3116, %v3110
    %v4269 = vpack.c.b16 %v3117, %v3111
    %v4270 = vpack.c.b16 %v3124, %v3118
    %v4271 = vpack.c.b16 %v3125, %v3119
    %v4272 = vpack.c.b16 %v3126, %v3120
    %v4273 = vpack.c.b16 %v3127, %v3121
    %v4274 = vpack.c.b16 %v3128, %v3122
    %v4275 = vpack.c.b16 %v3129, %v3123
    %v4276 = vpack.c.b16 %v3136, %v3130
    %v4277 = vpack.c.b16 %v3137, %v3131
    %v4278 = vpack.c.b16 %v3138, %v3132
    %v4279 = vpack.c.b16 %v3139, %v3133
    %v4280 = vpack.c.b16 %v3140, %v3134
    %v4281 = vpack.c.b16 %v3141, %v3135
    %v4282 = vpack.c.b16 %v3148, %v3142
    %v4283 = vpack.c.b16 %v3149, %v3143
    %v4284 = vpack.c.b16 %v3150, %v3144
    %v4285 = vpack.c.b16 %v3151, %v3145
    %v4286 = vpack.c.b16 %v3152, %v3146
    %v4287 = vpack.c.b16 %v3153, %v3147
    %v4288 = vpack.c.b16 %v3160, %v3154
    %v4289 = vpack.c.b16 %v3161, %v3155
    %v4290 = vpack.c.b16 %v3162, %v3156
    %v4291 = vpack.c.b16 %v3163, %v3157
    %v4292 = vpack.c.b16 %v3164, %v3158
    %v4293 = vpack.c.b16 %v3165, %v3159
    %v4294 = vpack.c.b16 %v3172, %v3166
    %v4295 = vpack.c.b16 %v3173, %v3167
    %v4296 = vpack.c.b16 %v3174, %v3168
    %v4297 = vpack.c.b16 %v3175, %v3169
    %v4298 = vpack.c.b16 %v3176, %v3170
    %v4299 = vpack.c.b16 %v3177, %v3171
    %v4300 = vpack.c.b16 %v3184, %v3178
    %v4301 = vpack.c.b16 %v3185, %v3179
    %v4302 = vpack.c.b16 %v3186, %v3180
    %v4303 = vpack.c.b16 %v3187, %v3181
    %v4304 = vpack.c.b16 %v3188, %v3182
    %v4305 = vpack.c.b16 %v3189, %v3183
    %v4306 = vpack.c.b16 %v3196, %v3190
    %v4307 = vpack.c.b16 %v3197, %v3191
    %v4308 = vpack.c.b16 %v3198, %v3192
    %v4309 = vpack.c.b16 %v3199, %v3193
    %v4310 = vpack.c.b16 %v3200, %v3194
    %v4311 = vpack.c.b16 %v3201, %v3195
    %v4312 = vpack.c.b16 %v3208, %v3202
    %v4313 = vpack.c.b16 %v3209, %v3203
    %v4314 = vpack.c.b16 %v3210, %v3204
    %v4315 = vpack.c.b16 %v3211, %v3205
    %v4316 = vpack.c.b16 %v3212, %v3206
    %v4317 = vpack.c.b16 %v3213, %v3207
    %v4318 = vpack.c.b16 %v3220, %v3214
    %v4319 = vpack.c.b16 %v3221, %v3215
    %v4320 = vpack.c.b16 %v3222, %v3216
    %v4321 = vpack.c.b16 %v3223, %v3217
    %v4322 = vpack.c.b16 %v3224, %v3218
    %v4323 = vpack.c.b16 %v3225, %v3219
    %v4324 = vpack.c.b16 %v3232, %v3226
    %v4325 = vpack.c.b16 %v3233, %v3227
    %v4326 = vpack.c.b16 %v3234, %v3228
    %v4327 = vpack.c.b16 %v3235, %v3229
    %v4328 = vpack.c.b16 %v3236, %v3230
    %v4329 = vpack.c.b16 %v3237, %v3231
    %v4330 = vpack.c.b16 %v3244, %v3238
    %v4331 = vpack.c.b16 %v3245, %v3239
    %v4332 = vpack.c.b16 %v3246, %v3240
    %v4333 = vpack.c.b16 %v3247, %v3241
    %v4334 = vpack.c.b16 %v3248, %v3242
    %v4335 = vpack.c.b16 %v3249, %v3243
    %v4336 = vpack.c.b16 %v3256, %v3250
    %v4337 = vpack.c.b16 %v3257, %v3251
    %v4338 = vpack.c.b16 %v3258, %v3252
    %v4339 = vpack.c.b16 %v3259, %v3253
    %v4340 = vpack.c.b16 %v3260, %v3254
    %v4341 = vpack.c.b16 %v3261, %v3255
    %v4342 = vpack.c.b16 %v3268, %v3262
    %v4343 = vpack.c.b16 %v3269, %v3263
    %v4344 = vpack.c.b16 %v3270, %v3264
    %v4345 = vpack.c.b16 %v3271, %v3265
    %v4346 = vpack.c.b16 %v3272, %v3266
    %v4347 = vpack.c.b16 %v3273, %v3267
    %v4348 = vpack.c.b16 %v3280, %v3274
    %v4349 = vpack.c.b16 %v3281, %v3275
    %v4350 = vpack.c.b16 %v3282, %v3276
    %v4351 = vpack.c.b16 %v3283, %v3277
    %v4352 = vpack.c.b16 %v3284, %v3278
    %v4353 = vpack.c.b16 %v3285, %v3279
    %v4354 = vpack.c.b16 %v3292, %v3286
    %v4355 = vpack.c.b16 %v3293, %v3287
    %v4356 = vpack.c.b16 %v3294, %v3288
    %v4357 = vpack.c.b16 %v3295, %v3289
    %v4358 = vpack.c.b16 %v3296, %v3290
    %v4359 = vpack.c.b16 %v3297, %v3291
    %v4360 = vpack.c.b16 %v3304, %v3298
    %v4361 = vpack.c.b16 %v3305, %v3299
    %v4362 = vpack.c.b16 %v3306, %v3300
    %v4363 = vpack.c.b16 %v3307, %v3301
    %v4364 = vpack.c.b16 %v3308, %v3302
    %v4365 = vpack.c.b16 %v3309, %v3303
    %v4366 = vpack.c.b16 %v3316, %v3310
    %v4367 = vpack.c.b16 %v3317, %v3311
    %v4368 = vpack.c.b16 %v3318, %v3312
    %v4369 = vpack.c.b16 %v3319, %v3313
    %v4370 = vpack.c.b16 %v3320, %v3314
    %v4371 = vpack.c.b16 %v3321, %v3315
    %v4372 = vpack.c.b16 %v3328, %v3322
    %v4373 = vpack.c.b16 %v3329, %v3323
    %v4374 = vpack.c.b16 %v3330, %v3324
    %v4375 = vpack.c.b16 %v3331, %v3325
    %v4376 = vpack.c.b16 %v3332, %v3326
    %v4377 = vpack.c.b16 %v3333, %v3327
    %v4378 = vpack.c.b16 %v3340, %v3334
    %v4379 = vpack.c.b16 %v3341, %v3335
    %v4380 = vpack.c.b16 %v3342, %v3336
    %v4381 = vpack.c.b16 %v3343, %v3337
    %v4382 = vpack.c.b16 %v3344, %v3338
    %v4383 = vpack.c.b16 %v3345, %v3339
    %v4384 = vpack.c.b16 %v3352, %v3346
    %v4385 = vpack.c.b16 %v3353, %v3347
    %v4386 = vpack.c.b16 %v3354, %v3348
    %v4387 = vpack.c.b16 %v3355, %v3349
    %v4388 = vpack.c.b16 %v3356, %v3350
    %v4389 = vpack.c.b16 %v3357, %v3351
    %v4390 = vpack.c.b16 %v3364, %v3358
    %v4391 = vpack.c.b16 %v3365, %v3359
    %v4392 = vpack.c.b16 %v3366, %v3360
    %v4393 = vpack.c.b16 %v3367, %v3361
    %v4394 = vpack.c.b16 %v3368, %v3362
    %v4395 = vpack.c.b16 %v3369, %v3363
    %v4396 = vpack.c.b16 %v3376, %v3370
    %v4397 = vpack.c.b16 %v3377, %v3371
    %v4398 = vpack.c.b16 %v3378, %v3372
    %v4399 = vpack.c.b16 %v3379, %v3373
    %v4400 = vpack.c.b16 %v3380, %v3374
    %v4401 = vpack.c.b16 %v3381, %v3375
    %v4402 = vpack.c.b16 %v3388, %v3382
    %v4403 = vpack.c.b16 %v3389, %v3383
    %v4404 = vpack.c.b16 %v3390, %v3384
    %v4405 = vpack.c.b16 %v3391, %v3385
    %v4406 = vpack.c.b16 %v3392, %v3386
    %v4407 = vpack.c.b16 %v3393, %v3387
    %v4408 = vpack.c.b16 %v3400, %v3394
    %v4409 = vpack.c.b16 %v3401, %v3395
    %v4410 = vpack.c.b16 %v3402, %v3396
    %v4411 = vpack.c.b16 %v3403, %v3397
    %v4412 = vpack.c.b16 %v3404, %v3398
    %v4413 = vpack.c.b16 %v3405, %v3399
    %v4414 = vpack.c.b16 %v3412, %v3406
    %v4415 = vpack.c.b16 %v3413, %v3407
    %v4416 = vpack.c.b16 %v3414, %v3408
    %v4417 = vpack.c.b16 %v3415, %v3409
    %v4418 = vpack.c.b16 %v3416, %v3410
    %v4419 = vpack.c.b16 %v3417, %v3411
    %v4420 = vpack.c.b16 %v3424, %v3418
    %v4421 = vpack.c.b16 %v3425, %v3419
    %v4422 = vpack.c.b16 %v3426, %v3420
    %v4423 = vpack.c.b16 %v3427, %v3421
    %v4424 = vpack.c.b16 %v3428, %v3422
    %v4425 = vpack.c.b16 %v3429, %v3423
    %v4426 = vpack.c.b16 %v3436, %v3430
    %v4427 = vpack.c.b16 %v3437, %v3431
    %v4428 = vpack.c.b16 %v3438, %v3432
    %v4429 = vpack.c.b16 %v3439, %v3433
    %v4430 = vpack.c.b16 %v3440, %v3434
    %v4431 = vpack.c.b16 %v3441, %v3435
    %v4432 = vpack.c.b16 %v3448, %v3442
    %v4433 = vpack.c.b16 %v3449, %v3443
    %v4434 = vpack.c.b16 %v3450, %v3444
    %v4435 = vpack.c.b16 %v3451, %v3445
    %v4436 = vpack.c.b16 %v3452, %v3446
    %v4437 = vpack.c.b16 %v3453, %v3447
    %v4438 = vpack.c.b16 %v3460, %v3454
    %v4439 = vpack.c.b16 %v3461, %v3455
    %v4440 = vpack.c.b16 %v3462, %v3456
    %v4441 = vpack.c.b16 %v3463, %v3457
    %v4442 = vpack.c.b16 %v3464, %v3458
    %v4443 = vpack.c.b16 %v3465, %v3459
    %v4444 = vpack.c.b16 %v3472, %v3466
    %v4445 = vpack.c.b16 %v3473, %v3467
    %v4446 = vpack.c.b16 %v3474, %v3468
    %v4447 = vpack.c.b16 %v3475, %v3469
    %v4448 = vpack.c.b16 %v3476, %v3470
    %v4449 = vpack.c.b16 %v3477, %v3471
    %v4450 = vpack.c.b16 %v3484, %v3478
    %v4451 = vpack.c.b16 %v3485, %v3479
    %v4452 = vpack.c.b16 %v3486, %v3480
    %v4453 = vpack.c.b16 %v3487, %v3481
    %v4454 = vpack.c.b16 %v3488, %v3482
    %v4455 = vpack.c.b16 %v3489, %v3483
    %v4456 = vpack.c.b16 %v3496, %v3490
    %v4457 = vpack.c.b16 %v3497, %v3491
    %v4458 = vpack.c.b16 %v3498, %v3492
    %v4459 = vpack.c.b16 %v3499, %v3493
    %v4460 = vpack.c.b16 %v3500, %v3494
    %v4461 = vpack.c.b16 %v3501, %v3495
    %v4462 = vpack.c.b16 %v3508, %v3502
    %v4463 = vpack.c.b16 %v3509, %v3503
    %v4464 = vpack.c.b16 %v3510, %v3504
    %v4465 = vpack.c.b16 %v3511, %v3505
    %v4466 = vpack.c.b16 %v3512, %v3506
    %v4467 = vpack.c.b16 %v3513, %v3507
    %v4468 = vpack.c.b16 %v3520, %v3514
    %v4469 = vpack.c.b16 %v3521, %v3515
    %v4470 = vpack.c.b16 %v3522, %v3516
    %v4471 = vpack.c.b16 %v3523, %v3517
    %v4472 = vpack.c.b16 %v3524, %v3518
    %v4473 = vpack.c.b16 %v3525, %v3519
    %v4474 = vpack.c.b16 %v3532, %v3526
    %v4475 = vpack.c.b16 %v3533, %v3527
    %v4476 = vpack.c.b16 %v3534, %v3528
    %v4477 = vpack.c.b16 %v3535, %v3529
    %v4478 = vpack.c.b16 %v3536, %v3530
    %v4479 = vpack.c.b16 %v3537, %v3531
    %v4480 = vpack.c.b16 %v3544, %v3538
    %v4481 = vpack.c.b16 %v3545, %v3539
    %v4482 = vpack.c.b16 %v3546, %v3540
    %v4483 = vpack.c.b16 %v3547, %v3541
    %v4484 = vpack.c.b16 %v3548, %v3542
    %v4485 = vpack.c.b16 %v3549, %v3543
    %v4486 = vpack.c.b16 %v3556, %v3550
    %v4487 = vpack.c.b16 %v3557, %v3551
    %v4488 = vpack.c.b16 %v3558, %v3552
    %v4489 = vpack.c.b16 %v3559, %v3553
    %v4490 = vpack.c.b16 %v3560, %v3554
    %v4491 = vpack.c.b16 %v3561, %v3555
    %v4492 = vpack.c.b16 %v3568, %v3562
    %v4493 = vpack.c.b16 %v3569, %v3563
    %v4494 = vpack.c.b16 %v3570, %v3564
    %v4495 = vpack.c.b16 %v3571, %v3565
    %v4496 = vpack.c.b16 %v3572, %v3566
    %v4497 = vpack.c.b16 %v3573, %v3567
    %v4498 = vpack.c.b16 %v3580, %v3574
    %v4499 = vpack.c.b16 %v3581, %v3575
    %v4500 = vpack.c.b16 %v3582, %v3576
    %v4501 = vpack.c.b16 %v3583, %v3577
    %v4502 = vpack.c.b16 %v3584, %v3578
    %v4503 = vpack.c.b16 %v3585, %v3579
    %v4504 = vpack.c.b16 %v3592, %v3586
    %v4505 = vpack.c.b16 %v3593, %v3587
    %v4506 = vpack.c.b16 %v3594, %v3588
    %v4507 = vpack.c.b16 %v3595, %v3589
    %v4508 = vpack.c.b16 %v3596, %v3590
    %v4509 = vpack.c.b16 %v3597, %v3591
    %v4510 = vpack.c.b16 %v3604, %v3598
    %v4511 = vpack.c.b16 %v3605, %v3599
    %v4512 = vpack.c.b16 %v3606, %v3600
    %v4513 = vpack.c.b16 %v3607, %v3601
    %v4514 = vpack.c.b16 %v3608, %v3602
    %v4515 = vpack.c.b16 %v3609, %v3603
    %v4516 = vpack.c.b16 %v3616, %v3610
    %v4517 = vpack.c.b16 %v3617, %v3611
    %v4518 = vpack.c.b16 %v3618, %v3612
    %v4519 = vpack.c.b16 %v3619, %v3613
    %v4520 = vpack.c.b16 %v3620, %v3614
    %v4521 = vpack.c.b16 %v3621, %v3615
    %v4522 = vpack.c.b16 %v3628, %v3622
    %v4523 = vpack.c.b16 %v3629, %v3623
    %v4524 = vpack.c.b16 %v3630, %v3624
    %v4525 = vpack.c.b16 %v3631, %v3625
    %v4526 = vpack.c.b16 %v3632, %v3626
    %v4527 = vpack.c.b16 %v3633, %v3627
    %v4528 = vpack.c.b16 %v3640, %v3634
    %v4529 = vpack.c.b16 %v3641, %v3635
    %v4530 = vpack.c.b16 %v3642, %v3636
    %v4531 = vpack.c.b16 %v3643, %v3637
    %v4532 = vpack.c.b16 %v3644, %v3638
    %v4533 = vpack.c.b16 %v3645, %v3639
    %v4534 = vpack.c.b16 %v3652, %v3646
    %v4535 = vpack.c.b16 %v3653, %v3647
    %v4536 = vpack.c.b16 %v3654, %v3648
    %v4537 = vpack.c.b16 %v3655, %v3649
    %v4538 = vpack.c.b16 %v3656, %v3650
    %v4539 = vpack.c.b16 %v3657, %v3651
    %v4540 = vpack.c.b16 %v3664, %v3658
    %v4541 = vpack.c.b16 %v3665, %v3659
    %v4542 = vpack.c.b16 %v3666, %v3660
    %v4543 = vpack.c.b16 %v3667, %v3661
    %v4544 = vpack.c.b16 %v3668, %v3662
    %v4545 = vpack.c.b16 %v3669, %v3663
    %v4546 = vpack.c.b16 %v3676, %v3670
    %v4547 = vpack.c.b16 %v3677, %v3671
    %v4548 = vpack.c.b16 %v3678, %v3672
    %v4549 = vpack.c.b16 %v3679, %v3673
    %v4550 = vpack.c.b16 %v3680, %v3674
    %v4551 = vpack.c.b16 %v3681, %v3675
    %v4552 = vpack.c.b16 %v3688, %v3682
    %v4553 = vpack.c.b16 %v3689, %v3683
    %v4554 = vpack.c.b16 %v3690, %v3684
    %v4555 = vpack.c.b16 %v3691, %v3685
    %v4556 = vpack.c.b16 %v3692, %v3686
    %v4557 = vpack.c.b16 %v3693, %v3687
    %5422 = vmatpush.bf16.msra.mxu0 %v3736
    %5423 = vmatpush.bf16.msra.mxu0 %v3730
    %5424 = vmatpush.bf16.msra.mxu0 %v3724
    %5425 = vmatpush.bf16.msra.mxu0 %v3718
    %5426 = vmatpush.bf16.msra.mxu0 %v3712
    %5427 = vmatpush.bf16.msra.mxu0 %v3706
    %5428 = vmatpush.bf16.msra.mxu0 %v3700
    %5429 = vmatpush.bf16.msra.mxu0 %v3694
    %5430 = vmatmul.bf16.gmra.mxu0 %v1030
    %v5431 = vpop.f32.mrf.mxu0
    %v5432 = vadd.f32 %v937, %v5431
    %v5433 = vpop.f32.mrf.mxu0
    %v5434 = vadd.f32 %v937, %v5433
    %5435 = vmatmul.bf16.gmra.mxu0 %v1048
    %v5436 = vpop.f32.mrf.mxu0
    %v5437 = vadd.f32 %v937, %v5436
    %v5438 = vpop.f32.mrf.mxu0
    %5439 = vdwg.mxu0
    %5440 = vmatpush.bf16.msra.mxu0 %v3784
    %5441 = vmatpush.bf16.msra.mxu0 %v3778
    %5442 = vmatpush.bf16.msra.mxu0 %v3772
    %5443 = vmatpush.bf16.msra.mxu0 %v3766
    %5444 = vmatpush.bf16.msra.mxu0 %v3760
    %5445 = vmatpush.bf16.msra.mxu0 %v3754
    %5446 = vmatpush.bf16.msra.mxu0 %v3748
    %5447 = vmatpush.bf16.msra.mxu0 %v3742
    %5448 = vmatmul.bf16.gmra.mxu0 %v1031
    %v5449 = vpop.f32.mrf.mxu0
    %v5450 = vadd.f32 %v5432, %v5449
    %v5451 = vpop.f32.mrf.mxu0
    %v5452 = vadd.f32 %v5434, %v5451
    %5453 = vmatmul.bf16.gmra.mxu0 %v1049
    %v5454 = vpop.f32.mrf.mxu0
    %v5455 = vadd.f32 %v5437, %v5454
    %v5456 = vpop.f32.mrf.mxu0
    %5457 = vdwg.mxu0
    %5458 = vmatpush.bf16.msra.mxu0 %v3832
    %5459 = vmatpush.bf16.msra.mxu0 %v3826
    %5460 = vmatpush.bf16.msra.mxu0 %v3820
    %5461 = vmatpush.bf16.msra.mxu0 %v3814
    %5462 = vmatpush.bf16.msra.mxu0 %v3808
    %5463 = vmatpush.bf16.msra.mxu0 %v3802
    %5464 = vmatpush.bf16.msra.mxu0 %v3796
    %5465 = vmatpush.bf16.msra.mxu0 %v3790
    %5466 = vmatmul.bf16.gmra.mxu0 %v1032
    %v5467 = vpop.f32.mrf.mxu0
    %v5468 = vadd.f32 %v5450, %v5467
    %v5469 = vpop.f32.mrf.mxu0
    %v5470 = vadd.f32 %v5452, %v5469
    %5471 = vmatmul.bf16.gmra.mxu0 %v1050
    %v5472 = vpop.f32.mrf.mxu0
    %v5473 = vadd.f32 %v5455, %v5472
    %v5474 = vpop.f32.mrf.mxu0
    %5475 = vdwg.mxu0
    %5476 = vmatpush.bf16.msra.mxu0 %v3880
    %5477 = vmatpush.bf16.msra.mxu0 %v3874
    %5478 = vmatpush.bf16.msra.mxu0 %v3868
    %5479 = vmatpush.bf16.msra.mxu0 %v3862
    %5480 = vmatpush.bf16.msra.mxu0 %v3856
    %5481 = vmatpush.bf16.msra.mxu0 %v3850
    %5482 = vmatpush.bf16.msra.mxu0 %v3844
    %5483 = vmatpush.bf16.msra.mxu0 %v3838
    %5484 = vmatmul.bf16.gmra.mxu0 %v1033
    %v5485 = vpop.f32.mrf.mxu0
    %v5486 = vadd.f32 %v5468, %v5485
    %v5487 = vpop.f32.mrf.mxu0
    %v5488 = vadd.f32 %v5470, %v5487
    %5489 = vmatmul.bf16.gmra.mxu0 %v1051
    %v5490 = vpop.f32.mrf.mxu0
    %v5491 = vadd.f32 %v5473, %v5490
    %v5492 = vpop.f32.mrf.mxu0
    %5493 = vdwg.mxu0
    %5494 = vmatpush.bf16.msra.mxu0 %v3928
    %5495 = vmatpush.bf16.msra.mxu0 %v3922
    %5496 = vmatpush.bf16.msra.mxu0 %v3916
    %5497 = vmatpush.bf16.msra.mxu0 %v3910
    %5498 = vmatpush.bf16.msra.mxu0 %v3904
    %5499 = vmatpush.bf16.msra.mxu0 %v3898
    %5500 = vmatpush.bf16.msra.mxu0 %v3892
    %5501 = vmatpush.bf16.msra.mxu0 %v3886
    %5502 = vmatmul.bf16.gmra.mxu0 %v1034
    %v5503 = vpop.f32.mrf.mxu0
    %v5504 = vadd.f32 %v5486, %v5503
    %v5505 = vpop.f32.mrf.mxu0
    %v5506 = vadd.f32 %v5488, %v5505
    %5507 = vmatmul.bf16.gmra.mxu0 %v1052
    %v5508 = vpop.f32.mrf.mxu0
    %v5509 = vadd.f32 %v5491, %v5508
    %v5510 = vpop.f32.mrf.mxu0
    %5511 = vdwg.mxu0
    %5512 = vmatpush.bf16.msra.mxu0 %v3976
    %5513 = vmatpush.bf16.msra.mxu0 %v3970
    %5514 = vmatpush.bf16.msra.mxu0 %v3964
    %5515 = vmatpush.bf16.msra.mxu0 %v3958
    %5516 = vmatpush.bf16.msra.mxu0 %v3952
    %5517 = vmatpush.bf16.msra.mxu0 %v3946
    %5518 = vmatpush.bf16.msra.mxu0 %v3940
    %5519 = vmatpush.bf16.msra.mxu0 %v3934
    %5520 = vmatmul.bf16.gmra.mxu0 %v1035
    %v5521 = vpop.f32.mrf.mxu0
    %v5522 = vadd.f32 %v5504, %v5521
    %v5523 = vpop.f32.mrf.mxu0
    %v5524 = vadd.f32 %v5506, %v5523
    %5525 = vmatmul.bf16.gmra.mxu0 %v1053
    %v5526 = vpop.f32.mrf.mxu0
    %v5527 = vadd.f32 %v5509, %v5526
    %v5528 = vpop.f32.mrf.mxu0
    %5529 = vdwg.mxu0
    %5530 = vmatpush.bf16.msra.mxu0 %v4024
    %5531 = vmatpush.bf16.msra.mxu0 %v4018
    %5532 = vmatpush.bf16.msra.mxu0 %v4012
    %5533 = vmatpush.bf16.msra.mxu0 %v4006
    %5534 = vmatpush.bf16.msra.mxu0 %v4000
    %5535 = vmatpush.bf16.msra.mxu0 %v3994
    %5536 = vmatpush.bf16.msra.mxu0 %v3988
    %5537 = vmatpush.bf16.msra.mxu0 %v3982
    %5538 = vmatmul.bf16.gmra.mxu0 %v1036
    %v5539 = vpop.f32.mrf.mxu0
    %v5540 = vadd.f32 %v5522, %v5539
    %v5541 = vpop.f32.mrf.mxu0
    %v5542 = vadd.f32 %v5524, %v5541
    %5543 = vmatmul.bf16.gmra.mxu0 %v1054
    %v5544 = vpop.f32.mrf.mxu0
    %v5545 = vadd.f32 %v5527, %v5544
    %v5546 = vpop.f32.mrf.mxu0
    %5547 = vdwg.mxu0
    %5548 = vmatpush.bf16.msra.mxu0 %v4072
    %5549 = vmatpush.bf16.msra.mxu0 %v4066
    %5550 = vmatpush.bf16.msra.mxu0 %v4060
    %5551 = vmatpush.bf16.msra.mxu0 %v4054
    %5552 = vmatpush.bf16.msra.mxu0 %v4048
    %5553 = vmatpush.bf16.msra.mxu0 %v4042
    %5554 = vmatpush.bf16.msra.mxu0 %v4036
    %5555 = vmatpush.bf16.msra.mxu0 %v4030
    %5556 = vmatmul.bf16.gmra.mxu0 %v1037
    %v5557 = vpop.f32.mrf.mxu0
    %v5558 = vadd.f32 %v5540, %v5557
    %v5559 = vpop.f32.mrf.mxu0
    %v5560 = vadd.f32 %v5542, %v5559
    %5561 = vmatmul.bf16.gmra.mxu0 %v1055
    %v5562 = vpop.f32.mrf.mxu0
    %v5563 = vadd.f32 %v5545, %v5562
    %v5564 = vpop.f32.mrf.mxu0
    %5565 = vdwg.mxu0
    %5566 = vmatpush.bf16.msra.mxu0 %v4120
    %5567 = vmatpush.bf16.msra.mxu0 %v4114
    %5568 = vmatpush.bf16.msra.mxu0 %v4108
    %5569 = vmatpush.bf16.msra.mxu0 %v4102
    %5570 = vmatpush.bf16.msra.mxu0 %v4096
    %5571 = vmatpush.bf16.msra.mxu0 %v4090
    %5572 = vmatpush.bf16.msra.mxu0 %v4084
    %5573 = vmatpush.bf16.msra.mxu0 %v4078
    %5574 = vmatmul.bf16.gmra.mxu0 %v1038
    %v5575 = vpop.f32.mrf.mxu0
    %v5576 = vadd.f32 %v5558, %v5575
    %v5577 = vpop.f32.mrf.mxu0
    %v5578 = vadd.f32 %v5560, %v5577
    %5579 = vmatmul.bf16.gmra.mxu0 %v1056
    %v5580 = vpop.f32.mrf.mxu0
    %v5581 = vadd.f32 %v5563, %v5580
    %v5582 = vpop.f32.mrf.mxu0
    %5583 = vdwg.mxu0
    %5584 = vmatpush.bf16.msra.mxu0 %v4168
    %5585 = vmatpush.bf16.msra.mxu0 %v4162
    %5586 = vmatpush.bf16.msra.mxu0 %v4156
    %5587 = vmatpush.bf16.msra.mxu0 %v4150
    %5588 = vmatpush.bf16.msra.mxu0 %v4144
    %5589 = vmatpush.bf16.msra.mxu0 %v4138
    %5590 = vmatpush.bf16.msra.mxu0 %v4132
    %5591 = vmatpush.bf16.msra.mxu0 %v4126
    %5592 = vmatmul.bf16.gmra.mxu0 %v1039
    %v5593 = vpop.f32.mrf.mxu0
    %v5594 = vadd.f32 %v5576, %v5593
    %v5595 = vpop.f32.mrf.mxu0
    %v5596 = vadd.f32 %v5578, %v5595
    %5597 = vmatmul.bf16.gmra.mxu0 %v1057
    %v5598 = vpop.f32.mrf.mxu0
    %v5599 = vadd.f32 %v5581, %v5598
    %v5600 = vpop.f32.mrf.mxu0
    %5601 = vdwg.mxu0
    %5602 = vmatpush.bf16.msra.mxu0 %v4216
    %5603 = vmatpush.bf16.msra.mxu0 %v4210
    %5604 = vmatpush.bf16.msra.mxu0 %v4204
    %5605 = vmatpush.bf16.msra.mxu0 %v4198
    %5606 = vmatpush.bf16.msra.mxu0 %v4192
    %5607 = vmatpush.bf16.msra.mxu0 %v4186
    %5608 = vmatpush.bf16.msra.mxu0 %v4180
    %5609 = vmatpush.bf16.msra.mxu0 %v4174
    %5610 = vmatmul.bf16.gmra.mxu0 %v1040
    %v5611 = vpop.f32.mrf.mxu0
    %v5612 = vadd.f32 %v5594, %v5611
    %v5613 = vpop.f32.mrf.mxu0
    %v5614 = vadd.f32 %v5596, %v5613
    %5615 = vmatmul.bf16.gmra.mxu0 %v1058
    %v5616 = vpop.f32.mrf.mxu0
    %v5617 = vadd.f32 %v5599, %v5616
    %v5618 = vpop.f32.mrf.mxu0
    %5619 = vdwg.mxu0
    %5620 = vmatpush.bf16.msra.mxu0 %v4264
    %5621 = vmatpush.bf16.msra.mxu0 %v4258
    %5622 = vmatpush.bf16.msra.mxu0 %v4252
    %5623 = vmatpush.bf16.msra.mxu0 %v4246
    %5624 = vmatpush.bf16.msra.mxu0 %v4240
    %5625 = vmatpush.bf16.msra.mxu0 %v4234
    %5626 = vmatpush.bf16.msra.mxu0 %v4228
    %5627 = vmatpush.bf16.msra.mxu0 %v4222
    %5628 = vmatmul.bf16.gmra.mxu0 %v1041
    %v5629 = vpop.f32.mrf.mxu0
    %v5630 = vadd.f32 %v5612, %v5629
    %v5631 = vpop.f32.mrf.mxu0
    %v5632 = vadd.f32 %v5614, %v5631
    %5633 = vmatmul.bf16.gmra.mxu0 %v1059
    %v5634 = vpop.f32.mrf.mxu0
    %v5635 = vadd.f32 %v5617, %v5634
    %v5636 = vpop.f32.mrf.mxu0
    %5637 = vdwg.mxu0
    %5638 = vmatpush.bf16.msra.mxu0 %v4312
    %5639 = vmatpush.bf16.msra.mxu0 %v4306
    %5640 = vmatpush.bf16.msra.mxu0 %v4300
    %5641 = vmatpush.bf16.msra.mxu0 %v4294
    %5642 = vmatpush.bf16.msra.mxu0 %v4288
    %5643 = vmatpush.bf16.msra.mxu0 %v4282
    %5644 = vmatpush.bf16.msra.mxu0 %v4276
    %5645 = vmatpush.bf16.msra.mxu0 %v4270
    %5646 = vmatmul.bf16.gmra.mxu0 %v1042
    %v5647 = vpop.f32.mrf.mxu0
    %v5648 = vadd.f32 %v5630, %v5647
    %v5649 = vpop.f32.mrf.mxu0
    %v5650 = vadd.f32 %v5632, %v5649
    %5651 = vmatmul.bf16.gmra.mxu0 %v1060
    %v5652 = vpop.f32.mrf.mxu0
    %v5653 = vadd.f32 %v5635, %v5652
    %v5654 = vpop.f32.mrf.mxu0
    %5655 = vdwg.mxu0
    %5656 = vmatpush.bf16.msra.mxu0 %v4360
    %5657 = vmatpush.bf16.msra.mxu0 %v4354
    %5658 = vmatpush.bf16.msra.mxu0 %v4348
    %5659 = vmatpush.bf16.msra.mxu0 %v4342
    %5660 = vmatpush.bf16.msra.mxu0 %v4336
    %5661 = vmatpush.bf16.msra.mxu0 %v4330
    %5662 = vmatpush.bf16.msra.mxu0 %v4324
    %5663 = vmatpush.bf16.msra.mxu0 %v4318
    %5664 = vmatmul.bf16.gmra.mxu0 %v1043
    %v5665 = vpop.f32.mrf.mxu0
    %v5666 = vadd.f32 %v5648, %v5665
    %v5667 = vpop.f32.mrf.mxu0
    %v5668 = vadd.f32 %v5650, %v5667
    %5669 = vmatmul.bf16.gmra.mxu0 %v1061
    %v5670 = vpop.f32.mrf.mxu0
    %v5671 = vadd.f32 %v5653, %v5670
    %v5672 = vpop.f32.mrf.mxu0
    %5673 = vdwg.mxu0
    %5674 = vmatpush.bf16.msra.mxu0 %v4408
    %5675 = vmatpush.bf16.msra.mxu0 %v4402
    %5676 = vmatpush.bf16.msra.mxu0 %v4396
    %5677 = vmatpush.bf16.msra.mxu0 %v4390
    %5678 = vmatpush.bf16.msra.mxu0 %v4384
    %5679 = vmatpush.bf16.msra.mxu0 %v4378
    %5680 = vmatpush.bf16.msra.mxu0 %v4372
    %5681 = vmatpush.bf16.msra.mxu0 %v4366
    %5682 = vmatmul.bf16.gmra.mxu0 %v1044
    %v5683 = vpop.f32.mrf.mxu0
    %v5684 = vadd.f32 %v5666, %v5683
    %v5685 = vpop.f32.mrf.mxu0
    %v5686 = vadd.f32 %v5668, %v5685
    %5687 = vmatmul.bf16.gmra.mxu0 %v1062
    %v5688 = vpop.f32.mrf.mxu0
    %v5689 = vadd.f32 %v5671, %v5688
    %v5690 = vpop.f32.mrf.mxu0
    %5691 = vdwg.mxu0
    %5692 = vmatpush.bf16.msra.mxu0 %v4456
    %5693 = vmatpush.bf16.msra.mxu0 %v4450
    %5694 = vmatpush.bf16.msra.mxu0 %v4444
    %5695 = vmatpush.bf16.msra.mxu0 %v4438
    %5696 = vmatpush.bf16.msra.mxu0 %v4432
    %5697 = vmatpush.bf16.msra.mxu0 %v4426
    %5698 = vmatpush.bf16.msra.mxu0 %v4420
    %5699 = vmatpush.bf16.msra.mxu0 %v4414
    %5700 = vmatmul.bf16.gmra.mxu0 %v1045
    %v5701 = vpop.f32.mrf.mxu0
    %v5702 = vadd.f32 %v5684, %v5701
    %v5703 = vpop.f32.mrf.mxu0
    %v5704 = vadd.f32 %v5686, %v5703
    %5705 = vmatmul.bf16.gmra.mxu0 %v1063
    %v5706 = vpop.f32.mrf.mxu0
    %v5707 = vadd.f32 %v5689, %v5706
    %v5708 = vpop.f32.mrf.mxu0
    %5709 = vdwg.mxu0
    %5710 = vmatpush.bf16.msra.mxu0 %v4504
    %5711 = vmatpush.bf16.msra.mxu0 %v4498
    %5712 = vmatpush.bf16.msra.mxu0 %v4492
    %5713 = vmatpush.bf16.msra.mxu0 %v4486
    %5714 = vmatpush.bf16.msra.mxu0 %v4480
    %5715 = vmatpush.bf16.msra.mxu0 %v4474
    %5716 = vmatpush.bf16.msra.mxu0 %v4468
    %5717 = vmatpush.bf16.msra.mxu0 %v4462
    %5718 = vmatmul.bf16.gmra.mxu0 %v1046
    %v5719 = vpop.f32.mrf.mxu0
    %v5720 = vadd.f32 %v5702, %v5719
    %v5721 = vpop.f32.mrf.mxu0
    %v5722 = vadd.f32 %v5704, %v5721
    %5723 = vmatmul.bf16.gmra.mxu0 %v1064
    %v5724 = vpop.f32.mrf.mxu0
    %v5725 = vadd.f32 %v5707, %v5724
    %v5726 = vpop.f32.mrf.mxu0
    %5727 = vdwg.mxu0
    %5728 = vmatpush.bf16.msra.mxu0 %v4552
    %5729 = vmatpush.bf16.msra.mxu0 %v4546
    %5730 = vmatpush.bf16.msra.mxu0 %v4540
    %5731 = vmatpush.bf16.msra.mxu0 %v4534
    %5732 = vmatpush.bf16.msra.mxu0 %v4528
    %5733 = vmatpush.bf16.msra.mxu0 %v4522
    %5734 = vmatpush.bf16.msra.mxu0 %v4516
    %5735 = vmatpush.bf16.msra.mxu0 %v4510
    %5736 = vmatmul.bf16.gmra.mxu0 %v1047
    %v5737 = vpop.f32.mrf.mxu0
    %v5738 = vadd.f32 %v5720, %v5737
    %v5739 = vpop.f32.mrf.mxu0
    %v5740 = vadd.f32 %v5722, %v5739
    %5741 = vmatmul.bf16.gmra.mxu0 %v1065
    %v5742 = vpop.f32.mrf.mxu0
    %v5743 = vadd.f32 %v5725, %v5742
    %v5744 = vpop.f32.mrf.mxu0
    %5745 = vdwg.mxu0
    %5746 = vmatpush.bf16.msra.mxu0 %v3737
    %5747 = vmatpush.bf16.msra.mxu0 %v3731
    %5748 = vmatpush.bf16.msra.mxu0 %v3725
    %5749 = vmatpush.bf16.msra.mxu0 %v3719
    %5750 = vmatpush.bf16.msra.mxu0 %v3713
    %5751 = vmatpush.bf16.msra.mxu0 %v3707
    %5752 = vmatpush.bf16.msra.mxu0 %v3701
    %5753 = vmatpush.bf16.msra.mxu0 %v3695
    %5754 = vmatmul.bf16.gmra.mxu0 %v1030
    %v5755 = vpop.f32.mrf.mxu0
    %v5756 = vadd.f32 %v938, %v5755
    %v5757 = vpop.f32.mrf.mxu0
    %v5758 = vadd.f32 %v938, %v5757
    %5759 = vmatmul.bf16.gmra.mxu0 %v1048
    %v5760 = vpop.f32.mrf.mxu0
    %v5761 = vadd.f32 %v938, %v5760
    %v5762 = vpop.f32.mrf.mxu0
    %5763 = vdwg.mxu0
    %5764 = vmatpush.bf16.msra.mxu0 %v3785
    %5765 = vmatpush.bf16.msra.mxu0 %v3779
    %5766 = vmatpush.bf16.msra.mxu0 %v3773
    %5767 = vmatpush.bf16.msra.mxu0 %v3767
    %5768 = vmatpush.bf16.msra.mxu0 %v3761
    %5769 = vmatpush.bf16.msra.mxu0 %v3755
    %5770 = vmatpush.bf16.msra.mxu0 %v3749
    %5771 = vmatpush.bf16.msra.mxu0 %v3743
    %5772 = vmatmul.bf16.gmra.mxu0 %v1031
    %v5773 = vpop.f32.mrf.mxu0
    %v5774 = vadd.f32 %v5756, %v5773
    %v5775 = vpop.f32.mrf.mxu0
    %v5776 = vadd.f32 %v5758, %v5775
    %5777 = vmatmul.bf16.gmra.mxu0 %v1049
    %v5778 = vpop.f32.mrf.mxu0
    %v5779 = vadd.f32 %v5761, %v5778
    %v5780 = vpop.f32.mrf.mxu0
    %5781 = vdwg.mxu0
    %5782 = vmatpush.bf16.msra.mxu0 %v3833
    %5783 = vmatpush.bf16.msra.mxu0 %v3827
    %5784 = vmatpush.bf16.msra.mxu0 %v3821
    %5785 = vmatpush.bf16.msra.mxu0 %v3815
    %5786 = vmatpush.bf16.msra.mxu0 %v3809
    %5787 = vmatpush.bf16.msra.mxu0 %v3803
    %5788 = vmatpush.bf16.msra.mxu0 %v3797
    %5789 = vmatpush.bf16.msra.mxu0 %v3791
    %5790 = vmatmul.bf16.gmra.mxu0 %v1032
    %v5791 = vpop.f32.mrf.mxu0
    %v5792 = vadd.f32 %v5774, %v5791
    %v5793 = vpop.f32.mrf.mxu0
    %v5794 = vadd.f32 %v5776, %v5793
    %5795 = vmatmul.bf16.gmra.mxu0 %v1050
    %v5796 = vpop.f32.mrf.mxu0
    %v5797 = vadd.f32 %v5779, %v5796
    %v5798 = vpop.f32.mrf.mxu0
    %5799 = vdwg.mxu0
    %5800 = vmatpush.bf16.msra.mxu0 %v3881
    %5801 = vmatpush.bf16.msra.mxu0 %v3875
    %5802 = vmatpush.bf16.msra.mxu0 %v3869
    %5803 = vmatpush.bf16.msra.mxu0 %v3863
    %5804 = vmatpush.bf16.msra.mxu0 %v3857
    %5805 = vmatpush.bf16.msra.mxu0 %v3851
    %5806 = vmatpush.bf16.msra.mxu0 %v3845
    %5807 = vmatpush.bf16.msra.mxu0 %v3839
    %5808 = vmatmul.bf16.gmra.mxu0 %v1033
    %v5809 = vpop.f32.mrf.mxu0
    %v5810 = vadd.f32 %v5792, %v5809
    %v5811 = vpop.f32.mrf.mxu0
    %v5812 = vadd.f32 %v5794, %v5811
    %5813 = vmatmul.bf16.gmra.mxu0 %v1051
    %v5814 = vpop.f32.mrf.mxu0
    %v5815 = vadd.f32 %v5797, %v5814
    %v5816 = vpop.f32.mrf.mxu0
    %5817 = vdwg.mxu0
    %5818 = vmatpush.bf16.msra.mxu0 %v3929
    %5819 = vmatpush.bf16.msra.mxu0 %v3923
    %5820 = vmatpush.bf16.msra.mxu0 %v3917
    %5821 = vmatpush.bf16.msra.mxu0 %v3911
    %5822 = vmatpush.bf16.msra.mxu0 %v3905
    %5823 = vmatpush.bf16.msra.mxu0 %v3899
    %5824 = vmatpush.bf16.msra.mxu0 %v3893
    %5825 = vmatpush.bf16.msra.mxu0 %v3887
    %5826 = vmatmul.bf16.gmra.mxu0 %v1034
    %v5827 = vpop.f32.mrf.mxu0
    %v5828 = vadd.f32 %v5810, %v5827
    %v5829 = vpop.f32.mrf.mxu0
    %v5830 = vadd.f32 %v5812, %v5829
    %5831 = vmatmul.bf16.gmra.mxu0 %v1052
    %v5832 = vpop.f32.mrf.mxu0
    %v5833 = vadd.f32 %v5815, %v5832
    %v5834 = vpop.f32.mrf.mxu0
    %5835 = vdwg.mxu0
    %5836 = vmatpush.bf16.msra.mxu0 %v3977
    %5837 = vmatpush.bf16.msra.mxu0 %v3971
    %5838 = vmatpush.bf16.msra.mxu0 %v3965
    %5839 = vmatpush.bf16.msra.mxu0 %v3959
    %5840 = vmatpush.bf16.msra.mxu0 %v3953
    %5841 = vmatpush.bf16.msra.mxu0 %v3947
    %5842 = vmatpush.bf16.msra.mxu0 %v3941
    %5843 = vmatpush.bf16.msra.mxu0 %v3935
    %5844 = vmatmul.bf16.gmra.mxu0 %v1035
    %v5845 = vpop.f32.mrf.mxu0
    %v5846 = vadd.f32 %v5828, %v5845
    %v5847 = vpop.f32.mrf.mxu0
    %v5848 = vadd.f32 %v5830, %v5847
    %5849 = vmatmul.bf16.gmra.mxu0 %v1053
    %v5850 = vpop.f32.mrf.mxu0
    %v5851 = vadd.f32 %v5833, %v5850
    %v5852 = vpop.f32.mrf.mxu0
    %5853 = vdwg.mxu0
    %5854 = vmatpush.bf16.msra.mxu0 %v4025
    %5855 = vmatpush.bf16.msra.mxu0 %v4019
    %5856 = vmatpush.bf16.msra.mxu0 %v4013
    %5857 = vmatpush.bf16.msra.mxu0 %v4007
    %5858 = vmatpush.bf16.msra.mxu0 %v4001
    %5859 = vmatpush.bf16.msra.mxu0 %v3995
    %5860 = vmatpush.bf16.msra.mxu0 %v3989
    %5861 = vmatpush.bf16.msra.mxu0 %v3983
    %5862 = vmatmul.bf16.gmra.mxu0 %v1036
    %v5863 = vpop.f32.mrf.mxu0
    %v5864 = vadd.f32 %v5846, %v5863
    %v5865 = vpop.f32.mrf.mxu0
    %v5866 = vadd.f32 %v5848, %v5865
    %5867 = vmatmul.bf16.gmra.mxu0 %v1054
    %v5868 = vpop.f32.mrf.mxu0
    %v5869 = vadd.f32 %v5851, %v5868
    %v5870 = vpop.f32.mrf.mxu0
    %5871 = vdwg.mxu0
    %5872 = vmatpush.bf16.msra.mxu0 %v4073
    %5873 = vmatpush.bf16.msra.mxu0 %v4067
    %5874 = vmatpush.bf16.msra.mxu0 %v4061
    %5875 = vmatpush.bf16.msra.mxu0 %v4055
    %5876 = vmatpush.bf16.msra.mxu0 %v4049
    %5877 = vmatpush.bf16.msra.mxu0 %v4043
    %5878 = vmatpush.bf16.msra.mxu0 %v4037
    %5879 = vmatpush.bf16.msra.mxu0 %v4031
    %5880 = vmatmul.bf16.gmra.mxu0 %v1037
    %v5881 = vpop.f32.mrf.mxu0
    %v5882 = vadd.f32 %v5864, %v5881
    %v5883 = vpop.f32.mrf.mxu0
    %v5884 = vadd.f32 %v5866, %v5883
    %5885 = vmatmul.bf16.gmra.mxu0 %v1055
    %v5886 = vpop.f32.mrf.mxu0
    %v5887 = vadd.f32 %v5869, %v5886
    %v5888 = vpop.f32.mrf.mxu0
    %5889 = vdwg.mxu0
    %5890 = vmatpush.bf16.msra.mxu0 %v4121
    %5891 = vmatpush.bf16.msra.mxu0 %v4115
    %5892 = vmatpush.bf16.msra.mxu0 %v4109
    %5893 = vmatpush.bf16.msra.mxu0 %v4103
    %5894 = vmatpush.bf16.msra.mxu0 %v4097
    %5895 = vmatpush.bf16.msra.mxu0 %v4091
    %5896 = vmatpush.bf16.msra.mxu0 %v4085
    %5897 = vmatpush.bf16.msra.mxu0 %v4079
    %5898 = vmatmul.bf16.gmra.mxu0 %v1038
    %v5899 = vpop.f32.mrf.mxu0
    %v5900 = vadd.f32 %v5882, %v5899
    %v5901 = vpop.f32.mrf.mxu0
    %v5902 = vadd.f32 %v5884, %v5901
    %5903 = vmatmul.bf16.gmra.mxu0 %v1056
    %v5904 = vpop.f32.mrf.mxu0
    %v5905 = vadd.f32 %v5887, %v5904
    %v5906 = vpop.f32.mrf.mxu0
    %5907 = vdwg.mxu0
    %5908 = vmatpush.bf16.msra.mxu0 %v4169
    %5909 = vmatpush.bf16.msra.mxu0 %v4163
    %5910 = vmatpush.bf16.msra.mxu0 %v4157
    %5911 = vmatpush.bf16.msra.mxu0 %v4151
    %5912 = vmatpush.bf16.msra.mxu0 %v4145
    %5913 = vmatpush.bf16.msra.mxu0 %v4139
    %5914 = vmatpush.bf16.msra.mxu0 %v4133
    %5915 = vmatpush.bf16.msra.mxu0 %v4127
    %5916 = vmatmul.bf16.gmra.mxu0 %v1039
    %v5917 = vpop.f32.mrf.mxu0
    %v5918 = vadd.f32 %v5900, %v5917
    %v5919 = vpop.f32.mrf.mxu0
    %v5920 = vadd.f32 %v5902, %v5919
    %5921 = vmatmul.bf16.gmra.mxu0 %v1057
    %v5922 = vpop.f32.mrf.mxu0
    %v5923 = vadd.f32 %v5905, %v5922
    %v5924 = vpop.f32.mrf.mxu0
    %5925 = vdwg.mxu0
    %5926 = vmatpush.bf16.msra.mxu0 %v4217
    %5927 = vmatpush.bf16.msra.mxu0 %v4211
    %5928 = vmatpush.bf16.msra.mxu0 %v4205
    %5929 = vmatpush.bf16.msra.mxu0 %v4199
    %5930 = vmatpush.bf16.msra.mxu0 %v4193
    %5931 = vmatpush.bf16.msra.mxu0 %v4187
    %5932 = vmatpush.bf16.msra.mxu0 %v4181
    %5933 = vmatpush.bf16.msra.mxu0 %v4175
    %5934 = vmatmul.bf16.gmra.mxu0 %v1040
    %v5935 = vpop.f32.mrf.mxu0
    %v5936 = vadd.f32 %v5918, %v5935
    %v5937 = vpop.f32.mrf.mxu0
    %v5938 = vadd.f32 %v5920, %v5937
    %5939 = vmatmul.bf16.gmra.mxu0 %v1058
    %v5940 = vpop.f32.mrf.mxu0
    %v5941 = vadd.f32 %v5923, %v5940
    %v5942 = vpop.f32.mrf.mxu0
    %5943 = vdwg.mxu0
    %5944 = vmatpush.bf16.msra.mxu0 %v4265
    %5945 = vmatpush.bf16.msra.mxu0 %v4259
    %5946 = vmatpush.bf16.msra.mxu0 %v4253
    %5947 = vmatpush.bf16.msra.mxu0 %v4247
    %5948 = vmatpush.bf16.msra.mxu0 %v4241
    %5949 = vmatpush.bf16.msra.mxu0 %v4235
    %5950 = vmatpush.bf16.msra.mxu0 %v4229
    %5951 = vmatpush.bf16.msra.mxu0 %v4223
    %5952 = vmatmul.bf16.gmra.mxu0 %v1041
    %v5953 = vpop.f32.mrf.mxu0
    %v5954 = vadd.f32 %v5936, %v5953
    %v5955 = vpop.f32.mrf.mxu0
    %v5956 = vadd.f32 %v5938, %v5955
    %5957 = vmatmul.bf16.gmra.mxu0 %v1059
    %v5958 = vpop.f32.mrf.mxu0
    %v5959 = vadd.f32 %v5941, %v5958
    %v5960 = vpop.f32.mrf.mxu0
    %5961 = vdwg.mxu0
    %5962 = vmatpush.bf16.msra.mxu0 %v4313
    %5963 = vmatpush.bf16.msra.mxu0 %v4307
    %5964 = vmatpush.bf16.msra.mxu0 %v4301
    %5965 = vmatpush.bf16.msra.mxu0 %v4295
    %5966 = vmatpush.bf16.msra.mxu0 %v4289
    %5967 = vmatpush.bf16.msra.mxu0 %v4283
    %5968 = vmatpush.bf16.msra.mxu0 %v4277
    %5969 = vmatpush.bf16.msra.mxu0 %v4271
    %5970 = vmatmul.bf16.gmra.mxu0 %v1042
    %v5971 = vpop.f32.mrf.mxu0
    %v5972 = vadd.f32 %v5954, %v5971
    %v5973 = vpop.f32.mrf.mxu0
    %v5974 = vadd.f32 %v5956, %v5973
    %5975 = vmatmul.bf16.gmra.mxu0 %v1060
    %v5976 = vpop.f32.mrf.mxu0
    %v5977 = vadd.f32 %v5959, %v5976
    %v5978 = vpop.f32.mrf.mxu0
    %5979 = vdwg.mxu0
    %5980 = vmatpush.bf16.msra.mxu0 %v4361
    %5981 = vmatpush.bf16.msra.mxu0 %v4355
    %5982 = vmatpush.bf16.msra.mxu0 %v4349
    %5983 = vmatpush.bf16.msra.mxu0 %v4343
    %5984 = vmatpush.bf16.msra.mxu0 %v4337
    %5985 = vmatpush.bf16.msra.mxu0 %v4331
    %5986 = vmatpush.bf16.msra.mxu0 %v4325
    %5987 = vmatpush.bf16.msra.mxu0 %v4319
    %5988 = vmatmul.bf16.gmra.mxu0 %v1043
    %v5989 = vpop.f32.mrf.mxu0
    %v5990 = vadd.f32 %v5972, %v5989
    %v5991 = vpop.f32.mrf.mxu0
    %v5992 = vadd.f32 %v5974, %v5991
    %5993 = vmatmul.bf16.gmra.mxu0 %v1061
    %v5994 = vpop.f32.mrf.mxu0
    %v5995 = vadd.f32 %v5977, %v5994
    %v5996 = vpop.f32.mrf.mxu0
    %5997 = vdwg.mxu0
    %5998 = vmatpush.bf16.msra.mxu0 %v4409
    %5999 = vmatpush.bf16.msra.mxu0 %v4403
    %6000 = vmatpush.bf16.msra.mxu0 %v4397
    %6001 = vmatpush.bf16.msra.mxu0 %v4391
    %6002 = vmatpush.bf16.msra.mxu0 %v4385
    %6003 = vmatpush.bf16.msra.mxu0 %v4379
    %6004 = vmatpush.bf16.msra.mxu0 %v4373
    %6005 = vmatpush.bf16.msra.mxu0 %v4367
    %6006 = vmatmul.bf16.gmra.mxu0 %v1044
    %v6007 = vpop.f32.mrf.mxu0
    %v6008 = vadd.f32 %v5990, %v6007
    %v6009 = vpop.f32.mrf.mxu0
    %v6010 = vadd.f32 %v5992, %v6009
    %6011 = vmatmul.bf16.gmra.mxu0 %v1062
    %v6012 = vpop.f32.mrf.mxu0
    %v6013 = vadd.f32 %v5995, %v6012
    %v6014 = vpop.f32.mrf.mxu0
    %6015 = vdwg.mxu0
    %6016 = vmatpush.bf16.msra.mxu0 %v4457
    %6017 = vmatpush.bf16.msra.mxu0 %v4451
    %6018 = vmatpush.bf16.msra.mxu0 %v4445
    %6019 = vmatpush.bf16.msra.mxu0 %v4439
    %6020 = vmatpush.bf16.msra.mxu0 %v4433
    %6021 = vmatpush.bf16.msra.mxu0 %v4427
    %6022 = vmatpush.bf16.msra.mxu0 %v4421
    %6023 = vmatpush.bf16.msra.mxu0 %v4415
    %6024 = vmatmul.bf16.gmra.mxu0 %v1045
    %v6025 = vpop.f32.mrf.mxu0
    %v6026 = vadd.f32 %v6008, %v6025
    %v6027 = vpop.f32.mrf.mxu0
    %v6028 = vadd.f32 %v6010, %v6027
    %6029 = vmatmul.bf16.gmra.mxu0 %v1063
    %v6030 = vpop.f32.mrf.mxu0
    %v6031 = vadd.f32 %v6013, %v6030
    %v6032 = vpop.f32.mrf.mxu0
    %6033 = vdwg.mxu0
    %6034 = vmatpush.bf16.msra.mxu0 %v4505
    %6035 = vmatpush.bf16.msra.mxu0 %v4499
    %6036 = vmatpush.bf16.msra.mxu0 %v4493
    %6037 = vmatpush.bf16.msra.mxu0 %v4487
    %6038 = vmatpush.bf16.msra.mxu0 %v4481
    %6039 = vmatpush.bf16.msra.mxu0 %v4475
    %6040 = vmatpush.bf16.msra.mxu0 %v4469
    %6041 = vmatpush.bf16.msra.mxu0 %v4463
    %6042 = vmatmul.bf16.gmra.mxu0 %v1046
    %v6043 = vpop.f32.mrf.mxu0
    %v6044 = vadd.f32 %v6026, %v6043
    %v6045 = vpop.f32.mrf.mxu0
    %v6046 = vadd.f32 %v6028, %v6045
    %6047 = vmatmul.bf16.gmra.mxu0 %v1064
    %v6048 = vpop.f32.mrf.mxu0
    %v6049 = vadd.f32 %v6031, %v6048
    %v6050 = vpop.f32.mrf.mxu0
    %6051 = vdwg.mxu0
    %6052 = vmatpush.bf16.msra.mxu0 %v4553
    %6053 = vmatpush.bf16.msra.mxu0 %v4547
    %6054 = vmatpush.bf16.msra.mxu0 %v4541
    %6055 = vmatpush.bf16.msra.mxu0 %v4535
    %6056 = vmatpush.bf16.msra.mxu0 %v4529
    %6057 = vmatpush.bf16.msra.mxu0 %v4523
    %6058 = vmatpush.bf16.msra.mxu0 %v4517
    %6059 = vmatpush.bf16.msra.mxu0 %v4511
    %6060 = vmatmul.bf16.gmra.mxu0 %v1047
    %v6061 = vpop.f32.mrf.mxu0
    %v6062 = vadd.f32 %v6044, %v6061
    %v6063 = vpop.f32.mrf.mxu0
    %v6064 = vadd.f32 %v6046, %v6063
    %6065 = vmatmul.bf16.gmra.mxu0 %v1065
    %v6066 = vpop.f32.mrf.mxu0
    %v6067 = vadd.f32 %v6049, %v6066
    %v6068 = vpop.f32.mrf.mxu0
    %6069 = vdwg.mxu0
    %6070 = vmatpush.bf16.msra.mxu0 %v3738
    %6071 = vmatpush.bf16.msra.mxu0 %v3732
    %6072 = vmatpush.bf16.msra.mxu0 %v3726
    %6073 = vmatpush.bf16.msra.mxu0 %v3720
    %6074 = vmatpush.bf16.msra.mxu0 %v3714
    %6075 = vmatpush.bf16.msra.mxu0 %v3708
    %6076 = vmatpush.bf16.msra.mxu0 %v3702
    %6077 = vmatpush.bf16.msra.mxu0 %v3696
    %6078 = vmatmul.bf16.gmra.mxu0 %v1030
    %v6079 = vpop.f32.mrf.mxu0
    %v6080 = vadd.f32 %v939, %v6079
    %v6081 = vpop.f32.mrf.mxu0
    %v6082 = vadd.f32 %v939, %v6081
    %6083 = vmatmul.bf16.gmra.mxu0 %v1048
    %v6084 = vpop.f32.mrf.mxu0
    %v6085 = vadd.f32 %v939, %v6084
    %v6086 = vpop.f32.mrf.mxu0
    %6087 = vdwg.mxu0
    %6088 = vmatpush.bf16.msra.mxu0 %v3786
    %6089 = vmatpush.bf16.msra.mxu0 %v3780
    %6090 = vmatpush.bf16.msra.mxu0 %v3774
    %6091 = vmatpush.bf16.msra.mxu0 %v3768
    %6092 = vmatpush.bf16.msra.mxu0 %v3762
    %6093 = vmatpush.bf16.msra.mxu0 %v3756
    %6094 = vmatpush.bf16.msra.mxu0 %v3750
    %6095 = vmatpush.bf16.msra.mxu0 %v3744
    %6096 = vmatmul.bf16.gmra.mxu0 %v1031
    %v6097 = vpop.f32.mrf.mxu0
    %v6098 = vadd.f32 %v6080, %v6097
    %v6099 = vpop.f32.mrf.mxu0
    %v6100 = vadd.f32 %v6082, %v6099
    %6101 = vmatmul.bf16.gmra.mxu0 %v1049
    %v6102 = vpop.f32.mrf.mxu0
    %v6103 = vadd.f32 %v6085, %v6102
    %v6104 = vpop.f32.mrf.mxu0
    %6105 = vdwg.mxu0
    %6106 = vmatpush.bf16.msra.mxu0 %v3834
    %6107 = vmatpush.bf16.msra.mxu0 %v3828
    %6108 = vmatpush.bf16.msra.mxu0 %v3822
    %6109 = vmatpush.bf16.msra.mxu0 %v3816
    %6110 = vmatpush.bf16.msra.mxu0 %v3810
    %6111 = vmatpush.bf16.msra.mxu0 %v3804
    %6112 = vmatpush.bf16.msra.mxu0 %v3798
    %6113 = vmatpush.bf16.msra.mxu0 %v3792
    %6114 = vmatmul.bf16.gmra.mxu0 %v1032
    %v6115 = vpop.f32.mrf.mxu0
    %v6116 = vadd.f32 %v6098, %v6115
    %v6117 = vpop.f32.mrf.mxu0
    %v6118 = vadd.f32 %v6100, %v6117
    %6119 = vmatmul.bf16.gmra.mxu0 %v1050
    %v6120 = vpop.f32.mrf.mxu0
    %v6121 = vadd.f32 %v6103, %v6120
    %v6122 = vpop.f32.mrf.mxu0
    %6123 = vdwg.mxu0
    %6124 = vmatpush.bf16.msra.mxu0 %v3882
    %6125 = vmatpush.bf16.msra.mxu0 %v3876
    %6126 = vmatpush.bf16.msra.mxu0 %v3870
    %6127 = vmatpush.bf16.msra.mxu0 %v3864
    %6128 = vmatpush.bf16.msra.mxu0 %v3858
    %6129 = vmatpush.bf16.msra.mxu0 %v3852
    %6130 = vmatpush.bf16.msra.mxu0 %v3846
    %6131 = vmatpush.bf16.msra.mxu0 %v3840
    %6132 = vmatmul.bf16.gmra.mxu0 %v1033
    %v6133 = vpop.f32.mrf.mxu0
    %v6134 = vadd.f32 %v6116, %v6133
    %v6135 = vpop.f32.mrf.mxu0
    %v6136 = vadd.f32 %v6118, %v6135
    %6137 = vmatmul.bf16.gmra.mxu0 %v1051
    %v6138 = vpop.f32.mrf.mxu0
    %v6139 = vadd.f32 %v6121, %v6138
    %v6140 = vpop.f32.mrf.mxu0
    %6141 = vdwg.mxu0
    %6142 = vmatpush.bf16.msra.mxu0 %v3930
    %6143 = vmatpush.bf16.msra.mxu0 %v3924
    %6144 = vmatpush.bf16.msra.mxu0 %v3918
    %6145 = vmatpush.bf16.msra.mxu0 %v3912
    %6146 = vmatpush.bf16.msra.mxu0 %v3906
    %6147 = vmatpush.bf16.msra.mxu0 %v3900
    %6148 = vmatpush.bf16.msra.mxu0 %v3894
    %6149 = vmatpush.bf16.msra.mxu0 %v3888
    %6150 = vmatmul.bf16.gmra.mxu0 %v1034
    %v6151 = vpop.f32.mrf.mxu0
    %v6152 = vadd.f32 %v6134, %v6151
    %v6153 = vpop.f32.mrf.mxu0
    %v6154 = vadd.f32 %v6136, %v6153
    %6155 = vmatmul.bf16.gmra.mxu0 %v1052
    %v6156 = vpop.f32.mrf.mxu0
    %v6157 = vadd.f32 %v6139, %v6156
    %v6158 = vpop.f32.mrf.mxu0
    %6159 = vdwg.mxu0
    %6160 = vmatpush.bf16.msra.mxu0 %v3978
    %6161 = vmatpush.bf16.msra.mxu0 %v3972
    %6162 = vmatpush.bf16.msra.mxu0 %v3966
    %6163 = vmatpush.bf16.msra.mxu0 %v3960
    %6164 = vmatpush.bf16.msra.mxu0 %v3954
    %6165 = vmatpush.bf16.msra.mxu0 %v3948
    %6166 = vmatpush.bf16.msra.mxu0 %v3942
    %6167 = vmatpush.bf16.msra.mxu0 %v3936
    %6168 = vmatmul.bf16.gmra.mxu0 %v1035
    %v6169 = vpop.f32.mrf.mxu0
    %v6170 = vadd.f32 %v6152, %v6169
    %v6171 = vpop.f32.mrf.mxu0
    %v6172 = vadd.f32 %v6154, %v6171
    %6173 = vmatmul.bf16.gmra.mxu0 %v1053
    %v6174 = vpop.f32.mrf.mxu0
    %v6175 = vadd.f32 %v6157, %v6174
    %v6176 = vpop.f32.mrf.mxu0
    %6177 = vdwg.mxu0
    %6178 = vmatpush.bf16.msra.mxu0 %v4026
    %6179 = vmatpush.bf16.msra.mxu0 %v4020
    %6180 = vmatpush.bf16.msra.mxu0 %v4014
    %6181 = vmatpush.bf16.msra.mxu0 %v4008
    %6182 = vmatpush.bf16.msra.mxu0 %v4002
    %6183 = vmatpush.bf16.msra.mxu0 %v3996
    %6184 = vmatpush.bf16.msra.mxu0 %v3990
    %6185 = vmatpush.bf16.msra.mxu0 %v3984
    %6186 = vmatmul.bf16.gmra.mxu0 %v1036
    %v6187 = vpop.f32.mrf.mxu0
    %v6188 = vadd.f32 %v6170, %v6187
    %v6189 = vpop.f32.mrf.mxu0
    %v6190 = vadd.f32 %v6172, %v6189
    %6191 = vmatmul.bf16.gmra.mxu0 %v1054
    %v6192 = vpop.f32.mrf.mxu0
    %v6193 = vadd.f32 %v6175, %v6192
    %v6194 = vpop.f32.mrf.mxu0
    %6195 = vdwg.mxu0
    %6196 = vmatpush.bf16.msra.mxu0 %v4074
    %6197 = vmatpush.bf16.msra.mxu0 %v4068
    %6198 = vmatpush.bf16.msra.mxu0 %v4062
    %6199 = vmatpush.bf16.msra.mxu0 %v4056
    %6200 = vmatpush.bf16.msra.mxu0 %v4050
    %6201 = vmatpush.bf16.msra.mxu0 %v4044
    %6202 = vmatpush.bf16.msra.mxu0 %v4038
    %6203 = vmatpush.bf16.msra.mxu0 %v4032
    %6204 = vmatmul.bf16.gmra.mxu0 %v1037
    %v6205 = vpop.f32.mrf.mxu0
    %v6206 = vadd.f32 %v6188, %v6205
    %v6207 = vpop.f32.mrf.mxu0
    %v6208 = vadd.f32 %v6190, %v6207
    %6209 = vmatmul.bf16.gmra.mxu0 %v1055
    %v6210 = vpop.f32.mrf.mxu0
    %v6211 = vadd.f32 %v6193, %v6210
    %v6212 = vpop.f32.mrf.mxu0
    %6213 = vdwg.mxu0
    %6214 = vmatpush.bf16.msra.mxu0 %v4122
    %6215 = vmatpush.bf16.msra.mxu0 %v4116
    %6216 = vmatpush.bf16.msra.mxu0 %v4110
    %6217 = vmatpush.bf16.msra.mxu0 %v4104
    %6218 = vmatpush.bf16.msra.mxu0 %v4098
    %6219 = vmatpush.bf16.msra.mxu0 %v4092
    %6220 = vmatpush.bf16.msra.mxu0 %v4086
    %6221 = vmatpush.bf16.msra.mxu0 %v4080
    %6222 = vmatmul.bf16.gmra.mxu0 %v1038
    %v6223 = vpop.f32.mrf.mxu0
    %v6224 = vadd.f32 %v6206, %v6223
    %v6225 = vpop.f32.mrf.mxu0
    %v6226 = vadd.f32 %v6208, %v6225
    %6227 = vmatmul.bf16.gmra.mxu0 %v1056
    %v6228 = vpop.f32.mrf.mxu0
    %v6229 = vadd.f32 %v6211, %v6228
    %v6230 = vpop.f32.mrf.mxu0
    %6231 = vdwg.mxu0
    %6232 = vmatpush.bf16.msra.mxu0 %v4170
    %6233 = vmatpush.bf16.msra.mxu0 %v4164
    %6234 = vmatpush.bf16.msra.mxu0 %v4158
    %6235 = vmatpush.bf16.msra.mxu0 %v4152
    %6236 = vmatpush.bf16.msra.mxu0 %v4146
    %6237 = vmatpush.bf16.msra.mxu0 %v4140
    %6238 = vmatpush.bf16.msra.mxu0 %v4134
    %6239 = vmatpush.bf16.msra.mxu0 %v4128
    %6240 = vmatmul.bf16.gmra.mxu0 %v1039
    %v6241 = vpop.f32.mrf.mxu0
    %v6242 = vadd.f32 %v6224, %v6241
    %v6243 = vpop.f32.mrf.mxu0
    %v6244 = vadd.f32 %v6226, %v6243
    %6245 = vmatmul.bf16.gmra.mxu0 %v1057
    %v6246 = vpop.f32.mrf.mxu0
    %v6247 = vadd.f32 %v6229, %v6246
    %v6248 = vpop.f32.mrf.mxu0
    %6249 = vdwg.mxu0
    %6250 = vmatpush.bf16.msra.mxu0 %v4218
    %6251 = vmatpush.bf16.msra.mxu0 %v4212
    %6252 = vmatpush.bf16.msra.mxu0 %v4206
    %6253 = vmatpush.bf16.msra.mxu0 %v4200
    %6254 = vmatpush.bf16.msra.mxu0 %v4194
    %6255 = vmatpush.bf16.msra.mxu0 %v4188
    %6256 = vmatpush.bf16.msra.mxu0 %v4182
    %6257 = vmatpush.bf16.msra.mxu0 %v4176
    %6258 = vmatmul.bf16.gmra.mxu0 %v1040
    %v6259 = vpop.f32.mrf.mxu0
    %v6260 = vadd.f32 %v6242, %v6259
    %v6261 = vpop.f32.mrf.mxu0
    %v6262 = vadd.f32 %v6244, %v6261
    %6263 = vmatmul.bf16.gmra.mxu0 %v1058
    %v6264 = vpop.f32.mrf.mxu0
    %v6265 = vadd.f32 %v6247, %v6264
    %v6266 = vpop.f32.mrf.mxu0
    %6267 = vdwg.mxu0
    %6268 = vmatpush.bf16.msra.mxu0 %v4266
    %6269 = vmatpush.bf16.msra.mxu0 %v4260
    %6270 = vmatpush.bf16.msra.mxu0 %v4254
    %6271 = vmatpush.bf16.msra.mxu0 %v4248
    %6272 = vmatpush.bf16.msra.mxu0 %v4242
    %6273 = vmatpush.bf16.msra.mxu0 %v4236
    %6274 = vmatpush.bf16.msra.mxu0 %v4230
    %6275 = vmatpush.bf16.msra.mxu0 %v4224
    %6276 = vmatmul.bf16.gmra.mxu0 %v1041
    %v6277 = vpop.f32.mrf.mxu0
    %v6278 = vadd.f32 %v6260, %v6277
    %v6279 = vpop.f32.mrf.mxu0
    %v6280 = vadd.f32 %v6262, %v6279
    %6281 = vmatmul.bf16.gmra.mxu0 %v1059
    %v6282 = vpop.f32.mrf.mxu0
    %v6283 = vadd.f32 %v6265, %v6282
    %v6284 = vpop.f32.mrf.mxu0
    %6285 = vdwg.mxu0
    %6286 = vmatpush.bf16.msra.mxu0 %v4314
    %6287 = vmatpush.bf16.msra.mxu0 %v4308
    %6288 = vmatpush.bf16.msra.mxu0 %v4302
    %6289 = vmatpush.bf16.msra.mxu0 %v4296
    %6290 = vmatpush.bf16.msra.mxu0 %v4290
    %6291 = vmatpush.bf16.msra.mxu0 %v4284
    %6292 = vmatpush.bf16.msra.mxu0 %v4278
    %6293 = vmatpush.bf16.msra.mxu0 %v4272
    %6294 = vmatmul.bf16.gmra.mxu0 %v1042
    %v6295 = vpop.f32.mrf.mxu0
    %v6296 = vadd.f32 %v6278, %v6295
    %v6297 = vpop.f32.mrf.mxu0
    %v6298 = vadd.f32 %v6280, %v6297
    %6299 = vmatmul.bf16.gmra.mxu0 %v1060
    %v6300 = vpop.f32.mrf.mxu0
    %v6301 = vadd.f32 %v6283, %v6300
    %v6302 = vpop.f32.mrf.mxu0
    %6303 = vdwg.mxu0
    %6304 = vmatpush.bf16.msra.mxu0 %v4362
    %6305 = vmatpush.bf16.msra.mxu0 %v4356
    %6306 = vmatpush.bf16.msra.mxu0 %v4350
    %6307 = vmatpush.bf16.msra.mxu0 %v4344
    %6308 = vmatpush.bf16.msra.mxu0 %v4338
    %6309 = vmatpush.bf16.msra.mxu0 %v4332
    %6310 = vmatpush.bf16.msra.mxu0 %v4326
    %6311 = vmatpush.bf16.msra.mxu0 %v4320
    %6312 = vmatmul.bf16.gmra.mxu0 %v1043
    %v6313 = vpop.f32.mrf.mxu0
    %v6314 = vadd.f32 %v6296, %v6313
    %v6315 = vpop.f32.mrf.mxu0
    %v6316 = vadd.f32 %v6298, %v6315
    %6317 = vmatmul.bf16.gmra.mxu0 %v1061
    %v6318 = vpop.f32.mrf.mxu0
    %v6319 = vadd.f32 %v6301, %v6318
    %v6320 = vpop.f32.mrf.mxu0
    %6321 = vdwg.mxu0
    %6322 = vmatpush.bf16.msra.mxu0 %v4410
    %6323 = vmatpush.bf16.msra.mxu0 %v4404
    %6324 = vmatpush.bf16.msra.mxu0 %v4398
    %6325 = vmatpush.bf16.msra.mxu0 %v4392
    %6326 = vmatpush.bf16.msra.mxu0 %v4386
    %6327 = vmatpush.bf16.msra.mxu0 %v4380
    %6328 = vmatpush.bf16.msra.mxu0 %v4374
    %6329 = vmatpush.bf16.msra.mxu0 %v4368
    %6330 = vmatmul.bf16.gmra.mxu0 %v1044
    %v6331 = vpop.f32.mrf.mxu0
    %v6332 = vadd.f32 %v6314, %v6331
    %v6333 = vpop.f32.mrf.mxu0
    %v6334 = vadd.f32 %v6316, %v6333
    %6335 = vmatmul.bf16.gmra.mxu0 %v1062
    %v6336 = vpop.f32.mrf.mxu0
    %v6337 = vadd.f32 %v6319, %v6336
    %v6338 = vpop.f32.mrf.mxu0
    %6339 = vdwg.mxu0
    %6340 = vmatpush.bf16.msra.mxu0 %v4458
    %6341 = vmatpush.bf16.msra.mxu0 %v4452
    %6342 = vmatpush.bf16.msra.mxu0 %v4446
    %6343 = vmatpush.bf16.msra.mxu0 %v4440
    %6344 = vmatpush.bf16.msra.mxu0 %v4434
    %6345 = vmatpush.bf16.msra.mxu0 %v4428
    %6346 = vmatpush.bf16.msra.mxu0 %v4422
    %6347 = vmatpush.bf16.msra.mxu0 %v4416
    %6348 = vmatmul.bf16.gmra.mxu0 %v1045
    %v6349 = vpop.f32.mrf.mxu0
    %v6350 = vadd.f32 %v6332, %v6349
    %v6351 = vpop.f32.mrf.mxu0
    %v6352 = vadd.f32 %v6334, %v6351
    %6353 = vmatmul.bf16.gmra.mxu0 %v1063
    %v6354 = vpop.f32.mrf.mxu0
    %v6355 = vadd.f32 %v6337, %v6354
    %v6356 = vpop.f32.mrf.mxu0
    %6357 = vdwg.mxu0
    %6358 = vmatpush.bf16.msra.mxu0 %v4506
    %6359 = vmatpush.bf16.msra.mxu0 %v4500
    %6360 = vmatpush.bf16.msra.mxu0 %v4494
    %6361 = vmatpush.bf16.msra.mxu0 %v4488
    %6362 = vmatpush.bf16.msra.mxu0 %v4482
    %6363 = vmatpush.bf16.msra.mxu0 %v4476
    %6364 = vmatpush.bf16.msra.mxu0 %v4470
    %6365 = vmatpush.bf16.msra.mxu0 %v4464
    %6366 = vmatmul.bf16.gmra.mxu0 %v1046
    %v6367 = vpop.f32.mrf.mxu0
    %v6368 = vadd.f32 %v6350, %v6367
    %v6369 = vpop.f32.mrf.mxu0
    %v6370 = vadd.f32 %v6352, %v6369
    %6371 = vmatmul.bf16.gmra.mxu0 %v1064
    %v6372 = vpop.f32.mrf.mxu0
    %v6373 = vadd.f32 %v6355, %v6372
    %v6374 = vpop.f32.mrf.mxu0
    %6375 = vdwg.mxu0
    %6376 = vmatpush.bf16.msra.mxu0 %v4554
    %6377 = vmatpush.bf16.msra.mxu0 %v4548
    %6378 = vmatpush.bf16.msra.mxu0 %v4542
    %6379 = vmatpush.bf16.msra.mxu0 %v4536
    %6380 = vmatpush.bf16.msra.mxu0 %v4530
    %6381 = vmatpush.bf16.msra.mxu0 %v4524
    %6382 = vmatpush.bf16.msra.mxu0 %v4518
    %6383 = vmatpush.bf16.msra.mxu0 %v4512
    %6384 = vmatmul.bf16.gmra.mxu0 %v1047
    %v6385 = vpop.f32.mrf.mxu0
    %v6386 = vadd.f32 %v6368, %v6385
    %v6387 = vpop.f32.mrf.mxu0
    %v6388 = vadd.f32 %v6370, %v6387
    %6389 = vmatmul.bf16.gmra.mxu0 %v1065
    %v6390 = vpop.f32.mrf.mxu0
    %v6391 = vadd.f32 %v6373, %v6390
    %v6392 = vpop.f32.mrf.mxu0
    %6393 = vdwg.mxu0
    %6394 = vmatpush.bf16.msra.mxu0 %v3739
    %6395 = vmatpush.bf16.msra.mxu0 %v3733
    %6396 = vmatpush.bf16.msra.mxu0 %v3727
    %6397 = vmatpush.bf16.msra.mxu0 %v3721
    %6398 = vmatpush.bf16.msra.mxu0 %v3715
    %6399 = vmatpush.bf16.msra.mxu0 %v3709
    %6400 = vmatpush.bf16.msra.mxu0 %v3703
    %6401 = vmatpush.bf16.msra.mxu0 %v3697
    %6402 = vmatmul.bf16.gmra.mxu0 %v1030
    %v6403 = vpop.f32.mrf.mxu0
    %v6404 = vadd.f32 %v940, %v6403
    %v6405 = vpop.f32.mrf.mxu0
    %v6406 = vadd.f32 %v940, %v6405
    %6407 = vmatmul.bf16.gmra.mxu0 %v1048
    %v6408 = vpop.f32.mrf.mxu0
    %v6409 = vadd.f32 %v940, %v6408
    %v6410 = vpop.f32.mrf.mxu0
    %6411 = vdwg.mxu0
    %6412 = vmatpush.bf16.msra.mxu0 %v3787
    %6413 = vmatpush.bf16.msra.mxu0 %v3781
    %6414 = vmatpush.bf16.msra.mxu0 %v3775
    %6415 = vmatpush.bf16.msra.mxu0 %v3769
    %6416 = vmatpush.bf16.msra.mxu0 %v3763
    %6417 = vmatpush.bf16.msra.mxu0 %v3757
    %6418 = vmatpush.bf16.msra.mxu0 %v3751
    %6419 = vmatpush.bf16.msra.mxu0 %v3745
    %6420 = vmatmul.bf16.gmra.mxu0 %v1031
    %v6421 = vpop.f32.mrf.mxu0
    %v6422 = vadd.f32 %v6404, %v6421
    %v6423 = vpop.f32.mrf.mxu0
    %v6424 = vadd.f32 %v6406, %v6423
    %6425 = vmatmul.bf16.gmra.mxu0 %v1049
    %v6426 = vpop.f32.mrf.mxu0
    %v6427 = vadd.f32 %v6409, %v6426
    %v6428 = vpop.f32.mrf.mxu0
    %6429 = vdwg.mxu0
    %6430 = vmatpush.bf16.msra.mxu0 %v3835
    %6431 = vmatpush.bf16.msra.mxu0 %v3829
    %6432 = vmatpush.bf16.msra.mxu0 %v3823
    %6433 = vmatpush.bf16.msra.mxu0 %v3817
    %6434 = vmatpush.bf16.msra.mxu0 %v3811
    %6435 = vmatpush.bf16.msra.mxu0 %v3805
    %6436 = vmatpush.bf16.msra.mxu0 %v3799
    %6437 = vmatpush.bf16.msra.mxu0 %v3793
    %6438 = vmatmul.bf16.gmra.mxu0 %v1032
    %v6439 = vpop.f32.mrf.mxu0
    %v6440 = vadd.f32 %v6422, %v6439
    %v6441 = vpop.f32.mrf.mxu0
    %v6442 = vadd.f32 %v6424, %v6441
    %6443 = vmatmul.bf16.gmra.mxu0 %v1050
    %v6444 = vpop.f32.mrf.mxu0
    %v6445 = vadd.f32 %v6427, %v6444
    %v6446 = vpop.f32.mrf.mxu0
    %6447 = vdwg.mxu0
    %6448 = vmatpush.bf16.msra.mxu0 %v3883
    %6449 = vmatpush.bf16.msra.mxu0 %v3877
    %6450 = vmatpush.bf16.msra.mxu0 %v3871
    %6451 = vmatpush.bf16.msra.mxu0 %v3865
    %6452 = vmatpush.bf16.msra.mxu0 %v3859
    %6453 = vmatpush.bf16.msra.mxu0 %v3853
    %6454 = vmatpush.bf16.msra.mxu0 %v3847
    %6455 = vmatpush.bf16.msra.mxu0 %v3841
    %6456 = vmatmul.bf16.gmra.mxu0 %v1033
    %v6457 = vpop.f32.mrf.mxu0
    %v6458 = vadd.f32 %v6440, %v6457
    %v6459 = vpop.f32.mrf.mxu0
    %v6460 = vadd.f32 %v6442, %v6459
    %6461 = vmatmul.bf16.gmra.mxu0 %v1051
    %v6462 = vpop.f32.mrf.mxu0
    %v6463 = vadd.f32 %v6445, %v6462
    %v6464 = vpop.f32.mrf.mxu0
    %6465 = vdwg.mxu0
    %6466 = vmatpush.bf16.msra.mxu0 %v3931
    %6467 = vmatpush.bf16.msra.mxu0 %v3925
    %6468 = vmatpush.bf16.msra.mxu0 %v3919
    %6469 = vmatpush.bf16.msra.mxu0 %v3913
    %6470 = vmatpush.bf16.msra.mxu0 %v3907
    %6471 = vmatpush.bf16.msra.mxu0 %v3901
    %6472 = vmatpush.bf16.msra.mxu0 %v3895
    %6473 = vmatpush.bf16.msra.mxu0 %v3889
    %6474 = vmatmul.bf16.gmra.mxu0 %v1034
    %v6475 = vpop.f32.mrf.mxu0
    %v6476 = vadd.f32 %v6458, %v6475
    %v6477 = vpop.f32.mrf.mxu0
    %v6478 = vadd.f32 %v6460, %v6477
    %6479 = vmatmul.bf16.gmra.mxu0 %v1052
    %v6480 = vpop.f32.mrf.mxu0
    %v6481 = vadd.f32 %v6463, %v6480
    %v6482 = vpop.f32.mrf.mxu0
    %6483 = vdwg.mxu0
    %6484 = vmatpush.bf16.msra.mxu0 %v3979
    %6485 = vmatpush.bf16.msra.mxu0 %v3973
    %6486 = vmatpush.bf16.msra.mxu0 %v3967
    %6487 = vmatpush.bf16.msra.mxu0 %v3961
    %6488 = vmatpush.bf16.msra.mxu0 %v3955
    %6489 = vmatpush.bf16.msra.mxu0 %v3949
    %6490 = vmatpush.bf16.msra.mxu0 %v3943
    %6491 = vmatpush.bf16.msra.mxu0 %v3937
    %6492 = vmatmul.bf16.gmra.mxu0 %v1035
    %v6493 = vpop.f32.mrf.mxu0
    %v6494 = vadd.f32 %v6476, %v6493
    %v6495 = vpop.f32.mrf.mxu0
    %v6496 = vadd.f32 %v6478, %v6495
    %6497 = vmatmul.bf16.gmra.mxu0 %v1053
    %v6498 = vpop.f32.mrf.mxu0
    %v6499 = vadd.f32 %v6481, %v6498
    %v6500 = vpop.f32.mrf.mxu0
    %6501 = vdwg.mxu0
    %6502 = vmatpush.bf16.msra.mxu0 %v4027
    %6503 = vmatpush.bf16.msra.mxu0 %v4021
    %6504 = vmatpush.bf16.msra.mxu0 %v4015
    %6505 = vmatpush.bf16.msra.mxu0 %v4009
    %6506 = vmatpush.bf16.msra.mxu0 %v4003
    %6507 = vmatpush.bf16.msra.mxu0 %v3997
    %6508 = vmatpush.bf16.msra.mxu0 %v3991
    %6509 = vmatpush.bf16.msra.mxu0 %v3985
    %6510 = vmatmul.bf16.gmra.mxu0 %v1036
    %v6511 = vpop.f32.mrf.mxu0
    %v6512 = vadd.f32 %v6494, %v6511
    %v6513 = vpop.f32.mrf.mxu0
    %v6514 = vadd.f32 %v6496, %v6513
    %6515 = vmatmul.bf16.gmra.mxu0 %v1054
    %v6516 = vpop.f32.mrf.mxu0
    %v6517 = vadd.f32 %v6499, %v6516
    %v6518 = vpop.f32.mrf.mxu0
    %6519 = vdwg.mxu0
    %6520 = vmatpush.bf16.msra.mxu0 %v4075
    %6521 = vmatpush.bf16.msra.mxu0 %v4069
    %6522 = vmatpush.bf16.msra.mxu0 %v4063
    %6523 = vmatpush.bf16.msra.mxu0 %v4057
    %6524 = vmatpush.bf16.msra.mxu0 %v4051
    %6525 = vmatpush.bf16.msra.mxu0 %v4045
    %6526 = vmatpush.bf16.msra.mxu0 %v4039
    %6527 = vmatpush.bf16.msra.mxu0 %v4033
    %6528 = vmatmul.bf16.gmra.mxu0 %v1037
    %v6529 = vpop.f32.mrf.mxu0
    %v6530 = vadd.f32 %v6512, %v6529
    %v6531 = vpop.f32.mrf.mxu0
    %v6532 = vadd.f32 %v6514, %v6531
    %6533 = vmatmul.bf16.gmra.mxu0 %v1055
    %v6534 = vpop.f32.mrf.mxu0
    %v6535 = vadd.f32 %v6517, %v6534
    %v6536 = vpop.f32.mrf.mxu0
    %6537 = vdwg.mxu0
    %6538 = vmatpush.bf16.msra.mxu0 %v4123
    %6539 = vmatpush.bf16.msra.mxu0 %v4117
    %6540 = vmatpush.bf16.msra.mxu0 %v4111
    %6541 = vmatpush.bf16.msra.mxu0 %v4105
    %6542 = vmatpush.bf16.msra.mxu0 %v4099
    %6543 = vmatpush.bf16.msra.mxu0 %v4093
    %6544 = vmatpush.bf16.msra.mxu0 %v4087
    %6545 = vmatpush.bf16.msra.mxu0 %v4081
    %6546 = vmatmul.bf16.gmra.mxu0 %v1038
    %v6547 = vpop.f32.mrf.mxu0
    %v6548 = vadd.f32 %v6530, %v6547
    %v6549 = vpop.f32.mrf.mxu0
    %v6550 = vadd.f32 %v6532, %v6549
    %6551 = vmatmul.bf16.gmra.mxu0 %v1056
    %v6552 = vpop.f32.mrf.mxu0
    %v6553 = vadd.f32 %v6535, %v6552
    %v6554 = vpop.f32.mrf.mxu0
    %6555 = vdwg.mxu0
    %6556 = vmatpush.bf16.msra.mxu0 %v4171
    %6557 = vmatpush.bf16.msra.mxu0 %v4165
    %6558 = vmatpush.bf16.msra.mxu0 %v4159
    %6559 = vmatpush.bf16.msra.mxu0 %v4153
    %6560 = vmatpush.bf16.msra.mxu0 %v4147
    %6561 = vmatpush.bf16.msra.mxu0 %v4141
    %6562 = vmatpush.bf16.msra.mxu0 %v4135
    %6563 = vmatpush.bf16.msra.mxu0 %v4129
    %6564 = vmatmul.bf16.gmra.mxu0 %v1039
    %v6565 = vpop.f32.mrf.mxu0
    %v6566 = vadd.f32 %v6548, %v6565
    %v6567 = vpop.f32.mrf.mxu0
    %v6568 = vadd.f32 %v6550, %v6567
    %6569 = vmatmul.bf16.gmra.mxu0 %v1057
    %v6570 = vpop.f32.mrf.mxu0
    %v6571 = vadd.f32 %v6553, %v6570
    %v6572 = vpop.f32.mrf.mxu0
    %6573 = vdwg.mxu0
    %6574 = vmatpush.bf16.msra.mxu0 %v4219
    %6575 = vmatpush.bf16.msra.mxu0 %v4213
    %6576 = vmatpush.bf16.msra.mxu0 %v4207
    %6577 = vmatpush.bf16.msra.mxu0 %v4201
    %6578 = vmatpush.bf16.msra.mxu0 %v4195
    %6579 = vmatpush.bf16.msra.mxu0 %v4189
    %6580 = vmatpush.bf16.msra.mxu0 %v4183
    %6581 = vmatpush.bf16.msra.mxu0 %v4177
    %6582 = vmatmul.bf16.gmra.mxu0 %v1040
    %v6583 = vpop.f32.mrf.mxu0
    %v6584 = vadd.f32 %v6566, %v6583
    %v6585 = vpop.f32.mrf.mxu0
    %v6586 = vadd.f32 %v6568, %v6585
    %6587 = vmatmul.bf16.gmra.mxu0 %v1058
    %v6588 = vpop.f32.mrf.mxu0
    %v6589 = vadd.f32 %v6571, %v6588
    %v6590 = vpop.f32.mrf.mxu0
    %6591 = vdwg.mxu0
    %6592 = vmatpush.bf16.msra.mxu0 %v4267
    %6593 = vmatpush.bf16.msra.mxu0 %v4261
    %6594 = vmatpush.bf16.msra.mxu0 %v4255
    %6595 = vmatpush.bf16.msra.mxu0 %v4249
    %6596 = vmatpush.bf16.msra.mxu0 %v4243
    %6597 = vmatpush.bf16.msra.mxu0 %v4237
    %6598 = vmatpush.bf16.msra.mxu0 %v4231
    %6599 = vmatpush.bf16.msra.mxu0 %v4225
    %6600 = vmatmul.bf16.gmra.mxu0 %v1041
    %v6601 = vpop.f32.mrf.mxu0
    %v6602 = vadd.f32 %v6584, %v6601
    %v6603 = vpop.f32.mrf.mxu0
    %v6604 = vadd.f32 %v6586, %v6603
    %6605 = vmatmul.bf16.gmra.mxu0 %v1059
    %v6606 = vpop.f32.mrf.mxu0
    %v6607 = vadd.f32 %v6589, %v6606
    %v6608 = vpop.f32.mrf.mxu0
    %6609 = vdwg.mxu0
    %6610 = vmatpush.bf16.msra.mxu0 %v4315
    %6611 = vmatpush.bf16.msra.mxu0 %v4309
    %6612 = vmatpush.bf16.msra.mxu0 %v4303
    %6613 = vmatpush.bf16.msra.mxu0 %v4297
    %6614 = vmatpush.bf16.msra.mxu0 %v4291
    %6615 = vmatpush.bf16.msra.mxu0 %v4285
    %6616 = vmatpush.bf16.msra.mxu0 %v4279
    %6617 = vmatpush.bf16.msra.mxu0 %v4273
    %6618 = vmatmul.bf16.gmra.mxu0 %v1042
    %v6619 = vpop.f32.mrf.mxu0
    %v6620 = vadd.f32 %v6602, %v6619
    %v6621 = vpop.f32.mrf.mxu0
    %v6622 = vadd.f32 %v6604, %v6621
    %6623 = vmatmul.bf16.gmra.mxu0 %v1060
    %v6624 = vpop.f32.mrf.mxu0
    %v6625 = vadd.f32 %v6607, %v6624
    %v6626 = vpop.f32.mrf.mxu0
    %6627 = vdwg.mxu0
    %6628 = vmatpush.bf16.msra.mxu0 %v4363
    %6629 = vmatpush.bf16.msra.mxu0 %v4357
    %6630 = vmatpush.bf16.msra.mxu0 %v4351
    %6631 = vmatpush.bf16.msra.mxu0 %v4345
    %6632 = vmatpush.bf16.msra.mxu0 %v4339
    %6633 = vmatpush.bf16.msra.mxu0 %v4333
    %6634 = vmatpush.bf16.msra.mxu0 %v4327
    %6635 = vmatpush.bf16.msra.mxu0 %v4321
    %6636 = vmatmul.bf16.gmra.mxu0 %v1043
    %v6637 = vpop.f32.mrf.mxu0
    %v6638 = vadd.f32 %v6620, %v6637
    %v6639 = vpop.f32.mrf.mxu0
    %v6640 = vadd.f32 %v6622, %v6639
    %6641 = vmatmul.bf16.gmra.mxu0 %v1061
    %v6642 = vpop.f32.mrf.mxu0
    %v6643 = vadd.f32 %v6625, %v6642
    %v6644 = vpop.f32.mrf.mxu0
    %6645 = vdwg.mxu0
    %6646 = vmatpush.bf16.msra.mxu0 %v4411
    %6647 = vmatpush.bf16.msra.mxu0 %v4405
    %6648 = vmatpush.bf16.msra.mxu0 %v4399
    %6649 = vmatpush.bf16.msra.mxu0 %v4393
    %6650 = vmatpush.bf16.msra.mxu0 %v4387
    %6651 = vmatpush.bf16.msra.mxu0 %v4381
    %6652 = vmatpush.bf16.msra.mxu0 %v4375
    %6653 = vmatpush.bf16.msra.mxu0 %v4369
    %6654 = vmatmul.bf16.gmra.mxu0 %v1044
    %v6655 = vpop.f32.mrf.mxu0
    %v6656 = vadd.f32 %v6638, %v6655
    %v6657 = vpop.f32.mrf.mxu0
    %v6658 = vadd.f32 %v6640, %v6657
    %6659 = vmatmul.bf16.gmra.mxu0 %v1062
    %v6660 = vpop.f32.mrf.mxu0
    %v6661 = vadd.f32 %v6643, %v6660
    %v6662 = vpop.f32.mrf.mxu0
    %6663 = vdwg.mxu0
    %6664 = vmatpush.bf16.msra.mxu0 %v4459
    %6665 = vmatpush.bf16.msra.mxu0 %v4453
    %6666 = vmatpush.bf16.msra.mxu0 %v4447
    %6667 = vmatpush.bf16.msra.mxu0 %v4441
    %6668 = vmatpush.bf16.msra.mxu0 %v4435
    %6669 = vmatpush.bf16.msra.mxu0 %v4429
    %6670 = vmatpush.bf16.msra.mxu0 %v4423
    %6671 = vmatpush.bf16.msra.mxu0 %v4417
    %6672 = vmatmul.bf16.gmra.mxu0 %v1045
    %v6673 = vpop.f32.mrf.mxu0
    %v6674 = vadd.f32 %v6656, %v6673
    %v6675 = vpop.f32.mrf.mxu0
    %v6676 = vadd.f32 %v6658, %v6675
    %6677 = vmatmul.bf16.gmra.mxu0 %v1063
    %v6678 = vpop.f32.mrf.mxu0
    %v6679 = vadd.f32 %v6661, %v6678
    %v6680 = vpop.f32.mrf.mxu0
    %6681 = vdwg.mxu0
    %6682 = vmatpush.bf16.msra.mxu0 %v4507
    %6683 = vmatpush.bf16.msra.mxu0 %v4501
    %6684 = vmatpush.bf16.msra.mxu0 %v4495
    %6685 = vmatpush.bf16.msra.mxu0 %v4489
    %6686 = vmatpush.bf16.msra.mxu0 %v4483
    %6687 = vmatpush.bf16.msra.mxu0 %v4477
    %6688 = vmatpush.bf16.msra.mxu0 %v4471
    %6689 = vmatpush.bf16.msra.mxu0 %v4465
    %6690 = vmatmul.bf16.gmra.mxu0 %v1046
    %v6691 = vpop.f32.mrf.mxu0
    %v6692 = vadd.f32 %v6674, %v6691
    %v6693 = vpop.f32.mrf.mxu0
    %v6694 = vadd.f32 %v6676, %v6693
    %6695 = vmatmul.bf16.gmra.mxu0 %v1064
    %v6696 = vpop.f32.mrf.mxu0
    %v6697 = vadd.f32 %v6679, %v6696
    %v6698 = vpop.f32.mrf.mxu0
    %6699 = vdwg.mxu0
    %6700 = vmatpush.bf16.msra.mxu0 %v4555
    %6701 = vmatpush.bf16.msra.mxu0 %v4549
    %6702 = vmatpush.bf16.msra.mxu0 %v4543
    %6703 = vmatpush.bf16.msra.mxu0 %v4537
    %6704 = vmatpush.bf16.msra.mxu0 %v4531
    %6705 = vmatpush.bf16.msra.mxu0 %v4525
    %6706 = vmatpush.bf16.msra.mxu0 %v4519
    %6707 = vmatpush.bf16.msra.mxu0 %v4513
    %6708 = vmatmul.bf16.gmra.mxu0 %v1047
    %v6709 = vpop.f32.mrf.mxu0
    %v6710 = vadd.f32 %v6692, %v6709
    %v6711 = vpop.f32.mrf.mxu0
    %v6712 = vadd.f32 %v6694, %v6711
    %6713 = vmatmul.bf16.gmra.mxu0 %v1065
    %v6714 = vpop.f32.mrf.mxu0
    %v6715 = vadd.f32 %v6697, %v6714
    %v6716 = vpop.f32.mrf.mxu0
    %6717 = vdwg.mxu0
    %6718 = vmatpush.bf16.msra.mxu0 %v3740
    %6719 = vmatpush.bf16.msra.mxu0 %v3734
    %6720 = vmatpush.bf16.msra.mxu0 %v3728
    %6721 = vmatpush.bf16.msra.mxu0 %v3722
    %6722 = vmatpush.bf16.msra.mxu0 %v3716
    %6723 = vmatpush.bf16.msra.mxu0 %v3710
    %6724 = vmatpush.bf16.msra.mxu0 %v3704
    %6725 = vmatpush.bf16.msra.mxu0 %v3698
    %6726 = vmatmul.bf16.gmra.mxu0 %v1030
    %v6727 = vpop.f32.mrf.mxu0
    %v6728 = vadd.f32 %v941, %v6727
    %v6729 = vpop.f32.mrf.mxu0
    %v6730 = vadd.f32 %v941, %v6729
    %6731 = vmatmul.bf16.gmra.mxu0 %v1048
    %v6732 = vpop.f32.mrf.mxu0
    %v6733 = vadd.f32 %v941, %v6732
    %v6734 = vpop.f32.mrf.mxu0
    %6735 = vdwg.mxu0
    %6736 = vmatpush.bf16.msra.mxu0 %v3788
    %6737 = vmatpush.bf16.msra.mxu0 %v3782
    %6738 = vmatpush.bf16.msra.mxu0 %v3776
    %6739 = vmatpush.bf16.msra.mxu0 %v3770
    %6740 = vmatpush.bf16.msra.mxu0 %v3764
    %6741 = vmatpush.bf16.msra.mxu0 %v3758
    %6742 = vmatpush.bf16.msra.mxu0 %v3752
    %6743 = vmatpush.bf16.msra.mxu0 %v3746
    %6744 = vmatmul.bf16.gmra.mxu0 %v1031
    %v6745 = vpop.f32.mrf.mxu0
    %v6746 = vadd.f32 %v6728, %v6745
    %v6747 = vpop.f32.mrf.mxu0
    %v6748 = vadd.f32 %v6730, %v6747
    %6749 = vmatmul.bf16.gmra.mxu0 %v1049
    %v6750 = vpop.f32.mrf.mxu0
    %v6751 = vadd.f32 %v6733, %v6750
    %v6752 = vpop.f32.mrf.mxu0
    %6753 = vdwg.mxu0
    %6754 = vmatpush.bf16.msra.mxu0 %v3836
    %6755 = vmatpush.bf16.msra.mxu0 %v3830
    %6756 = vmatpush.bf16.msra.mxu0 %v3824
    %6757 = vmatpush.bf16.msra.mxu0 %v3818
    %6758 = vmatpush.bf16.msra.mxu0 %v3812
    %6759 = vmatpush.bf16.msra.mxu0 %v3806
    %6760 = vmatpush.bf16.msra.mxu0 %v3800
    %6761 = vmatpush.bf16.msra.mxu0 %v3794
    %6762 = vmatmul.bf16.gmra.mxu0 %v1032
    %v6763 = vpop.f32.mrf.mxu0
    %v6764 = vadd.f32 %v6746, %v6763
    %v6765 = vpop.f32.mrf.mxu0
    %v6766 = vadd.f32 %v6748, %v6765
    %6767 = vmatmul.bf16.gmra.mxu0 %v1050
    %v6768 = vpop.f32.mrf.mxu0
    %v6769 = vadd.f32 %v6751, %v6768
    %v6770 = vpop.f32.mrf.mxu0
    %6771 = vdwg.mxu0
    %6772 = vmatpush.bf16.msra.mxu0 %v3884
    %6773 = vmatpush.bf16.msra.mxu0 %v3878
    %6774 = vmatpush.bf16.msra.mxu0 %v3872
    %6775 = vmatpush.bf16.msra.mxu0 %v3866
    %6776 = vmatpush.bf16.msra.mxu0 %v3860
    %6777 = vmatpush.bf16.msra.mxu0 %v3854
    %6778 = vmatpush.bf16.msra.mxu0 %v3848
    %6779 = vmatpush.bf16.msra.mxu0 %v3842
    %6780 = vmatmul.bf16.gmra.mxu0 %v1033
    %v6781 = vpop.f32.mrf.mxu0
    %v6782 = vadd.f32 %v6764, %v6781
    %v6783 = vpop.f32.mrf.mxu0
    %v6784 = vadd.f32 %v6766, %v6783
    %6785 = vmatmul.bf16.gmra.mxu0 %v1051
    %v6786 = vpop.f32.mrf.mxu0
    %v6787 = vadd.f32 %v6769, %v6786
    %v6788 = vpop.f32.mrf.mxu0
    %6789 = vdwg.mxu0
    %6790 = vmatpush.bf16.msra.mxu0 %v3932
    %6791 = vmatpush.bf16.msra.mxu0 %v3926
    %6792 = vmatpush.bf16.msra.mxu0 %v3920
    %6793 = vmatpush.bf16.msra.mxu0 %v3914
    %6794 = vmatpush.bf16.msra.mxu0 %v3908
    %6795 = vmatpush.bf16.msra.mxu0 %v3902
    %6796 = vmatpush.bf16.msra.mxu0 %v3896
    %6797 = vmatpush.bf16.msra.mxu0 %v3890
    %6798 = vmatmul.bf16.gmra.mxu0 %v1034
    %v6799 = vpop.f32.mrf.mxu0
    %v6800 = vadd.f32 %v6782, %v6799
    %v6801 = vpop.f32.mrf.mxu0
    %v6802 = vadd.f32 %v6784, %v6801
    %6803 = vmatmul.bf16.gmra.mxu0 %v1052
    %v6804 = vpop.f32.mrf.mxu0
    %v6805 = vadd.f32 %v6787, %v6804
    %v6806 = vpop.f32.mrf.mxu0
    %6807 = vdwg.mxu0
    %6808 = vmatpush.bf16.msra.mxu0 %v3980
    %6809 = vmatpush.bf16.msra.mxu0 %v3974
    %6810 = vmatpush.bf16.msra.mxu0 %v3968
    %6811 = vmatpush.bf16.msra.mxu0 %v3962
    %6812 = vmatpush.bf16.msra.mxu0 %v3956
    %6813 = vmatpush.bf16.msra.mxu0 %v3950
    %6814 = vmatpush.bf16.msra.mxu0 %v3944
    %6815 = vmatpush.bf16.msra.mxu0 %v3938
    %6816 = vmatmul.bf16.gmra.mxu0 %v1035
    %v6817 = vpop.f32.mrf.mxu0
    %v6818 = vadd.f32 %v6800, %v6817
    %v6819 = vpop.f32.mrf.mxu0
    %v6820 = vadd.f32 %v6802, %v6819
    %6821 = vmatmul.bf16.gmra.mxu0 %v1053
    %v6822 = vpop.f32.mrf.mxu0
    %v6823 = vadd.f32 %v6805, %v6822
    %v6824 = vpop.f32.mrf.mxu0
    %6825 = vdwg.mxu0
    %6826 = vmatpush.bf16.msra.mxu0 %v4028
    %6827 = vmatpush.bf16.msra.mxu0 %v4022
    %6828 = vmatpush.bf16.msra.mxu0 %v4016
    %6829 = vmatpush.bf16.msra.mxu0 %v4010
    %6830 = vmatpush.bf16.msra.mxu0 %v4004
    %6831 = vmatpush.bf16.msra.mxu0 %v3998
    %6832 = vmatpush.bf16.msra.mxu0 %v3992
    %6833 = vmatpush.bf16.msra.mxu0 %v3986
    %6834 = vmatmul.bf16.gmra.mxu0 %v1036
    %v6835 = vpop.f32.mrf.mxu0
    %v6836 = vadd.f32 %v6818, %v6835
    %v6837 = vpop.f32.mrf.mxu0
    %v6838 = vadd.f32 %v6820, %v6837
    %6839 = vmatmul.bf16.gmra.mxu0 %v1054
    %v6840 = vpop.f32.mrf.mxu0
    %v6841 = vadd.f32 %v6823, %v6840
    %v6842 = vpop.f32.mrf.mxu0
    %6843 = vdwg.mxu0
    %6844 = vmatpush.bf16.msra.mxu0 %v4076
    %6845 = vmatpush.bf16.msra.mxu0 %v4070
    %6846 = vmatpush.bf16.msra.mxu0 %v4064
    %6847 = vmatpush.bf16.msra.mxu0 %v4058
    %6848 = vmatpush.bf16.msra.mxu0 %v4052
    %6849 = vmatpush.bf16.msra.mxu0 %v4046
    %6850 = vmatpush.bf16.msra.mxu0 %v4040
    %6851 = vmatpush.bf16.msra.mxu0 %v4034
    %6852 = vmatmul.bf16.gmra.mxu0 %v1037
    %v6853 = vpop.f32.mrf.mxu0
    %v6854 = vadd.f32 %v6836, %v6853
    %v6855 = vpop.f32.mrf.mxu0
    %v6856 = vadd.f32 %v6838, %v6855
    %6857 = vmatmul.bf16.gmra.mxu0 %v1055
    %v6858 = vpop.f32.mrf.mxu0
    %v6859 = vadd.f32 %v6841, %v6858
    %v6860 = vpop.f32.mrf.mxu0
    %6861 = vdwg.mxu0
    %6862 = vmatpush.bf16.msra.mxu0 %v4124
    %6863 = vmatpush.bf16.msra.mxu0 %v4118
    %6864 = vmatpush.bf16.msra.mxu0 %v4112
    %6865 = vmatpush.bf16.msra.mxu0 %v4106
    %6866 = vmatpush.bf16.msra.mxu0 %v4100
    %6867 = vmatpush.bf16.msra.mxu0 %v4094
    %6868 = vmatpush.bf16.msra.mxu0 %v4088
    %6869 = vmatpush.bf16.msra.mxu0 %v4082
    %6870 = vmatmul.bf16.gmra.mxu0 %v1038
    %v6871 = vpop.f32.mrf.mxu0
    %v6872 = vadd.f32 %v6854, %v6871
    %v6873 = vpop.f32.mrf.mxu0
    %v6874 = vadd.f32 %v6856, %v6873
    %6875 = vmatmul.bf16.gmra.mxu0 %v1056
    %v6876 = vpop.f32.mrf.mxu0
    %v6877 = vadd.f32 %v6859, %v6876
    %v6878 = vpop.f32.mrf.mxu0
    %6879 = vdwg.mxu0
    %6880 = vmatpush.bf16.msra.mxu0 %v4172
    %6881 = vmatpush.bf16.msra.mxu0 %v4166
    %6882 = vmatpush.bf16.msra.mxu0 %v4160
    %6883 = vmatpush.bf16.msra.mxu0 %v4154
    %6884 = vmatpush.bf16.msra.mxu0 %v4148
    %6885 = vmatpush.bf16.msra.mxu0 %v4142
    %6886 = vmatpush.bf16.msra.mxu0 %v4136
    %6887 = vmatpush.bf16.msra.mxu0 %v4130
    %6888 = vmatmul.bf16.gmra.mxu0 %v1039
    %v6889 = vpop.f32.mrf.mxu0
    %v6890 = vadd.f32 %v6872, %v6889
    %v6891 = vpop.f32.mrf.mxu0
    %v6892 = vadd.f32 %v6874, %v6891
    %6893 = vmatmul.bf16.gmra.mxu0 %v1057
    %v6894 = vpop.f32.mrf.mxu0
    %v6895 = vadd.f32 %v6877, %v6894
    %v6896 = vpop.f32.mrf.mxu0
    %6897 = vdwg.mxu0
    %6898 = vmatpush.bf16.msra.mxu0 %v4220
    %6899 = vmatpush.bf16.msra.mxu0 %v4214
    %6900 = vmatpush.bf16.msra.mxu0 %v4208
    %6901 = vmatpush.bf16.msra.mxu0 %v4202
    %6902 = vmatpush.bf16.msra.mxu0 %v4196
    %6903 = vmatpush.bf16.msra.mxu0 %v4190
    %6904 = vmatpush.bf16.msra.mxu0 %v4184
    %6905 = vmatpush.bf16.msra.mxu0 %v4178
    %6906 = vmatmul.bf16.gmra.mxu0 %v1040
    %v6907 = vpop.f32.mrf.mxu0
    %v6908 = vadd.f32 %v6890, %v6907
    %v6909 = vpop.f32.mrf.mxu0
    %v6910 = vadd.f32 %v6892, %v6909
    %6911 = vmatmul.bf16.gmra.mxu0 %v1058
    %v6912 = vpop.f32.mrf.mxu0
    %v6913 = vadd.f32 %v6895, %v6912
    %v6914 = vpop.f32.mrf.mxu0
    %6915 = vdwg.mxu0
    %6916 = vmatpush.bf16.msra.mxu0 %v4268
    %6917 = vmatpush.bf16.msra.mxu0 %v4262
    %6918 = vmatpush.bf16.msra.mxu0 %v4256
    %6919 = vmatpush.bf16.msra.mxu0 %v4250
    %6920 = vmatpush.bf16.msra.mxu0 %v4244
    %6921 = vmatpush.bf16.msra.mxu0 %v4238
    %6922 = vmatpush.bf16.msra.mxu0 %v4232
    %6923 = vmatpush.bf16.msra.mxu0 %v4226
    %6924 = vmatmul.bf16.gmra.mxu0 %v1041
    %v6925 = vpop.f32.mrf.mxu0
    %v6926 = vadd.f32 %v6908, %v6925
    %v6927 = vpop.f32.mrf.mxu0
    %v6928 = vadd.f32 %v6910, %v6927
    %6929 = vmatmul.bf16.gmra.mxu0 %v1059
    %v6930 = vpop.f32.mrf.mxu0
    %v6931 = vadd.f32 %v6913, %v6930
    %v6932 = vpop.f32.mrf.mxu0
    %6933 = vdwg.mxu0
    %6934 = vmatpush.bf16.msra.mxu0 %v4316
    %6935 = vmatpush.bf16.msra.mxu0 %v4310
    %6936 = vmatpush.bf16.msra.mxu0 %v4304
    %6937 = vmatpush.bf16.msra.mxu0 %v4298
    %6938 = vmatpush.bf16.msra.mxu0 %v4292
    %6939 = vmatpush.bf16.msra.mxu0 %v4286
    %6940 = vmatpush.bf16.msra.mxu0 %v4280
    %6941 = vmatpush.bf16.msra.mxu0 %v4274
    %6942 = vmatmul.bf16.gmra.mxu0 %v1042
    %v6943 = vpop.f32.mrf.mxu0
    %v6944 = vadd.f32 %v6926, %v6943
    %v6945 = vpop.f32.mrf.mxu0
    %v6946 = vadd.f32 %v6928, %v6945
    %6947 = vmatmul.bf16.gmra.mxu0 %v1060
    %v6948 = vpop.f32.mrf.mxu0
    %v6949 = vadd.f32 %v6931, %v6948
    %v6950 = vpop.f32.mrf.mxu0
    %6951 = vdwg.mxu0
    %6952 = vmatpush.bf16.msra.mxu0 %v4364
    %6953 = vmatpush.bf16.msra.mxu0 %v4358
    %6954 = vmatpush.bf16.msra.mxu0 %v4352
    %6955 = vmatpush.bf16.msra.mxu0 %v4346
    %6956 = vmatpush.bf16.msra.mxu0 %v4340
    %6957 = vmatpush.bf16.msra.mxu0 %v4334
    %6958 = vmatpush.bf16.msra.mxu0 %v4328
    %6959 = vmatpush.bf16.msra.mxu0 %v4322
    %6960 = vmatmul.bf16.gmra.mxu0 %v1043
    %v6961 = vpop.f32.mrf.mxu0
    %v6962 = vadd.f32 %v6944, %v6961
    %v6963 = vpop.f32.mrf.mxu0
    %v6964 = vadd.f32 %v6946, %v6963
    %6965 = vmatmul.bf16.gmra.mxu0 %v1061
    %v6966 = vpop.f32.mrf.mxu0
    %v6967 = vadd.f32 %v6949, %v6966
    %v6968 = vpop.f32.mrf.mxu0
    %6969 = vdwg.mxu0
    %6970 = vmatpush.bf16.msra.mxu0 %v4412
    %6971 = vmatpush.bf16.msra.mxu0 %v4406
    %6972 = vmatpush.bf16.msra.mxu0 %v4400
    %6973 = vmatpush.bf16.msra.mxu0 %v4394
    %6974 = vmatpush.bf16.msra.mxu0 %v4388
    %6975 = vmatpush.bf16.msra.mxu0 %v4382
    %6976 = vmatpush.bf16.msra.mxu0 %v4376
    %6977 = vmatpush.bf16.msra.mxu0 %v4370
    %6978 = vmatmul.bf16.gmra.mxu0 %v1044
    %v6979 = vpop.f32.mrf.mxu0
    %v6980 = vadd.f32 %v6962, %v6979
    %v6981 = vpop.f32.mrf.mxu0
    %v6982 = vadd.f32 %v6964, %v6981
    %6983 = vmatmul.bf16.gmra.mxu0 %v1062
    %v6984 = vpop.f32.mrf.mxu0
    %v6985 = vadd.f32 %v6967, %v6984
    %v6986 = vpop.f32.mrf.mxu0
    %6987 = vdwg.mxu0
    %6988 = vmatpush.bf16.msra.mxu0 %v4460
    %6989 = vmatpush.bf16.msra.mxu0 %v4454
    %6990 = vmatpush.bf16.msra.mxu0 %v4448
    %6991 = vmatpush.bf16.msra.mxu0 %v4442
    %6992 = vmatpush.bf16.msra.mxu0 %v4436
    %6993 = vmatpush.bf16.msra.mxu0 %v4430
    %6994 = vmatpush.bf16.msra.mxu0 %v4424
    %6995 = vmatpush.bf16.msra.mxu0 %v4418
    %6996 = vmatmul.bf16.gmra.mxu0 %v1045
    %v6997 = vpop.f32.mrf.mxu0
    %v6998 = vadd.f32 %v6980, %v6997
    %v6999 = vpop.f32.mrf.mxu0
    %v7000 = vadd.f32 %v6982, %v6999
    %7001 = vmatmul.bf16.gmra.mxu0 %v1063
    %v7002 = vpop.f32.mrf.mxu0
    %v7003 = vadd.f32 %v6985, %v7002
    %v7004 = vpop.f32.mrf.mxu0
    %7005 = vdwg.mxu0
    %7006 = vmatpush.bf16.msra.mxu0 %v4508
    %7007 = vmatpush.bf16.msra.mxu0 %v4502
    %7008 = vmatpush.bf16.msra.mxu0 %v4496
    %7009 = vmatpush.bf16.msra.mxu0 %v4490
    %7010 = vmatpush.bf16.msra.mxu0 %v4484
    %7011 = vmatpush.bf16.msra.mxu0 %v4478
    %7012 = vmatpush.bf16.msra.mxu0 %v4472
    %7013 = vmatpush.bf16.msra.mxu0 %v4466
    %7014 = vmatmul.bf16.gmra.mxu0 %v1046
    %v7015 = vpop.f32.mrf.mxu0
    %v7016 = vadd.f32 %v6998, %v7015
    %v7017 = vpop.f32.mrf.mxu0
    %v7018 = vadd.f32 %v7000, %v7017
    %7019 = vmatmul.bf16.gmra.mxu0 %v1064
    %v7020 = vpop.f32.mrf.mxu0
    %v7021 = vadd.f32 %v7003, %v7020
    %v7022 = vpop.f32.mrf.mxu0
    %7023 = vdwg.mxu0
    %7024 = vmatpush.bf16.msra.mxu0 %v4556
    %7025 = vmatpush.bf16.msra.mxu0 %v4550
    %7026 = vmatpush.bf16.msra.mxu0 %v4544
    %7027 = vmatpush.bf16.msra.mxu0 %v4538
    %7028 = vmatpush.bf16.msra.mxu0 %v4532
    %7029 = vmatpush.bf16.msra.mxu0 %v4526
    %7030 = vmatpush.bf16.msra.mxu0 %v4520
    %7031 = vmatpush.bf16.msra.mxu0 %v4514
    %7032 = vmatmul.bf16.gmra.mxu0 %v1047
    %v7033 = vpop.f32.mrf.mxu0
    %v7034 = vadd.f32 %v7016, %v7033
    %v7035 = vpop.f32.mrf.mxu0
    %v7036 = vadd.f32 %v7018, %v7035
    %7037 = vmatmul.bf16.gmra.mxu0 %v1065
    %v7038 = vpop.f32.mrf.mxu0
    %v7039 = vadd.f32 %v7021, %v7038
    %v7040 = vpop.f32.mrf.mxu0
    %7041 = vdwg.mxu0
    %7042 = vmatpush.bf16.msra.mxu0 %v3741
    %7043 = vmatpush.bf16.msra.mxu0 %v3735
    %7044 = vmatpush.bf16.msra.mxu0 %v3729
    %7045 = vmatpush.bf16.msra.mxu0 %v3723
    %7046 = vmatpush.bf16.msra.mxu0 %v3717
    %7047 = vmatpush.bf16.msra.mxu0 %v3711
    %7048 = vmatpush.bf16.msra.mxu0 %v3705
    %7049 = vmatpush.bf16.msra.mxu0 %v3699
    %7050 = vmatmul.bf16.gmra.mxu0 %v1030
    %v7051 = vpop.f32.mrf.mxu0
    %v7052 = vadd.f32 %v942, %v7051
    %v7053 = vpop.f32.mrf.mxu0
    %v7054 = vadd.f32 %v942, %v7053
    %7055 = vmatmul.bf16.gmra.mxu0 %v1048
    %v7056 = vpop.f32.mrf.mxu0
    %v7057 = vadd.f32 %v942, %v7056
    %v7058 = vpop.f32.mrf.mxu0
    %7059 = vdwg.mxu0
    %7060 = vmatpush.bf16.msra.mxu0 %v3789
    %7061 = vmatpush.bf16.msra.mxu0 %v3783
    %7062 = vmatpush.bf16.msra.mxu0 %v3777
    %7063 = vmatpush.bf16.msra.mxu0 %v3771
    %7064 = vmatpush.bf16.msra.mxu0 %v3765
    %7065 = vmatpush.bf16.msra.mxu0 %v3759
    %7066 = vmatpush.bf16.msra.mxu0 %v3753
    %7067 = vmatpush.bf16.msra.mxu0 %v3747
    %7068 = vmatmul.bf16.gmra.mxu0 %v1031
    %v7069 = vpop.f32.mrf.mxu0
    %v7070 = vadd.f32 %v7052, %v7069
    %v7071 = vpop.f32.mrf.mxu0
    %v7072 = vadd.f32 %v7054, %v7071
    %7073 = vmatmul.bf16.gmra.mxu0 %v1049
    %v7074 = vpop.f32.mrf.mxu0
    %v7075 = vadd.f32 %v7057, %v7074
    %v7076 = vpop.f32.mrf.mxu0
    %7077 = vdwg.mxu0
    %7078 = vmatpush.bf16.msra.mxu0 %v3837
    %7079 = vmatpush.bf16.msra.mxu0 %v3831
    %7080 = vmatpush.bf16.msra.mxu0 %v3825
    %7081 = vmatpush.bf16.msra.mxu0 %v3819
    %7082 = vmatpush.bf16.msra.mxu0 %v3813
    %7083 = vmatpush.bf16.msra.mxu0 %v3807
    %7084 = vmatpush.bf16.msra.mxu0 %v3801
    %7085 = vmatpush.bf16.msra.mxu0 %v3795
    %7086 = vmatmul.bf16.gmra.mxu0 %v1032
    %v7087 = vpop.f32.mrf.mxu0
    %v7088 = vadd.f32 %v7070, %v7087
    %v7089 = vpop.f32.mrf.mxu0
    %v7090 = vadd.f32 %v7072, %v7089
    %7091 = vmatmul.bf16.gmra.mxu0 %v1050
    %v7092 = vpop.f32.mrf.mxu0
    %v7093 = vadd.f32 %v7075, %v7092
    %v7094 = vpop.f32.mrf.mxu0
    %7095 = vdwg.mxu0
    %7096 = vmatpush.bf16.msra.mxu0 %v3885
    %7097 = vmatpush.bf16.msra.mxu0 %v3879
    %7098 = vmatpush.bf16.msra.mxu0 %v3873
    %7099 = vmatpush.bf16.msra.mxu0 %v3867
    %7100 = vmatpush.bf16.msra.mxu0 %v3861
    %7101 = vmatpush.bf16.msra.mxu0 %v3855
    %7102 = vmatpush.bf16.msra.mxu0 %v3849
    %7103 = vmatpush.bf16.msra.mxu0 %v3843
    %7104 = vmatmul.bf16.gmra.mxu0 %v1033
    %v7105 = vpop.f32.mrf.mxu0
    %v7106 = vadd.f32 %v7088, %v7105
    %v7107 = vpop.f32.mrf.mxu0
    %v7108 = vadd.f32 %v7090, %v7107
    %7109 = vmatmul.bf16.gmra.mxu0 %v1051
    %v7110 = vpop.f32.mrf.mxu0
    %v7111 = vadd.f32 %v7093, %v7110
    %v7112 = vpop.f32.mrf.mxu0
    %7113 = vdwg.mxu0
    %7114 = vmatpush.bf16.msra.mxu0 %v3933
    %7115 = vmatpush.bf16.msra.mxu0 %v3927
    %7116 = vmatpush.bf16.msra.mxu0 %v3921
    %7117 = vmatpush.bf16.msra.mxu0 %v3915
    %7118 = vmatpush.bf16.msra.mxu0 %v3909
    %7119 = vmatpush.bf16.msra.mxu0 %v3903
    %7120 = vmatpush.bf16.msra.mxu0 %v3897
    %7121 = vmatpush.bf16.msra.mxu0 %v3891
    %7122 = vmatmul.bf16.gmra.mxu0 %v1034
    %v7123 = vpop.f32.mrf.mxu0
    %v7124 = vadd.f32 %v7106, %v7123
    %v7125 = vpop.f32.mrf.mxu0
    %v7126 = vadd.f32 %v7108, %v7125
    %7127 = vmatmul.bf16.gmra.mxu0 %v1052
    %v7128 = vpop.f32.mrf.mxu0
    %v7129 = vadd.f32 %v7111, %v7128
    %v7130 = vpop.f32.mrf.mxu0
    %7131 = vdwg.mxu0
    %7132 = vmatpush.bf16.msra.mxu0 %v3981
    %7133 = vmatpush.bf16.msra.mxu0 %v3975
    %7134 = vmatpush.bf16.msra.mxu0 %v3969
    %7135 = vmatpush.bf16.msra.mxu0 %v3963
    %7136 = vmatpush.bf16.msra.mxu0 %v3957
    %7137 = vmatpush.bf16.msra.mxu0 %v3951
    %7138 = vmatpush.bf16.msra.mxu0 %v3945
    %7139 = vmatpush.bf16.msra.mxu0 %v3939
    %7140 = vmatmul.bf16.gmra.mxu0 %v1035
    %v7141 = vpop.f32.mrf.mxu0
    %v7142 = vadd.f32 %v7124, %v7141
    %v7143 = vpop.f32.mrf.mxu0
    %v7144 = vadd.f32 %v7126, %v7143
    %7145 = vmatmul.bf16.gmra.mxu0 %v1053
    %v7146 = vpop.f32.mrf.mxu0
    %v7147 = vadd.f32 %v7129, %v7146
    %v7148 = vpop.f32.mrf.mxu0
    %7149 = vdwg.mxu0
    %7150 = vmatpush.bf16.msra.mxu0 %v4029
    %7151 = vmatpush.bf16.msra.mxu0 %v4023
    %7152 = vmatpush.bf16.msra.mxu0 %v4017
    %7153 = vmatpush.bf16.msra.mxu0 %v4011
    %7154 = vmatpush.bf16.msra.mxu0 %v4005
    %7155 = vmatpush.bf16.msra.mxu0 %v3999
    %7156 = vmatpush.bf16.msra.mxu0 %v3993
    %7157 = vmatpush.bf16.msra.mxu0 %v3987
    %7158 = vmatmul.bf16.gmra.mxu0 %v1036
    %v7159 = vpop.f32.mrf.mxu0
    %v7160 = vadd.f32 %v7142, %v7159
    %v7161 = vpop.f32.mrf.mxu0
    %v7162 = vadd.f32 %v7144, %v7161
    %7163 = vmatmul.bf16.gmra.mxu0 %v1054
    %v7164 = vpop.f32.mrf.mxu0
    %v7165 = vadd.f32 %v7147, %v7164
    %v7166 = vpop.f32.mrf.mxu0
    %7167 = vdwg.mxu0
    %7168 = vmatpush.bf16.msra.mxu0 %v4077
    %7169 = vmatpush.bf16.msra.mxu0 %v4071
    %7170 = vmatpush.bf16.msra.mxu0 %v4065
    %7171 = vmatpush.bf16.msra.mxu0 %v4059
    %7172 = vmatpush.bf16.msra.mxu0 %v4053
    %7173 = vmatpush.bf16.msra.mxu0 %v4047
    %7174 = vmatpush.bf16.msra.mxu0 %v4041
    %7175 = vmatpush.bf16.msra.mxu0 %v4035
    %7176 = vmatmul.bf16.gmra.mxu0 %v1037
    %v7177 = vpop.f32.mrf.mxu0
    %v7178 = vadd.f32 %v7160, %v7177
    %v7179 = vpop.f32.mrf.mxu0
    %v7180 = vadd.f32 %v7162, %v7179
    %7181 = vmatmul.bf16.gmra.mxu0 %v1055
    %v7182 = vpop.f32.mrf.mxu0
    %v7183 = vadd.f32 %v7165, %v7182
    %v7184 = vpop.f32.mrf.mxu0
    %7185 = vdwg.mxu0
    %7186 = vmatpush.bf16.msra.mxu0 %v4125
    %7187 = vmatpush.bf16.msra.mxu0 %v4119
    %7188 = vmatpush.bf16.msra.mxu0 %v4113
    %7189 = vmatpush.bf16.msra.mxu0 %v4107
    %7190 = vmatpush.bf16.msra.mxu0 %v4101
    %7191 = vmatpush.bf16.msra.mxu0 %v4095
    %7192 = vmatpush.bf16.msra.mxu0 %v4089
    %7193 = vmatpush.bf16.msra.mxu0 %v4083
    %7194 = vmatmul.bf16.gmra.mxu0 %v1038
    %v7195 = vpop.f32.mrf.mxu0
    %v7196 = vadd.f32 %v7178, %v7195
    %v7197 = vpop.f32.mrf.mxu0
    %v7198 = vadd.f32 %v7180, %v7197
    %7199 = vmatmul.bf16.gmra.mxu0 %v1056
    %v7200 = vpop.f32.mrf.mxu0
    %v7201 = vadd.f32 %v7183, %v7200
    %v7202 = vpop.f32.mrf.mxu0
    %7203 = vdwg.mxu0
    %7204 = vmatpush.bf16.msra.mxu0 %v4173
    %7205 = vmatpush.bf16.msra.mxu0 %v4167
    %7206 = vmatpush.bf16.msra.mxu0 %v4161
    %7207 = vmatpush.bf16.msra.mxu0 %v4155
    %7208 = vmatpush.bf16.msra.mxu0 %v4149
    %7209 = vmatpush.bf16.msra.mxu0 %v4143
    %7210 = vmatpush.bf16.msra.mxu0 %v4137
    %7211 = vmatpush.bf16.msra.mxu0 %v4131
    %7212 = vmatmul.bf16.gmra.mxu0 %v1039
    %v7213 = vpop.f32.mrf.mxu0
    %v7214 = vadd.f32 %v7196, %v7213
    %v7215 = vpop.f32.mrf.mxu0
    %v7216 = vadd.f32 %v7198, %v7215
    %7217 = vmatmul.bf16.gmra.mxu0 %v1057
    %v7218 = vpop.f32.mrf.mxu0
    %v7219 = vadd.f32 %v7201, %v7218
    %v7220 = vpop.f32.mrf.mxu0
    %7221 = vdwg.mxu0
    %7222 = vmatpush.bf16.msra.mxu0 %v4221
    %7223 = vmatpush.bf16.msra.mxu0 %v4215
    %7224 = vmatpush.bf16.msra.mxu0 %v4209
    %7225 = vmatpush.bf16.msra.mxu0 %v4203
    %7226 = vmatpush.bf16.msra.mxu0 %v4197
    %7227 = vmatpush.bf16.msra.mxu0 %v4191
    %7228 = vmatpush.bf16.msra.mxu0 %v4185
    %7229 = vmatpush.bf16.msra.mxu0 %v4179
    %7230 = vmatmul.bf16.gmra.mxu0 %v1040
    %v7231 = vpop.f32.mrf.mxu0
    %v7232 = vadd.f32 %v7214, %v7231
    %v7233 = vpop.f32.mrf.mxu0
    %v7234 = vadd.f32 %v7216, %v7233
    %7235 = vmatmul.bf16.gmra.mxu0 %v1058
    %v7236 = vpop.f32.mrf.mxu0
    %v7237 = vadd.f32 %v7219, %v7236
    %v7238 = vpop.f32.mrf.mxu0
    %7239 = vdwg.mxu0
    %7240 = vmatpush.bf16.msra.mxu0 %v4269
    %7241 = vmatpush.bf16.msra.mxu0 %v4263
    %7242 = vmatpush.bf16.msra.mxu0 %v4257
    %7243 = vmatpush.bf16.msra.mxu0 %v4251
    %7244 = vmatpush.bf16.msra.mxu0 %v4245
    %7245 = vmatpush.bf16.msra.mxu0 %v4239
    %7246 = vmatpush.bf16.msra.mxu0 %v4233
    %7247 = vmatpush.bf16.msra.mxu0 %v4227
    %7248 = vmatmul.bf16.gmra.mxu0 %v1041
    %v7249 = vpop.f32.mrf.mxu0
    %v7250 = vadd.f32 %v7232, %v7249
    %v7251 = vpop.f32.mrf.mxu0
    %v7252 = vadd.f32 %v7234, %v7251
    %7253 = vmatmul.bf16.gmra.mxu0 %v1059
    %v7254 = vpop.f32.mrf.mxu0
    %v7255 = vadd.f32 %v7237, %v7254
    %v7256 = vpop.f32.mrf.mxu0
    %7257 = vdwg.mxu0
    %7258 = vmatpush.bf16.msra.mxu0 %v4317
    %7259 = vmatpush.bf16.msra.mxu0 %v4311
    %7260 = vmatpush.bf16.msra.mxu0 %v4305
    %7261 = vmatpush.bf16.msra.mxu0 %v4299
    %7262 = vmatpush.bf16.msra.mxu0 %v4293
    %7263 = vmatpush.bf16.msra.mxu0 %v4287
    %7264 = vmatpush.bf16.msra.mxu0 %v4281
    %7265 = vmatpush.bf16.msra.mxu0 %v4275
    %7266 = vmatmul.bf16.gmra.mxu0 %v1042
    %v7267 = vpop.f32.mrf.mxu0
    %v7268 = vadd.f32 %v7250, %v7267
    %v7269 = vpop.f32.mrf.mxu0
    %v7270 = vadd.f32 %v7252, %v7269
    %7271 = vmatmul.bf16.gmra.mxu0 %v1060
    %v7272 = vpop.f32.mrf.mxu0
    %v7273 = vadd.f32 %v7255, %v7272
    %v7274 = vpop.f32.mrf.mxu0
    %7275 = vdwg.mxu0
    %7276 = vmatpush.bf16.msra.mxu0 %v4365
    %7277 = vmatpush.bf16.msra.mxu0 %v4359
    %7278 = vmatpush.bf16.msra.mxu0 %v4353
    %7279 = vmatpush.bf16.msra.mxu0 %v4347
    %7280 = vmatpush.bf16.msra.mxu0 %v4341
    %7281 = vmatpush.bf16.msra.mxu0 %v4335
    %7282 = vmatpush.bf16.msra.mxu0 %v4329
    %7283 = vmatpush.bf16.msra.mxu0 %v4323
    %7284 = vmatmul.bf16.gmra.mxu0 %v1043
    %v7285 = vpop.f32.mrf.mxu0
    %v7286 = vadd.f32 %v7268, %v7285
    %v7287 = vpop.f32.mrf.mxu0
    %v7288 = vadd.f32 %v7270, %v7287
    %7289 = vmatmul.bf16.gmra.mxu0 %v1061
    %v7290 = vpop.f32.mrf.mxu0
    %v7291 = vadd.f32 %v7273, %v7290
    %v7292 = vpop.f32.mrf.mxu0
    %7293 = vdwg.mxu0
    %7294 = vmatpush.bf16.msra.mxu0 %v4413
    %7295 = vmatpush.bf16.msra.mxu0 %v4407
    %7296 = vmatpush.bf16.msra.mxu0 %v4401
    %7297 = vmatpush.bf16.msra.mxu0 %v4395
    %7298 = vmatpush.bf16.msra.mxu0 %v4389
    %7299 = vmatpush.bf16.msra.mxu0 %v4383
    %7300 = vmatpush.bf16.msra.mxu0 %v4377
    %7301 = vmatpush.bf16.msra.mxu0 %v4371
    %7302 = vmatmul.bf16.gmra.mxu0 %v1044
    %v7303 = vpop.f32.mrf.mxu0
    %v7304 = vadd.f32 %v7286, %v7303
    %v7305 = vpop.f32.mrf.mxu0
    %v7306 = vadd.f32 %v7288, %v7305
    %7307 = vmatmul.bf16.gmra.mxu0 %v1062
    %v7308 = vpop.f32.mrf.mxu0
    %v7309 = vadd.f32 %v7291, %v7308
    %v7310 = vpop.f32.mrf.mxu0
    %7311 = vdwg.mxu0
    %7312 = vmatpush.bf16.msra.mxu0 %v4461
    %7313 = vmatpush.bf16.msra.mxu0 %v4455
    %7314 = vmatpush.bf16.msra.mxu0 %v4449
    %7315 = vmatpush.bf16.msra.mxu0 %v4443
    %7316 = vmatpush.bf16.msra.mxu0 %v4437
    %7317 = vmatpush.bf16.msra.mxu0 %v4431
    %7318 = vmatpush.bf16.msra.mxu0 %v4425
    %7319 = vmatpush.bf16.msra.mxu0 %v4419
    %7320 = vmatmul.bf16.gmra.mxu0 %v1045
    %v7321 = vpop.f32.mrf.mxu0
    %v7322 = vadd.f32 %v7304, %v7321
    %v7323 = vpop.f32.mrf.mxu0
    %v7324 = vadd.f32 %v7306, %v7323
    %7325 = vmatmul.bf16.gmra.mxu0 %v1063
    %v7326 = vpop.f32.mrf.mxu0
    %v7327 = vadd.f32 %v7309, %v7326
    %v7328 = vpop.f32.mrf.mxu0
    %7329 = vdwg.mxu0
    %7330 = vmatpush.bf16.msra.mxu0 %v4509
    %7331 = vmatpush.bf16.msra.mxu0 %v4503
    %7332 = vmatpush.bf16.msra.mxu0 %v4497
    %7333 = vmatpush.bf16.msra.mxu0 %v4491
    %7334 = vmatpush.bf16.msra.mxu0 %v4485
    %7335 = vmatpush.bf16.msra.mxu0 %v4479
    %7336 = vmatpush.bf16.msra.mxu0 %v4473
    %7337 = vmatpush.bf16.msra.mxu0 %v4467
    %7338 = vmatmul.bf16.gmra.mxu0 %v1046
    %v7339 = vpop.f32.mrf.mxu0
    %v7340 = vadd.f32 %v7322, %v7339
    %v7341 = vpop.f32.mrf.mxu0
    %v7342 = vadd.f32 %v7324, %v7341
    %7343 = vmatmul.bf16.gmra.mxu0 %v1064
    %v7344 = vpop.f32.mrf.mxu0
    %v7345 = vadd.f32 %v7327, %v7344
    %v7346 = vpop.f32.mrf.mxu0
    %7347 = vdwg.mxu0
    %7348 = vmatpush.bf16.msra.mxu0 %v4557
    %7349 = vmatpush.bf16.msra.mxu0 %v4551
    %7350 = vmatpush.bf16.msra.mxu0 %v4545
    %7351 = vmatpush.bf16.msra.mxu0 %v4539
    %7352 = vmatpush.bf16.msra.mxu0 %v4533
    %7353 = vmatpush.bf16.msra.mxu0 %v4527
    %7354 = vmatpush.bf16.msra.mxu0 %v4521
    %7355 = vmatpush.bf16.msra.mxu0 %v4515
    %7356 = vmatmul.bf16.gmra.mxu0 %v1047
    %v7357 = vpop.f32.mrf.mxu0
    %v7358 = vadd.f32 %v7340, %v7357
    %v7359 = vpop.f32.mrf.mxu0
    %v7360 = vadd.f32 %v7342, %v7359
    %7361 = vmatmul.bf16.gmra.mxu0 %v1065
    %v7362 = vpop.f32.mrf.mxu0
    %v7363 = vadd.f32 %v7345, %v7362
    %v7364 = vpop.f32.mrf.mxu0
    %7365 = vdwg.mxu0
    %7366 = vst [vmem:[%s3] sm:$0xff] %v5738
    %7367 = vst [vmem:[%s3 + $0x8] sm:$0xff] %v6062
    %7368 = vst [vmem:[%s3 + $0x10] sm:$0xff] %v6386
    %7369 = vst [vmem:[%s3 + $0x18] sm:$0xff] %v6710
    %7370 = vst [vmem:[%s3 + $0x20] sm:$0xff] %v7034
    %7371 = vst [vmem:[%s3 + $0x28] sm:$0xff] %v7358
    %7372 = vst [vmem:[%s3 + $0x30] sm:$0xff] %v5740
    %7373 = vst [vmem:[%s3 + $0x38] sm:$0xff] %v6064
    %7374 = vst [vmem:[%s3 + $0x40] sm:$0xff] %v6388
    %7375 = vst [vmem:[%s3 + $0x48] sm:$0xff] %v6712
    %7376 = vst [vmem:[%s3 + $0x50] sm:$0xff] %v7036
    %7377 = vst [vmem:[%s3 + $0x58] sm:$0xff] %v7360
    %7378 = vst [vmem:[%s3 + $0x60] sm:$0xff] %v5743
    %7379 = vst [vmem:[%s3 + $0x68] sm:$0xff] %v6067
    %7380 = vst [vmem:[%s3 + $0x70] sm:$0xff] %v6391
    %7381 = vst [vmem:[%s3 + $0x78] sm:$0xff] %v6715
    %7382 = vst [vmem:[%s3 + $0x80] sm:$0xff] %v7039
    %7383 = vst [vmem:[%s3 + $0x88] sm:$0xff] %v7363
    // Predicated region
    $region22: #{_encode.1} parent=1 // pred_check
      _
    $region23: #{_encode.1} parent=1 // pred_check_branch
      %7385 = sbr.rel (0) target = $region25
    $region24: #{_encode.1} parent=1 // pred_region
      _
    $region25: #{_encode.1} parent=1 // pred_fallthru
      _
    // Predicated region
    $region26: #{_encode.1} parent=1 // pred_check
      _
    $region27: #{_encode.1} parent=1 // pred_check_branch
      %7387 = sbr.rel (0) target = $region29
    $region28: #{_encode.1} parent=1 // pred_region
      _
    $region29: #{_encode.1} parent=1 // pred_fallthru
      _
    %7388 = vsyncpa [#allocation3], 1
    %7389 = vsyncpa [#allocation5], 1

</llo_original>
